<compile_context>
chip_gen: v7x
topology: tpu7x:2x2x1
jax: 0.10.0
libtpu: 0.0.40
codegen_flags: <defaults>
</compile_context>

<pallas_src>
import jax
import jax.numpy as jnp
from jax.experimental import pallas as pl
from jax.experimental.pallas import tpu as pltpu

EPS = 1e-5

# ---- packed-slab row offsets (shared by prepare_params and the kernel) ------
# conv1 slab, 84 lanes = (14 pooled-W) x (6 ch)
C1_CAB = 192          # rows 0..191: 6 band matrices M1h[i] of 32 rows each
C1_P = 280            # rows 280..282: tiled b1, gamma1, beta1
# conv2 slab, 80 lanes = (5 pooled-W) x (16 ch)
C2_BLOCK = 88         # each M2h[i] (84 rows) padded to 88 for 8-row alignment
C2_CAB = 528
C2_P = 608            # rows 608..610: tiled b2, gamma2, beta2
# fc slab, 128 lanes
FC_W1 = 0             # (400, 128)
FC_W2 = 400           # (128, 128)
FC_W3 = 528           # (128, 128)
FC_P = 656            # rows: fb1, g3, be3, fb2, g4, be4, fb3


# -----------------------------------------------------------------------------
# Kernel: whole LeNetBN forward in one body (single grid step)
# -----------------------------------------------------------------------------

def make_lenet_kernel(B):
    inv_b = 1.0 / float(B)

    def kernel(x_ref, c1_ref, c2_ref, fc_ref, o_ref):
        f32 = jnp.float32

        def sigmoid(y):                       # exact sigmoid
            return 1.0 / (1.0 + jnp.exp(-y))

        # ---- stage 1: conv(1->6, 5x5, pad 2) + avgpool2x2 ------------------
        # x_ref: (B, 4, 8, 32) H-phase split of the padded input:
        #   x_ref[b, r, m, :] = x_padded[b, 4*m + r, :]
        # 2x2 pool is folded into the 6 band matrices M1h[i] (32 -> 84), so the
        # even/odd pooled-H rows are 6 small MXU dots each per batch.
        b1t = c1_ref[C1_P + 0:C1_P + 1, :]                         # (1, 84)
        pre1 = []                          # per-batch (even, odd) pooled halves
        rs1 = jnp.zeros((1, 84), f32)      # sum over (batch, pooled-H) rows
        qs1 = jnp.zeros((1, 84), f32)      # sum of squares
        for b in range(B):
            acc_e = jnp.zeros((7, 84), f32)
            acc_o = jnp.zeros((7, 84), f32)
            for i in range(6):                                     # eff. H tap
                m1 = c1_ref[32 * i:32 * i + 32, :]                 # (32, 84)
                acc_e = acc_e + jnp.dot(
                    x_ref[b, i % 4, i // 4:i // 4 + 7, :], m1,
                    preferred_element_type=f32)
                acc_o = acc_o + jnp.dot(
                    x_ref[b, (i + 2) % 4, (i + 2) // 4:(i + 2) // 4 + 7, :], m1,
                    preferred_element_type=f32)
            acc_e = acc_e + b1t
            acc_o = acc_o + b1t
            rs1 = rs1 + jnp.sum(acc_e, axis=0, keepdims=True) \
                      + jnp.sum(acc_o, axis=0, keepdims=True)
            qs1 = qs1 + jnp.sum(acc_e * acc_e, axis=0, keepdims=True) \
                      + jnp.sum(acc_o * acc_o, axis=0, keepdims=True)
            pre1.append((acc_e, acc_o))

        # BatchNorm2D(6), training-mode batch stats over (B, 14, 14):
        # per-channel mean / E[x^2] broadcast back across the 84-lane (w, c)
        # layout via one tiny matmul each (CAB1 already divides by 14*14).
        cab1 = c1_ref[C1_CAB:C1_CAB + 84, :]
        mu1 = inv_b * jnp.dot(rs1, cab1, preferred_element_type=f32)
        ex1 = inv_b * jnp.dot(qs1, cab1, preferred_element_type=f32)
        inv1 = jax.lax.rsqrt(ex1 - mu1 * mu1 + EPS)
        g1t = c1_ref[C1_P + 1:C1_P + 2, :]
        be1t = c1_ref[C1_P + 2:C1_P + 3, :]

        # ---- stage 2: conv(6->16, 5x5) + avgpool2x2 -------------------------
        # Pool folded into M2h[i] (84 -> 80); the s1 even/odd pooled-H halves
        # from stage 1 are exactly the rows stage 2 needs.
        b2t = c2_ref[C2_P + 0:C2_P + 1, :]                         # (1, 80)
        pre2 = []
        rs2 = jnp.zeros((1, 80), f32)
        qs2 = jnp.zeros((1, 80), f32)
        for b in range(B):
            acc_e, acc_o = pre1[b]
            s1e = sigmoid(g1t * (acc_e - mu1) * inv1 + be1t)       # (7, 84)
            s1o = sigmoid(g1t * (acc_o - mu1) * inv1 + be1t)
            halves = (s1e, s1o)
            acc = jnp.zeros((5, 80), f32)
            for i in range(6):                                     # eff. H tap
                m2 = c2_ref[C2_BLOCK * i:C2_BLOCK * i + 84, :]     # (84, 80)
                acc = acc + jnp.dot(halves[i % 2][i // 2:i // 2 + 5, :], m2,
                                    preferred_element_type=f32)
            acc = acc + b2t
            rs2 = rs2 + jnp.sum(acc, axis=0, keepdims=True)
            qs2 = qs2 + jnp.sum(acc * acc, axis=0, keepdims=True)
            pre2.append(acc)

        cab2 = c2_ref[C2_CAB:C2_CAB + 80, :]
        mu2 = inv_b * jnp.dot(rs2, cab2, preferred_element_type=f32)
        ex2 = inv_b * jnp.dot(qs2, cab2, preferred_element_type=f32)
        inv2 = jax.lax.rsqrt(ex2 - mu2 * mu2 + EPS)
        g2t = c2_ref[C2_P + 1:C2_P + 2, :]
        be2t = c2_ref[C2_P + 2:C2_P + 3, :]

        # ---- FC tail: fc1 + BN1D + sig, fc2 + BN1D + sig, fc3 + softmax -----
        # The flatten permutation is folded into fw1's rows, so fc1 is 5 row
        # dots per batch directly off the (5, 80) stage-2 activation.
        fb1 = fc_ref[FC_P + 0:FC_P + 1, :]
        rows = []
        for b in range(B):
            s2 = sigmoid(g2t * (pre2[b] - mu2) * inv2 + be2t)      # (5, 80)
            h = fb1
            for r in range(5):
                h = h + jnp.dot(
                    s2[r:r + 1, :],
                    fc_ref[FC_W1 + 80 * r:FC_W1 + 80 * r + 80, :],
                    preferred_element_type=f32)
            rows.append(h)                                         # (1, 128)
        h1 = jnp.concatenate(rows, axis=0)                         # (B, 128)

        def bn_rows(v, g, be):             # BatchNorm1D, training-mode stats
            mu = jnp.mean(v, axis=0, keepdims=True)
            var = jnp.mean((v - mu) * (v - mu), axis=0, keepdims=True)
            return g * (v - mu) * jax.lax.rsqrt(var + EPS) + be

        h1 = sigmoid(bn_rows(h1, fc_ref[FC_P + 1:FC_P + 2, :],
                             fc_ref[FC_P + 2:FC_P + 3, :]))
        h2 = jnp.dot(h1, fc_ref[FC_W2:FC_W2 + 128, :],
                     preferred_element_type=f32) + fc_ref[FC_P + 3:FC_P + 4, :]
        h2 = sigmoid(bn_rows(h2, fc_ref[FC_P + 4:FC_P + 5, :],
                             fc_ref[FC_P + 5:FC_P + 6, :]))
        logits = jnp.dot(h2, fc_ref[FC_W3:FC_W3 + 128, :],
                         preferred_element_type=f32) + fc_ref[FC_P + 6:FC_P + 7, :]
        logits = logits[:, 0:10]
        m = jnp.max(logits, axis=-1, keepdims=True)
        ez = jnp.exp(logits - m)
        o_ref[...] = ez / jnp.sum(ez, axis=-1, keepdims=True)     # rows sum to 1

    return kernel


# -----------------------------------------------------------------------------
# Forward pass wrapper (single pallas_call, 4 input DMAs)
# -----------------------------------------------------------------------------

def lenet_bn_forward(x, q):
    """x: (B, 1, 28, 28) NCHW; q: prepared/packed params (prepare_params)."""
    B = x.shape[0]
    # zero-pad by 2, then split the padded H axis into its 4 phases
    # (tiny XLA op on an ~8 KB tensor): x4[b, r, m, :] = x_padded[b, 4*m + r, :]
    xp = jnp.pad(x.reshape(B, 28, 28), ((0, 0), (2, 2), (2, 2)))
    x4 = xp.reshape(B, 8, 4, 32).transpose(0, 2, 1, 3)            # (B, 4, 8, 32)

    return pl.pallas_call(
        make_lenet_kernel(B),
        out_shape=jax.ShapeDtypeStruct((B, 10), jnp.float32),
        grid=(1,),
        in_specs=[
            pl.BlockSpec(x4.shape, lambda i: (0, 0, 0, 0)),
            pl.BlockSpec(q['c1'].shape, lambda i: (0, 0)),
            pl.BlockSpec(q['c2'].shape, lambda i: (0, 0)),
            pl.BlockSpec(q['fc'].shape, lambda i: (0, 0)),
        ],
        out_specs=pl.BlockSpec((B, 10), lambda i: (0, 0)),
        compiler_params=pltpu.CompilerParams(
            dimension_semantics=("arbitrary",)),
    )(x4, q['c1'], q['c2'], q['fc'])


# -----------------------------------------------------------------------------
# One-time parameter preparation (layout / packing only; outside jit)
# -----------------------------------------------------------------------------

def prepare_params(p):
    f32 = jnp.float32

    def fold_pool(w):
        # torch conv weight (co, ci, 5, 5) -> effective (6, 6, ci, co) kernel
        # with the following 2x2 average pool folded into both directions.
        co, ci, kh, kw = w.shape
        wt = jnp.transpose(w, (2, 3, 1, 0)).astype(f32)           # (kh, kw, ci, co)
        ww = jnp.zeros((kh, kw + 1, ci, co), f32)
        ww = (ww.at[:, :kw].add(wt).at[:, 1:].add(wt)) * 0.5      # fold W pool
        wh = jnp.zeros((kh + 1, kw + 1, ci, co), f32)
        wh = (wh.at[:kh].add(ww).at[1:].add(ww)) * 0.5            # fold H pool
        return wh

    def band_matrices(weff, w_in, n_pw):
        # M[i][(w, ci), (pw, co)] = weff[i, w - 2*pw, ci, co] (0 out of band)
        kh, kw, ci, co = weff.shape
        u = jnp.arange(w_in)[:, None] - 2 * jnp.arange(n_pw)[None, :]
        valid = ((u >= 0) & (u < kw)).astype(f32)
        g = jnp.take(weff, jnp.clip(u, 0, kw - 1), axis=1)        # (kh, w_in, n_pw, ci, co)
        g = g * valid[None, :, :, None, None]
        return jnp.transpose(g, (0, 1, 3, 2, 4)).reshape(kh, w_in * ci, n_pw * co)

    def pad_rows(a, rows):
        return jnp.pad(a, ((0, rows - a.shape[0]), (0, 0)))

    m1 = band_matrices(fold_pool(p['w1']), 32, 14)                # (6, 32, 84)
    m2 = band_matrices(fold_pool(p['w2']), 14, 5)                 # (6, 84, 80)

    # channel-average-broadcast matrices (include the 1/(H*W) normalization)
    cab1 = jnp.tile(jnp.eye(6, dtype=f32), (14, 14)) / (14.0 * 14.0)   # (84, 84)
    cab2 = jnp.tile(jnp.eye(16, dtype=f32), (5, 5)) / (5.0 * 5.0)      # (80, 80)

    c1 = jnp.concatenate(
        [m1.reshape(6 * 32, 84),
         pad_rows(cab1, C1_P - C1_CAB),
         jnp.stack([jnp.tile(p['b1'], 14), jnp.tile(p['g1'], 14),
                    jnp.tile(p['be1'], 14)]).astype(f32)], axis=0)     # (283, 84)

    c2 = jnp.concatenate(
        [pad_rows(m2[i], C2_BLOCK) for i in range(6)]
        + [cab2,
           jnp.stack([jnp.tile(p['b2'], 5), jnp.tile(p['g2'], 5),
                      jnp.tile(p['be2'], 5)]).astype(f32)], axis=0)    # (611, 80)

    # fc1: fold the NCHW (c, h, w) flatten order into the weight rows so the
    # kernel consumes its native (h, w*16 + c) order; pad lane dims to 128.
    fw1 = p['fw1'].reshape(120, 16, 5, 5).transpose(0, 2, 3, 1).reshape(120, 400).T
    fw1 = jnp.pad(fw1, ((0, 0), (0, 8)))                          # (400, 128)
    fw2 = jnp.pad(p['fw2'].T, ((0, 8), (0, 44)))                  # (128, 128)
    fw3 = jnp.pad(p['fw3'].T, ((0, 44), (0, 118)))                # (128, 128)

    def lane128(v):
        return jnp.pad(v.astype(f32), (0, 128 - v.shape[0]))

    fcp = jnp.stack([lane128(p['fb1']), lane128(p['g3']), lane128(p['be3']),
                     lane128(p['fb2']), lane128(p['g4']), lane128(p['be4']),
                     lane128(p['fb3'])])                          # (7, 128)

    fc = jnp.concatenate([fw1, fw2, fw3, fcp], axis=0)            # (663, 128)
    return {'c1': c1, 'c2': c2, 'fc': fc}


# -----------------------------------------------------------------------------
# Deterministic parameter initialization (PyTorch-default-style uniform)
# -----------------------------------------------------------------------------

def init_params(key):
    ks = jax.random.split(key, 10)

    def u(k, shape, fan_in):
        bound = 1.0 / jnp.sqrt(jnp.float32(fan_in))
        return jax.random.uniform(k, shape, jnp.float32, -bound, bound)

    p = {}
    p['w1'] = u(ks[0], (6, 1, 5, 5), 1 * 25);   p['b1'] = u(ks[1], (6,), 1 * 25)
    p['w2'] = u(ks[2], (16, 6, 5, 5), 6 * 25);  p['b2'] = u(ks[3], (16,), 6 * 25)
    p['fw1'] = u(ks[4], (120, 400), 400);       p['fb1'] = u(ks[5], (120,), 400)
    p['fw2'] = u(ks[6], (84, 120), 120);        p['fb2'] = u(ks[7], (84,), 120)
    p['fw3'] = u(ks[8], (10, 84), 84);          p['fb3'] = u(ks[9], (10,), 84)
    # BatchNorm scale/shift (gamma=1, beta=0)
    p['g1'] = jnp.ones((6,), jnp.float32);   p['be1'] = jnp.zeros((6,), jnp.float32)
    p['g2'] = jnp.ones((16,), jnp.float32);  p['be2'] = jnp.zeros((16,), jnp.float32)
    p['g3'] = jnp.ones((120,), jnp.float32); p['be3'] = jnp.zeros((120,), jnp.float32)
    p['g4'] = jnp.ones((84,), jnp.float32);  p['be4'] = jnp.zeros((84,), jnp.float32)
    # TODO(synk): custom BatchNorm running statistics (eval-mode inference) are
    #             not modeled; training-mode batch statistics are used.
    return p


# -----------------------------------------------------------------------------
# Pure-JAX reference (same training-mode BN semantics) for a sanity check
# -----------------------------------------------------------------------------

def lenet_bn_reference(x, p):
    B = x.shape[0]

    def bn(v, g, be, axes):
        mu = jnp.mean(v, axis=axes, keepdims=True)
        var = jnp.mean((v - mu) ** 2, axis=axes, keepdims=True)
        return g * (v - mu) / jnp.sqrt(var + EPS) + be

    def sig(v):
        return 1.0 / (1.0 + jnp.exp(-v))

    def pool2(v):
        b, c, hh, ww = v.shape
        return v.reshape(b, c, hh // 2, 2, ww // 2, 2).mean(axis=(3, 5))

    dn = ('NCHW', 'OIHW', 'NCHW')
    h = jax.lax.conv_general_dilated(x, p['w1'], (1, 1), ((2, 2), (2, 2)),
                                     dimension_numbers=dn)
    h = pool2(h + p['b1'].reshape(1, 6, 1, 1))
    h = sig(bn(h, p['g1'].reshape(1, 6, 1, 1), p['be1'].reshape(1, 6, 1, 1), (0, 2, 3)))
    h = jax.lax.conv_general_dilated(h, p['w2'], (1, 1), ((0, 0), (0, 0)),
                                     dimension_numbers=dn)
    h = pool2(h + p['b2'].reshape(1, 16, 1, 1))
    h = sig(bn(h, p['g2'].reshape(1, 16, 1, 1), p['be2'].reshape(1, 16, 1, 1), (0, 2, 3)))
    h = h.reshape(B, 400)
    h = sig(bn(h @ p['fw1'].T + p['fb1'], p['g3'], p['be3'], (0,)))
    h = sig(bn(h @ p['fw2'].T + p['fb2'], p['g4'], p['be4'], (0,)))
    logits = h @ p['fw3'].T + p['fb3']
    return jax.nn.softmax(logits, axis=-1)


if __name__ == "__main__":
    key = jax.random.PRNGKey(0)
    pkey, xkey = jax.random.split(key)
    params = init_params(pkey)
    q = prepare_params(params)                       # one-time packing, outside jit

    # LeNet-5 geometry requires 28x28 inputs; keep batch small (B=2).
    x = jax.random.normal(xkey, (2, 1, 28, 28), jnp.float32)

    fwd = jax.jit(lenet_bn_forward)
    out = jax.block_until_ready(fwd(x, q))

    assert out.shape == (2, 10)
    assert bool(jnp.all(jnp.isfinite(out)))
    assert bool(jnp.allclose(jnp.sum(out, axis=-1), 1.0, atol=1e-5))

    # cross-check against a pure-JAX reference (loose tolerance: MXU f32
    # matmuls may use bf16 passes at default precision).
    ref = jax.block_until_ready(jax.jit(lenet_bn_reference)(x, params))
    diff = float(jnp.max(jnp.abs(out - ref)))
    assert diff < 2e-2, f"kernel vs reference mismatch: max abs diff {diff}"

    print("KERNEL_OK")
</pallas_src>

<mosaic_0001>
module attributes {stable_mosaic.version = 11 : i64} {
  func.func @kernel(%arg0: i32, %arg1: memref<2x4x8x32xf32, #tpu.memory_space<vmem>>, %arg2: memref<283x84xf32, #tpu.memory_space<vmem>>, %arg3: memref<611x80xf32, #tpu.memory_space<vmem>>, %arg4: memref<663x128xf32, #tpu.memory_space<vmem>>, %arg5: memref<2x10xf32, #tpu.memory_space<vmem>>) attributes {dimension_semantics = [#tpu.dimension_semantics<arbitrary>], iteration_bounds = array<i64: 1>, scalar_prefetch = 0 : i64, scratch_operands = 0 : i64, tpu.core_type = #tpu.core_type<tc>, window_params = [{pipeline_mode = #tpu.pipeline_mode<synchronous>, transform_indices = @transform_0, window_bounds = array<i64: 2, 4, 8, 32>}, {pipeline_mode = #tpu.pipeline_mode<synchronous>, transform_indices = @transform_1, window_bounds = array<i64: 283, 84>}, {pipeline_mode = #tpu.pipeline_mode<synchronous>, transform_indices = @transform_2, window_bounds = array<i64: 611, 80>}, {pipeline_mode = #tpu.pipeline_mode<synchronous>, transform_indices = @transform_3, window_bounds = array<i64: 663, 128>}, {pipeline_mode = #tpu.pipeline_mode<synchronous>, transform_indices = @transform_4, window_bounds = array<i64: 2, 10>}]} {
    %c280 = arith.constant 280 : index
    %c0 = arith.constant 0 : index
    %0 = vector.load %arg2[%c280, %c0] : memref<283x84xf32, #tpu.memory_space<vmem>>, vector<1x84xf32>
    %cst = arith.constant 0.000000e+00 : f32
    %1 = vector.broadcast %cst : f32 to vector<1x84xf32>
    %cst_0 = arith.constant 0.000000e+00 : f32
    %2 = vector.broadcast %cst_0 : f32 to vector<1x84xf32>
    %cst_1 = arith.constant 0.000000e+00 : f32
    %3 = vector.broadcast %cst_1 : f32 to vector<7x84xf32>
    %cst_2 = arith.constant 0.000000e+00 : f32
    %4 = vector.broadcast %cst_2 : f32 to vector<7x84xf32>
    %c0_3 = arith.constant 0 : index
    %c0_4 = arith.constant 0 : index
    %5 = vector.load %arg2[%c0_3, %c0_4] : memref<283x84xf32, #tpu.memory_space<vmem>>, vector<32x84xf32>
    %c0_5 = arith.constant 0 : index
    %c0_6 = arith.constant 0 : index
    %c0_7 = arith.constant 0 : index
    %c0_8 = arith.constant 0 : index
    %6 = vector.load %arg1[%c0_5, %c0_6, %c0_7, %c0_8] : memref<2x4x8x32xf32, #tpu.memory_space<vmem>>, vector<1x1x7x32xf32>
    %7 = vector.shape_cast %6 : vector<1x1x7x32xf32> to vector<7x32xf32>
    %cst_9 = arith.constant dense<0.000000e+00> : vector<7x84xf32>
    %8 = tpu.matmul %7, %5, %cst_9 {dimension_numbers = #tpu.dot_dimension_numbers<[1], [0], [0], [1], [0, 0, 1, 1], [], []>} : vector<7x32xf32>, vector<32x84xf32>, vector<7x84xf32> -> vector<7x84xf32>
    %9 = arith.addf %3, %8 : vector<7x84xf32>
    %c0_10 = arith.constant 0 : index
    %c2 = arith.constant 2 : index
    %c0_11 = arith.constant 0 : index
    %c0_12 = arith.constant 0 : index
    %10 = vector.load %arg1[%c0_10, %c2, %c0_11, %c0_12] : memref<2x4x8x32xf32, #tpu.memory_space<vmem>>, vector<1x1x7x32xf32>
    %11 = vector.shape_cast %10 : vector<1x1x7x32xf32> to vector<7x32xf32>
    %cst_13 = arith.constant dense<0.000000e+00> : vector<7x84xf32>
    %12 = tpu.matmul %11, %5, %cst_13 {dimension_numbers = #tpu.dot_dimension_numbers<[1], [0], [0], [1], [0, 0, 1, 1], [], []>} : vector<7x32xf32>, vector<32x84xf32>, vector<7x84xf32> -> vector<7x84xf32>
    %13 = arith.addf %4, %12 : vector<7x84xf32>
    %c32 = arith.constant 32 : index
    %c0_14 = arith.constant 0 : index
    %14 = vector.load %arg2[%c32, %c0_14] : memref<283x84xf32, #tpu.memory_space<vmem>>, vector<32x84xf32>
    %c0_15 = arith.constant 0 : index
    %c1 = arith.constant 1 : index
    %c0_16 = arith.constant 0 : index
    %c0_17 = arith.constant 0 : index
    %15 = vector.load %arg1[%c0_15, %c1, %c0_16, %c0_17] : memref<2x4x8x32xf32, #tpu.memory_space<vmem>>, vector<1x1x7x32xf32>
    %16 = vector.shape_cast %15 : vector<1x1x7x32xf32> to vector<7x32xf32>
    %cst_18 = arith.constant dense<0.000000e+00> : vector<7x84xf32>
    %17 = tpu.matmul %16, %14, %cst_18 {dimension_numbers = #tpu.dot_dimension_numbers<[1], [0], [0], [1], [0, 0, 1, 1], [], []>} : vector<7x32xf32>, vector<32x84xf32>, vector<7x84xf32> -> vector<7x84xf32>
    %18 = arith.addf %9, %17 : vector<7x84xf32>
    %c0_19 = arith.constant 0 : index
    %c3 = arith.constant 3 : index
    %c0_20 = arith.constant 0 : index
    %c0_21 = arith.constant 0 : index
    %19 = vector.load %arg1[%c0_19, %c3, %c0_20, %c0_21] : memref<2x4x8x32xf32, #tpu.memory_space<vmem>>, vector<1x1x7x32xf32>
    %20 = vector.shape_cast %19 : vector<1x1x7x32xf32> to vector<7x32xf32>
    %cst_22 = arith.constant dense<0.000000e+00> : vector<7x84xf32>
    %21 = tpu.matmul %20, %14, %cst_22 {dimension_numbers = #tpu.dot_dimension_numbers<[1], [0], [0], [1], [0, 0, 1, 1], [], []>} : vector<7x32xf32>, vector<32x84xf32>, vector<7x84xf32> -> vector<7x84xf32>
    %22 = arith.addf %13, %21 : vector<7x84xf32>
    %c64 = arith.constant 64 : index
    %c0_23 = arith.constant 0 : index
    %23 = vector.load %arg2[%c64, %c0_23] : memref<283x84xf32, #tpu.memory_space<vmem>>, vector<32x84xf32>
    %c0_24 = arith.constant 0 : index
    %c2_25 = arith.constant 2 : index
    %c0_26 = arith.constant 0 : index
    %c0_27 = arith.constant 0 : index
    %24 = vector.load %arg1[%c0_24, %c2_25, %c0_26, %c0_27] : memref<2x4x8x32xf32, #tpu.memory_space<vmem>>, vector<1x1x7x32xf32>
    %25 = vector.shape_cast %24 : vector<1x1x7x32xf32> to vector<7x32xf32>
    %cst_28 = arith.constant dense<0.000000e+00> : vector<7x84xf32>
    %26 = tpu.matmul %25, %23, %cst_28 {dimension_numbers = #tpu.dot_dimension_numbers<[1], [0], [0], [1], [0, 0, 1, 1], [], []>} : vector<7x32xf32>, vector<32x84xf32>, vector<7x84xf32> -> vector<7x84xf32>
    %27 = arith.addf %18, %26 : vector<7x84xf32>
    %c0_29 = arith.constant 0 : index
    %c0_30 = arith.constant 0 : index
    %c1_31 = arith.constant 1 : index
    %c0_32 = arith.constant 0 : index
    %28 = vector.load %arg1[%c0_29, %c0_30, %c1_31, %c0_32] : memref<2x4x8x32xf32, #tpu.memory_space<vmem>>, vector<1x1x7x32xf32>
    %29 = vector.shape_cast %28 : vector<1x1x7x32xf32> to vector<7x32xf32>
    %cst_33 = arith.constant dense<0.000000e+00> : vector<7x84xf32>
    %30 = tpu.matmul %29, %23, %cst_33 {dimension_numbers = #tpu.dot_dimension_numbers<[1], [0], [0], [1], [0, 0, 1, 1], [], []>} : vector<7x32xf32>, vector<32x84xf32>, vector<7x84xf32> -> vector<7x84xf32>
    %31 = arith.addf %22, %30 : vector<7x84xf32>
    %c96 = arith.constant 96 : index
    %c0_34 = arith.constant 0 : index
    %32 = vector.load %arg2[%c96, %c0_34] : memref<283x84xf32, #tpu.memory_space<vmem>>, vector<32x84xf32>
    %c0_35 = arith.constant 0 : index
    %c3_36 = arith.constant 3 : index
    %c0_37 = arith.constant 0 : index
    %c0_38 = arith.constant 0 : index
    %33 = vector.load %arg1[%c0_35, %c3_36, %c0_37, %c0_38] : memref<2x4x8x32xf32, #tpu.memory_space<vmem>>, vector<1x1x7x32xf32>
    %34 = vector.shape_cast %33 : vector<1x1x7x32xf32> to vector<7x32xf32>
    %cst_39 = arith.constant dense<0.000000e+00> : vector<7x84xf32>
    %35 = tpu.matmul %34, %32, %cst_39 {dimension_numbers = #tpu.dot_dimension_numbers<[1], [0], [0], [1], [0, 0, 1, 1], [], []>} : vector<7x32xf32>, vector<32x84xf32>, vector<7x84xf32> -> vector<7x84xf32>
    %36 = arith.addf %27, %35 : vector<7x84xf32>
    %c0_40 = arith.constant 0 : index
    %c1_41 = arith.constant 1 : index
    %c1_42 = arith.constant 1 : index
    %c0_43 = arith.constant 0 : index
    %37 = vector.load %arg1[%c0_40, %c1_41, %c1_42, %c0_43] : memref<2x4x8x32xf32, #tpu.memory_space<vmem>>, vector<1x1x7x32xf32>
    %38 = vector.shape_cast %37 : vector<1x1x7x32xf32> to vector<7x32xf32>
    %cst_44 = arith.constant dense<0.000000e+00> : vector<7x84xf32>
    %39 = tpu.matmul %38, %32, %cst_44 {dimension_numbers = #tpu.dot_dimension_numbers<[1], [0], [0], [1], [0, 0, 1, 1], [], []>} : vector<7x32xf32>, vector<32x84xf32>, vector<7x84xf32> -> vector<7x84xf32>
    %40 = arith.addf %31, %39 : vector<7x84xf32>
    %c128 = arith.constant 128 : index
    %c0_45 = arith.constant 0 : index
    %41 = vector.load %arg2[%c128, %c0_45] : memref<283x84xf32, #tpu.memory_space<vmem>>, vector<32x84xf32>
    %c0_46 = arith.constant 0 : index
    %c0_47 = arith.constant 0 : index
    %c1_48 = arith.constant 1 : index
    %c0_49 = arith.constant 0 : index
    %42 = vector.load %arg1[%c0_46, %c0_47, %c1_48, %c0_49] : memref<2x4x8x32xf32, #tpu.memory_space<vmem>>, vector<1x1x7x32xf32>
    %43 = vector.shape_cast %42 : vector<1x1x7x32xf32> to vector<7x32xf32>
    %cst_50 = arith.constant dense<0.000000e+00> : vector<7x84xf32>
    %44 = tpu.matmul %43, %41, %cst_50 {dimension_numbers = #tpu.dot_dimension_numbers<[1], [0], [0], [1], [0, 0, 1, 1], [], []>} : vector<7x32xf32>, vector<32x84xf32>, vector<7x84xf32> -> vector<7x84xf32>
    %45 = arith.addf %36, %44 : vector<7x84xf32>
    %c0_51 = arith.constant 0 : index
    %c2_52 = arith.constant 2 : index
    %c1_53 = arith.constant 1 : index
    %c0_54 = arith.constant 0 : index
    %46 = vector.load %arg1[%c0_51, %c2_52, %c1_53, %c0_54] : memref<2x4x8x32xf32, #tpu.memory_space<vmem>>, vector<1x1x7x32xf32>
    %47 = vector.shape_cast %46 : vector<1x1x7x32xf32> to vector<7x32xf32>
    %cst_55 = arith.constant dense<0.000000e+00> : vector<7x84xf32>
    %48 = tpu.matmul %47, %41, %cst_55 {dimension_numbers = #tpu.dot_dimension_numbers<[1], [0], [0], [1], [0, 0, 1, 1], [], []>} : vector<7x32xf32>, vector<32x84xf32>, vector<7x84xf32> -> vector<7x84xf32>
    %49 = arith.addf %40, %48 : vector<7x84xf32>
    %c160 = arith.constant 160 : index
    %c0_56 = arith.constant 0 : index
    %50 = vector.load %arg2[%c160, %c0_56] : memref<283x84xf32, #tpu.memory_space<vmem>>, vector<32x84xf32>
    %c0_57 = arith.constant 0 : index
    %c1_58 = arith.constant 1 : index
    %c1_59 = arith.constant 1 : index
    %c0_60 = arith.constant 0 : index
    %51 = vector.load %arg1[%c0_57, %c1_58, %c1_59, %c0_60] : memref<2x4x8x32xf32, #tpu.memory_space<vmem>>, vector<1x1x7x32xf32>
    %52 = vector.shape_cast %51 : vector<1x1x7x32xf32> to vector<7x32xf32>
    %cst_61 = arith.constant dense<0.000000e+00> : vector<7x84xf32>
    %53 = tpu.matmul %52, %50, %cst_61 {dimension_numbers = #tpu.dot_dimension_numbers<[1], [0], [0], [1], [0, 0, 1, 1], [], []>} : vector<7x32xf32>, vector<32x84xf32>, vector<7x84xf32> -> vector<7x84xf32>
    %54 = arith.addf %45, %53 : vector<7x84xf32>
    %c0_62 = arith.constant 0 : index
    %c3_63 = arith.constant 3 : index
    %c1_64 = arith.constant 1 : index
    %c0_65 = arith.constant 0 : index
    %55 = vector.load %arg1[%c0_62, %c3_63, %c1_64, %c0_65] : memref<2x4x8x32xf32, #tpu.memory_space<vmem>>, vector<1x1x7x32xf32>
    %56 = vector.shape_cast %55 : vector<1x1x7x32xf32> to vector<7x32xf32>
    %cst_66 = arith.constant dense<0.000000e+00> : vector<7x84xf32>
    %57 = tpu.matmul %56, %50, %cst_66 {dimension_numbers = #tpu.dot_dimension_numbers<[1], [0], [0], [1], [0, 0, 1, 1], [], []>} : vector<7x32xf32>, vector<32x84xf32>, vector<7x84xf32> -> vector<7x84xf32>
    %58 = arith.addf %49, %57 : vector<7x84xf32>
    %59 = vector.broadcast %0 : vector<1x84xf32> to vector<7x84xf32>
    %60 = arith.addf %54, %59 : vector<7x84xf32>
    %61 = vector.broadcast %0 : vector<1x84xf32> to vector<7x84xf32>
    %62 = arith.addf %58, %61 : vector<7x84xf32>
    %cst_67 = arith.constant dense<0.000000e+00> : vector<84xf32>
    %63 = vector.multi_reduction <add>, %60, %cst_67 [0] : vector<7x84xf32> to vector<84xf32>
    %64 = vector.shape_cast %63 : vector<84xf32> to vector<1x84xf32>
    %65 = arith.addf %1, %64 : vector<1x84xf32>
    %cst_68 = arith.constant dense<0.000000e+00> : vector<84xf32>
    %66 = vector.multi_reduction <add>, %62, %cst_68 [0] : vector<7x84xf32> to vector<84xf32>
    %67 = vector.shape_cast %66 : vector<84xf32> to vector<1x84xf32>
    %68 = arith.addf %65, %67 : vector<1x84xf32>
    %69 = arith.mulf %60, %60 : vector<7x84xf32>
    %cst_69 = arith.constant dense<0.000000e+00> : vector<84xf32>
    %70 = vector.multi_reduction <add>, %69, %cst_69 [0] : vector<7x84xf32> to vector<84xf32>
    %71 = vector.shape_cast %70 : vector<84xf32> to vector<1x84xf32>
    %72 = arith.addf %2, %71 : vector<1x84xf32>
    %73 = arith.mulf %62, %62 : vector<7x84xf32>
    %cst_70 = arith.constant dense<0.000000e+00> : vector<84xf32>
    %74 = vector.multi_reduction <add>, %73, %cst_70 [0] : vector<7x84xf32> to vector<84xf32>
    %75 = vector.shape_cast %74 : vector<84xf32> to vector<1x84xf32>
    %76 = arith.addf %72, %75 : vector<1x84xf32>
    %cst_71 = arith.constant 0.000000e+00 : f32
    %77 = vector.broadcast %cst_71 : f32 to vector<7x84xf32>
    %cst_72 = arith.constant 0.000000e+00 : f32
    %78 = vector.broadcast %cst_72 : f32 to vector<7x84xf32>
    %c0_73 = arith.constant 0 : index
    %c0_74 = arith.constant 0 : index
    %79 = vector.load %arg2[%c0_73, %c0_74] : memref<283x84xf32, #tpu.memory_space<vmem>>, vector<32x84xf32>
    %c1_75 = arith.constant 1 : index
    %c0_76 = arith.constant 0 : index
    %c0_77 = arith.constant 0 : index
    %c0_78 = arith.constant 0 : index
    %80 = vector.load %arg1[%c1_75, %c0_76, %c0_77, %c0_78] : memref<2x4x8x32xf32, #tpu.memory_space<vmem>>, vector<1x1x7x32xf32>
    %81 = vector.shape_cast %80 : vector<1x1x7x32xf32> to vector<7x32xf32>
    %cst_79 = arith.constant dense<0.000000e+00> : vector<7x84xf32>
    %82 = tpu.matmul %81, %79, %cst_79 {dimension_numbers = #tpu.dot_dimension_numbers<[1], [0], [0], [1], [0, 0, 1, 1], [], []>} : vector<7x32xf32>, vector<32x84xf32>, vector<7x84xf32> -> vector<7x84xf32>
    %83 = arith.addf %77, %82 : vector<7x84xf32>
    %c1_80 = arith.constant 1 : index
    %c2_81 = arith.constant 2 : index
    %c0_82 = arith.constant 0 : index
    %c0_83 = arith.constant 0 : index
    %84 = vector.load %arg1[%c1_80, %c2_81, %c0_82, %c0_83] : memref<2x4x8x32xf32, #tpu.memory_space<vmem>>, vector<1x1x7x32xf32>
    %85 = vector.shape_cast %84 : vector<1x1x7x32xf32> to vector<7x32xf32>
    %cst_84 = arith.constant dense<0.000000e+00> : vector<7x84xf32>
    %86 = tpu.matmul %85, %79, %cst_84 {dimension_numbers = #tpu.dot_dimension_numbers<[1], [0], [0], [1], [0, 0, 1, 1], [], []>} : vector<7x32xf32>, vector<32x84xf32>, vector<7x84xf32> -> vector<7x84xf32>
    %87 = arith.addf %78, %86 : vector<7x84xf32>
    %c32_85 = arith.constant 32 : index
    %c0_86 = arith.constant 0 : index
    %88 = vector.load %arg2[%c32_85, %c0_86] : memref<283x84xf32, #tpu.memory_space<vmem>>, vector<32x84xf32>
    %c1_87 = arith.constant 1 : index
    %c1_88 = arith.constant 1 : index
    %c0_89 = arith.constant 0 : index
    %c0_90 = arith.constant 0 : index
    %89 = vector.load %arg1[%c1_87, %c1_88, %c0_89, %c0_90] : memref<2x4x8x32xf32, #tpu.memory_space<vmem>>, vector<1x1x7x32xf32>
    %90 = vector.shape_cast %89 : vector<1x1x7x32xf32> to vector<7x32xf32>
    %cst_91 = arith.constant dense<0.000000e+00> : vector<7x84xf32>
    %91 = tpu.matmul %90, %88, %cst_91 {dimension_numbers = #tpu.dot_dimension_numbers<[1], [0], [0], [1], [0, 0, 1, 1], [], []>} : vector<7x32xf32>, vector<32x84xf32>, vector<7x84xf32> -> vector<7x84xf32>
    %92 = arith.addf %83, %91 : vector<7x84xf32>
    %c1_92 = arith.constant 1 : index
    %c3_93 = arith.constant 3 : index
    %c0_94 = arith.constant 0 : index
    %c0_95 = arith.constant 0 : index
    %93 = vector.load %arg1[%c1_92, %c3_93, %c0_94, %c0_95] : memref<2x4x8x32xf32, #tpu.memory_space<vmem>>, vector<1x1x7x32xf32>
    %94 = vector.shape_cast %93 : vector<1x1x7x32xf32> to vector<7x32xf32>
    %cst_96 = arith.constant dense<0.000000e+00> : vector<7x84xf32>
    %95 = tpu.matmul %94, %88, %cst_96 {dimension_numbers = #tpu.dot_dimension_numbers<[1], [0], [0], [1], [0, 0, 1, 1], [], []>} : vector<7x32xf32>, vector<32x84xf32>, vector<7x84xf32> -> vector<7x84xf32>
    %96 = arith.addf %87, %95 : vector<7x84xf32>
    %c64_97 = arith.constant 64 : index
    %c0_98 = arith.constant 0 : index
    %97 = vector.load %arg2[%c64_97, %c0_98] : memref<283x84xf32, #tpu.memory_space<vmem>>, vector<32x84xf32>
    %c1_99 = arith.constant 1 : index
    %c2_100 = arith.constant 2 : index
    %c0_101 = arith.constant 0 : index
    %c0_102 = arith.constant 0 : index
    %98 = vector.load %arg1[%c1_99, %c2_100, %c0_101, %c0_102] : memref<2x4x8x32xf32, #tpu.memory_space<vmem>>, vector<1x1x7x32xf32>
    %99 = vector.shape_cast %98 : vector<1x1x7x32xf32> to vector<7x32xf32>
    %cst_103 = arith.constant dense<0.000000e+00> : vector<7x84xf32>
    %100 = tpu.matmul %99, %97, %cst_103 {dimension_numbers = #tpu.dot_dimension_numbers<[1], [0], [0], [1], [0, 0, 1, 1], [], []>} : vector<7x32xf32>, vector<32x84xf32>, vector<7x84xf32> -> vector<7x84xf32>
    %101 = arith.addf %92, %100 : vector<7x84xf32>
    %c1_104 = arith.constant 1 : index
    %c0_105 = arith.constant 0 : index
    %c1_106 = arith.constant 1 : index
    %c0_107 = arith.constant 0 : index
    %102 = vector.load %arg1[%c1_104, %c0_105, %c1_106, %c0_107] : memref<2x4x8x32xf32, #tpu.memory_space<vmem>>, vector<1x1x7x32xf32>
    %103 = vector.shape_cast %102 : vector<1x1x7x32xf32> to vector<7x32xf32>
    %cst_108 = arith.constant dense<0.000000e+00> : vector<7x84xf32>
    %104 = tpu.matmul %103, %97, %cst_108 {dimension_numbers = #tpu.dot_dimension_numbers<[1], [0], [0], [1], [0, 0, 1, 1], [], []>} : vector<7x32xf32>, vector<32x84xf32>, vector<7x84xf32> -> vector<7x84xf32>
    %105 = arith.addf %96, %104 : vector<7x84xf32>
    %c96_109 = arith.constant 96 : index
    %c0_110 = arith.constant 0 : index
    %106 = vector.load %arg2[%c96_109, %c0_110] : memref<283x84xf32, #tpu.memory_space<vmem>>, vector<32x84xf32>
    %c1_111 = arith.constant 1 : index
    %c3_112 = arith.constant 3 : index
    %c0_113 = arith.constant 0 : index
    %c0_114 = arith.constant 0 : index
    %107 = vector.load %arg1[%c1_111, %c3_112, %c0_113, %c0_114] : memref<2x4x8x32xf32, #tpu.memory_space<vmem>>, vector<1x1x7x32xf32>
    %108 = vector.shape_cast %107 : vector<1x1x7x32xf32> to vector<7x32xf32>
    %cst_115 = arith.constant dense<0.000000e+00> : vector<7x84xf32>
    %109 = tpu.matmul %108, %106, %cst_115 {dimension_numbers = #tpu.dot_dimension_numbers<[1], [0], [0], [1], [0, 0, 1, 1], [], []>} : vector<7x32xf32>, vector<32x84xf32>, vector<7x84xf32> -> vector<7x84xf32>
    %110 = arith.addf %101, %109 : vector<7x84xf32>
    %c1_116 = arith.constant 1 : index
    %c1_117 = arith.constant 1 : index
    %c1_118 = arith.constant 1 : index
    %c0_119 = arith.constant 0 : index
    %111 = vector.load %arg1[%c1_116, %c1_117, %c1_118, %c0_119] : memref<2x4x8x32xf32, #tpu.memory_space<vmem>>, vector<1x1x7x32xf32>
    %112 = vector.shape_cast %111 : vector<1x1x7x32xf32> to vector<7x32xf32>
    %cst_120 = arith.constant dense<0.000000e+00> : vector<7x84xf32>
    %113 = tpu.matmul %112, %106, %cst_120 {dimension_numbers = #tpu.dot_dimension_numbers<[1], [0], [0], [1], [0, 0, 1, 1], [], []>} : vector<7x32xf32>, vector<32x84xf32>, vector<7x84xf32> -> vector<7x84xf32>
    %114 = arith.addf %105, %113 : vector<7x84xf32>
    %c128_121 = arith.constant 128 : index
    %c0_122 = arith.constant 0 : index
    %115 = vector.load %arg2[%c128_121, %c0_122] : memref<283x84xf32, #tpu.memory_space<vmem>>, vector<32x84xf32>
    %c1_123 = arith.constant 1 : index
    %c0_124 = arith.constant 0 : index
    %c1_125 = arith.constant 1 : index
    %c0_126 = arith.constant 0 : index
    %116 = vector.load %arg1[%c1_123, %c0_124, %c1_125, %c0_126] : memref<2x4x8x32xf32, #tpu.memory_space<vmem>>, vector<1x1x7x32xf32>
    %117 = vector.shape_cast %116 : vector<1x1x7x32xf32> to vector<7x32xf32>
    %cst_127 = arith.constant dense<0.000000e+00> : vector<7x84xf32>
    %118 = tpu.matmul %117, %115, %cst_127 {dimension_numbers = #tpu.dot_dimension_numbers<[1], [0], [0], [1], [0, 0, 1, 1], [], []>} : vector<7x32xf32>, vector<32x84xf32>, vector<7x84xf32> -> vector<7x84xf32>
    %119 = arith.addf %110, %118 : vector<7x84xf32>
    %c1_128 = arith.constant 1 : index
    %c2_129 = arith.constant 2 : index
    %c1_130 = arith.constant 1 : index
    %c0_131 = arith.constant 0 : index
    %120 = vector.load %arg1[%c1_128, %c2_129, %c1_130, %c0_131] : memref<2x4x8x32xf32, #tpu.memory_space<vmem>>, vector<1x1x7x32xf32>
    %121 = vector.shape_cast %120 : vector<1x1x7x32xf32> to vector<7x32xf32>
    %cst_132 = arith.constant dense<0.000000e+00> : vector<7x84xf32>
    %122 = tpu.matmul %121, %115, %cst_132 {dimension_numbers = #tpu.dot_dimension_numbers<[1], [0], [0], [1], [0, 0, 1, 1], [], []>} : vector<7x32xf32>, vector<32x84xf32>, vector<7x84xf32> -> vector<7x84xf32>
    %123 = arith.addf %114, %122 : vector<7x84xf32>
    %c160_133 = arith.constant 160 : index
    %c0_134 = arith.constant 0 : index
    %124 = vector.load %arg2[%c160_133, %c0_134] : memref<283x84xf32, #tpu.memory_space<vmem>>, vector<32x84xf32>
    %c1_135 = arith.constant 1 : index
    %c1_136 = arith.constant 1 : index
    %c1_137 = arith.constant 1 : index
    %c0_138 = arith.constant 0 : index
    %125 = vector.load %arg1[%c1_135, %c1_136, %c1_137, %c0_138] : memref<2x4x8x32xf32, #tpu.memory_space<vmem>>, vector<1x1x7x32xf32>
    %126 = vector.shape_cast %125 : vector<1x1x7x32xf32> to vector<7x32xf32>
    %cst_139 = arith.constant dense<0.000000e+00> : vector<7x84xf32>
    %127 = tpu.matmul %126, %124, %cst_139 {dimension_numbers = #tpu.dot_dimension_numbers<[1], [0], [0], [1], [0, 0, 1, 1], [], []>} : vector<7x32xf32>, vector<32x84xf32>, vector<7x84xf32> -> vector<7x84xf32>
    %128 = arith.addf %119, %127 : vector<7x84xf32>
    %c1_140 = arith.constant 1 : index
    %c3_141 = arith.constant 3 : index
    %c1_142 = arith.constant 1 : index
    %c0_143 = arith.constant 0 : index
    %129 = vector.load %arg1[%c1_140, %c3_141, %c1_142, %c0_143] : memref<2x4x8x32xf32, #tpu.memory_space<vmem>>, vector<1x1x7x32xf32>
    %130 = vector.shape_cast %129 : vector<1x1x7x32xf32> to vector<7x32xf32>
    %cst_144 = arith.constant dense<0.000000e+00> : vector<7x84xf32>
    %131 = tpu.matmul %130, %124, %cst_144 {dimension_numbers = #tpu.dot_dimension_numbers<[1], [0], [0], [1], [0, 0, 1, 1], [], []>} : vector<7x32xf32>, vector<32x84xf32>, vector<7x84xf32> -> vector<7x84xf32>
    %132 = arith.addf %123, %131 : vector<7x84xf32>
    %133 = vector.broadcast %0 : vector<1x84xf32> to vector<7x84xf32>
    %134 = arith.addf %128, %133 : vector<7x84xf32>
    %135 = vector.broadcast %0 : vector<1x84xf32> to vector<7x84xf32>
    %136 = arith.addf %132, %135 : vector<7x84xf32>
    %cst_145 = arith.constant dense<0.000000e+00> : vector<84xf32>
    %137 = vector.multi_reduction <add>, %134, %cst_145 [0] : vector<7x84xf32> to vector<84xf32>
    %138 = vector.shape_cast %137 : vector<84xf32> to vector<1x84xf32>
    %139 = arith.addf %68, %138 : vector<1x84xf32>
    %cst_146 = arith.constant dense<0.000000e+00> : vector<84xf32>
    %140 = vector.multi_reduction <add>, %136, %cst_146 [0] : vector<7x84xf32> to vector<84xf32>
    %141 = vector.shape_cast %140 : vector<84xf32> to vector<1x84xf32>
    %142 = arith.addf %139, %141 : vector<1x84xf32>
    %143 = arith.mulf %134, %134 : vector<7x84xf32>
    %cst_147 = arith.constant dense<0.000000e+00> : vector<84xf32>
    %144 = vector.multi_reduction <add>, %143, %cst_147 [0] : vector<7x84xf32> to vector<84xf32>
    %145 = vector.shape_cast %144 : vector<84xf32> to vector<1x84xf32>
    %146 = arith.addf %76, %145 : vector<1x84xf32>
    %147 = arith.mulf %136, %136 : vector<7x84xf32>
    %cst_148 = arith.constant dense<0.000000e+00> : vector<84xf32>
    %148 = vector.multi_reduction <add>, %147, %cst_148 [0] : vector<7x84xf32> to vector<84xf32>
    %149 = vector.shape_cast %148 : vector<84xf32> to vector<1x84xf32>
    %150 = arith.addf %146, %149 : vector<1x84xf32>
    %c192 = arith.constant 192 : index
    %c0_149 = arith.constant 0 : index
    %151 = vector.load %arg2[%c192, %c0_149] : memref<283x84xf32, #tpu.memory_space<vmem>>, vector<84x84xf32>
    %cst_150 = arith.constant dense<0.000000e+00> : vector<1x84xf32>
    %152 = tpu.matmul %142, %151, %cst_150 {dimension_numbers = #tpu.dot_dimension_numbers<[1], [0], [0], [1], [0, 0, 1, 1], [], []>} : vector<1x84xf32>, vector<84x84xf32>, vector<1x84xf32> -> vector<1x84xf32>
    %cst_151 = arith.constant 5.000000e-01 : f32
    %153 = vector.broadcast %cst_151 : f32 to vector<1x84xf32>
    %154 = arith.mulf %153, %152 : vector<1x84xf32>
    %cst_152 = arith.constant dense<0.000000e+00> : vector<1x84xf32>
    %155 = tpu.matmul %150, %151, %cst_152 {dimension_numbers = #tpu.dot_dimension_numbers<[1], [0], [0], [1], [0, 0, 1, 1], [], []>} : vector<1x84xf32>, vector<84x84xf32>, vector<1x84xf32> -> vector<1x84xf32>
    %cst_153 = arith.constant 5.000000e-01 : f32
    %156 = vector.broadcast %cst_153 : f32 to vector<1x84xf32>
    %157 = arith.mulf %156, %155 : vector<1x84xf32>
    %158 = arith.mulf %154, %154 : vector<1x84xf32>
    %159 = arith.subf %157, %158 : vector<1x84xf32>
    %cst_154 = arith.constant 9.99999974E-6 : f32
    %160 = vector.broadcast %cst_154 : f32 to vector<1x84xf32>
    %161 = arith.addf %159, %160 : vector<1x84xf32>
    %162 = math.rsqrt %161 : vector<1x84xf32>
    %c281 = arith.constant 281 : index
    %c0_155 = arith.constant 0 : index
    %163 = vector.load %arg2[%c281, %c0_155] : memref<283x84xf32, #tpu.memory_space<vmem>>, vector<1x84xf32>
    %c282 = arith.constant 282 : index
    %c0_156 = arith.constant 0 : index
    %164 = vector.load %arg2[%c282, %c0_156] : memref<283x84xf32, #tpu.memory_space<vmem>>, vector<1x84xf32>
    %c608 = arith.constant 608 : index
    %c0_157 = arith.constant 0 : index
    %165 = vector.load %arg3[%c608, %c0_157] : memref<611x80xf32, #tpu.memory_space<vmem>>, vector<1x80xf32>
    %cst_158 = arith.constant 0.000000e+00 : f32
    %166 = vector.broadcast %cst_158 : f32 to vector<1x80xf32>
    %cst_159 = arith.constant 0.000000e+00 : f32
    %167 = vector.broadcast %cst_159 : f32 to vector<1x80xf32>
    %168 = vector.broadcast %154 : vector<1x84xf32> to vector<7x84xf32>
    %169 = arith.subf %60, %168 : vector<7x84xf32>
    %170 = vector.broadcast %163 : vector<1x84xf32> to vector<7x84xf32>
    %171 = arith.mulf %170, %169 : vector<7x84xf32>
    %172 = vector.broadcast %162 : vector<1x84xf32> to vector<7x84xf32>
    %173 = arith.mulf %171, %172 : vector<7x84xf32>
    %174 = vector.broadcast %164 : vector<1x84xf32> to vector<7x84xf32>
    %175 = arith.addf %173, %174 : vector<7x84xf32>
    %cst_160 = arith.constant 0.000000e+00 : f32
    %176 = vector.broadcast %cst_160 : f32 to vector<7x84xf32>
    %177 = arith.subf %176, %175 : vector<7x84xf32>
    %178 = math.exp %177 : vector<7x84xf32>
    %cst_161 = arith.constant 1.000000e+00 : f32
    %179 = vector.broadcast %cst_161 : f32 to vector<7x84xf32>
    %180 = arith.addf %179, %178 : vector<7x84xf32>
    %cst_162 = arith.constant 1.000000e+00 : f32
    %181 = vector.broadcast %cst_162 : f32 to vector<7x84xf32>
    %182 = arith.divf %181, %180 : vector<7x84xf32>
    %183 = vector.broadcast %154 : vector<1x84xf32> to vector<7x84xf32>
    %184 = arith.subf %62, %183 : vector<7x84xf32>
    %185 = vector.broadcast %163 : vector<1x84xf32> to vector<7x84xf32>
    %186 = arith.mulf %185, %184 : vector<7x84xf32>
    %187 = vector.broadcast %162 : vector<1x84xf32> to vector<7x84xf32>
    %188 = arith.mulf %186, %187 : vector<7x84xf32>
    %189 = vector.broadcast %164 : vector<1x84xf32> to vector<7x84xf32>
    %190 = arith.addf %188, %189 : vector<7x84xf32>
    %cst_163 = arith.constant 0.000000e+00 : f32
    %191 = vector.broadcast %cst_163 : f32 to vector<7x84xf32>
    %192 = arith.subf %191, %190 : vector<7x84xf32>
    %193 = math.exp %192 : vector<7x84xf32>
    %cst_164 = arith.constant 1.000000e+00 : f32
    %194 = vector.broadcast %cst_164 : f32 to vector<7x84xf32>
    %195 = arith.addf %194, %193 : vector<7x84xf32>
    %cst_165 = arith.constant 1.000000e+00 : f32
    %196 = vector.broadcast %cst_165 : f32 to vector<7x84xf32>
    %197 = arith.divf %196, %195 : vector<7x84xf32>
    %cst_166 = arith.constant 0.000000e+00 : f32
    %198 = vector.broadcast %cst_166 : f32 to vector<5x80xf32>
    %c0_167 = arith.constant 0 : index
    %c0_168 = arith.constant 0 : index
    %199 = vector.load %arg3[%c0_167, %c0_168] : memref<611x80xf32, #tpu.memory_space<vmem>>, vector<84x80xf32>
    %200 = vector.extract_strided_slice %182 {offsets = [0, 0], sizes = [5, 84], strides = [1, 1]} : vector<7x84xf32> to vector<5x84xf32>
    %cst_169 = arith.constant dense<0.000000e+00> : vector<5x80xf32>
    %201 = tpu.matmul %200, %199, %cst_169 {dimension_numbers = #tpu.dot_dimension_numbers<[1], [0], [0], [1], [0, 0, 1, 1], [], []>} : vector<5x84xf32>, vector<84x80xf32>, vector<5x80xf32> -> vector<5x80xf32>
    %202 = arith.addf %198, %201 : vector<5x80xf32>
    %c88 = arith.constant 88 : index
    %c0_170 = arith.constant 0 : index
    %203 = vector.load %arg3[%c88, %c0_170] : memref<611x80xf32, #tpu.memory_space<vmem>>, vector<84x80xf32>
    %204 = vector.extract_strided_slice %197 {offsets = [0, 0], sizes = [5, 84], strides = [1, 1]} : vector<7x84xf32> to vector<5x84xf32>
    %cst_171 = arith.constant dense<0.000000e+00> : vector<5x80xf32>
    %205 = tpu.matmul %204, %203, %cst_171 {dimension_numbers = #tpu.dot_dimension_numbers<[1], [0], [0], [1], [0, 0, 1, 1], [], []>} : vector<5x84xf32>, vector<84x80xf32>, vector<5x80xf32> -> vector<5x80xf32>
    %206 = arith.addf %202, %205 : vector<5x80xf32>
    %c176 = arith.constant 176 : index
    %c0_172 = arith.constant 0 : index
    %207 = vector.load %arg3[%c176, %c0_172] : memref<611x80xf32, #tpu.memory_space<vmem>>, vector<84x80xf32>
    %208 = vector.extract_strided_slice %182 {offsets = [1, 0], sizes = [5, 84], strides = [1, 1]} : vector<7x84xf32> to vector<5x84xf32>
    %cst_173 = arith.constant dense<0.000000e+00> : vector<5x80xf32>
    %209 = tpu.matmul %208, %207, %cst_173 {dimension_numbers = #tpu.dot_dimension_numbers<[1], [0], [0], [1], [0, 0, 1, 1], [], []>} : vector<5x84xf32>, vector<84x80xf32>, vector<5x80xf32> -> vector<5x80xf32>
    %210 = arith.addf %206, %209 : vector<5x80xf32>
    %c264 = arith.constant 264 : index
    %c0_174 = arith.constant 0 : index
    %211 = vector.load %arg3[%c264, %c0_174] : memref<611x80xf32, #tpu.memory_space<vmem>>, vector<84x80xf32>
    %212 = vector.extract_strided_slice %197 {offsets = [1, 0], sizes = [5, 84], strides = [1, 1]} : vector<7x84xf32> to vector<5x84xf32>
    %cst_175 = arith.constant dense<0.000000e+00> : vector<5x80xf32>
    %213 = tpu.matmul %212, %211, %cst_175 {dimension_numbers = #tpu.dot_dimension_numbers<[1], [0], [0], [1], [0, 0, 1, 1], [], []>} : vector<5x84xf32>, vector<84x80xf32>, vector<5x80xf32> -> vector<5x80xf32>
    %214 = arith.addf %210, %213 : vector<5x80xf32>
    %c352 = arith.constant 352 : index
    %c0_176 = arith.constant 0 : index
    %215 = vector.load %arg3[%c352, %c0_176] : memref<611x80xf32, #tpu.memory_space<vmem>>, vector<84x80xf32>
    %216 = vector.extract_strided_slice %182 {offsets = [2, 0], sizes = [5, 84], strides = [1, 1]} : vector<7x84xf32> to vector<5x84xf32>
    %cst_177 = arith.constant dense<0.000000e+00> : vector<5x80xf32>
    %217 = tpu.matmul %216, %215, %cst_177 {dimension_numbers = #tpu.dot_dimension_numbers<[1], [0], [0], [1], [0, 0, 1, 1], [], []>} : vector<5x84xf32>, vector<84x80xf32>, vector<5x80xf32> -> vector<5x80xf32>
    %218 = arith.addf %214, %217 : vector<5x80xf32>
    %c440 = arith.constant 440 : index
    %c0_178 = arith.constant 0 : index
    %219 = vector.load %arg3[%c440, %c0_178] : memref<611x80xf32, #tpu.memory_space<vmem>>, vector<84x80xf32>
    %220 = vector.extract_strided_slice %197 {offsets = [2, 0], sizes = [5, 84], strides = [1, 1]} : vector<7x84xf32> to vector<5x84xf32>
    %cst_179 = arith.constant dense<0.000000e+00> : vector<5x80xf32>
    %221 = tpu.matmul %220, %219, %cst_179 {dimension_numbers = #tpu.dot_dimension_numbers<[1], [0], [0], [1], [0, 0, 1, 1], [], []>} : vector<5x84xf32>, vector<84x80xf32>, vector<5x80xf32> -> vector<5x80xf32>
    %222 = arith.addf %218, %221 : vector<5x80xf32>
    %223 = vector.broadcast %165 : vector<1x80xf32> to vector<5x80xf32>
    %224 = arith.addf %222, %223 : vector<5x80xf32>
    %cst_180 = arith.constant dense<0.000000e+00> : vector<80xf32>
    %225 = vector.multi_reduction <add>, %224, %cst_180 [0] : vector<5x80xf32> to vector<80xf32>
    %226 = vector.shape_cast %225 : vector<80xf32> to vector<1x80xf32>
    %227 = arith.addf %166, %226 : vector<1x80xf32>
    %228 = arith.mulf %224, %224 : vector<5x80xf32>
    %cst_181 = arith.constant dense<0.000000e+00> : vector<80xf32>
    %229 = vector.multi_reduction <add>, %228, %cst_181 [0] : vector<5x80xf32> to vector<80xf32>
    %230 = vector.shape_cast %229 : vector<80xf32> to vector<1x80xf32>
    %231 = arith.addf %167, %230 : vector<1x80xf32>
    %232 = vector.broadcast %154 : vector<1x84xf32> to vector<7x84xf32>
    %233 = arith.subf %134, %232 : vector<7x84xf32>
    %234 = vector.broadcast %163 : vector<1x84xf32> to vector<7x84xf32>
    %235 = arith.mulf %234, %233 : vector<7x84xf32>
    %236 = vector.broadcast %162 : vector<1x84xf32> to vector<7x84xf32>
    %237 = arith.mulf %235, %236 : vector<7x84xf32>
    %238 = vector.broadcast %164 : vector<1x84xf32> to vector<7x84xf32>
    %239 = arith.addf %237, %238 : vector<7x84xf32>
    %cst_182 = arith.constant 0.000000e+00 : f32
    %240 = vector.broadcast %cst_182 : f32 to vector<7x84xf32>
    %241 = arith.subf %240, %239 : vector<7x84xf32>
    %242 = math.exp %241 : vector<7x84xf32>
    %cst_183 = arith.constant 1.000000e+00 : f32
    %243 = vector.broadcast %cst_183 : f32 to vector<7x84xf32>
    %244 = arith.addf %243, %242 : vector<7x84xf32>
    %cst_184 = arith.constant 1.000000e+00 : f32
    %245 = vector.broadcast %cst_184 : f32 to vector<7x84xf32>
    %246 = arith.divf %245, %244 : vector<7x84xf32>
    %247 = vector.broadcast %154 : vector<1x84xf32> to vector<7x84xf32>
    %248 = arith.subf %136, %247 : vector<7x84xf32>
    %249 = vector.broadcast %163 : vector<1x84xf32> to vector<7x84xf32>
    %250 = arith.mulf %249, %248 : vector<7x84xf32>
    %251 = vector.broadcast %162 : vector<1x84xf32> to vector<7x84xf32>
    %252 = arith.mulf %250, %251 : vector<7x84xf32>
    %253 = vector.broadcast %164 : vector<1x84xf32> to vector<7x84xf32>
    %254 = arith.addf %252, %253 : vector<7x84xf32>
    %cst_185 = arith.constant 0.000000e+00 : f32
    %255 = vector.broadcast %cst_185 : f32 to vector<7x84xf32>
    %256 = arith.subf %255, %254 : vector<7x84xf32>
    %257 = math.exp %256 : vector<7x84xf32>
    %cst_186 = arith.constant 1.000000e+00 : f32
    %258 = vector.broadcast %cst_186 : f32 to vector<7x84xf32>
    %259 = arith.addf %258, %257 : vector<7x84xf32>
    %cst_187 = arith.constant 1.000000e+00 : f32
    %260 = vector.broadcast %cst_187 : f32 to vector<7x84xf32>
    %261 = arith.divf %260, %259 : vector<7x84xf32>
    %cst_188 = arith.constant 0.000000e+00 : f32
    %262 = vector.broadcast %cst_188 : f32 to vector<5x80xf32>
    %c0_189 = arith.constant 0 : index
    %c0_190 = arith.constant 0 : index
    %263 = vector.load %arg3[%c0_189, %c0_190] : memref<611x80xf32, #tpu.memory_space<vmem>>, vector<84x80xf32>
    %264 = vector.extract_strided_slice %246 {offsets = [0, 0], sizes = [5, 84], strides = [1, 1]} : vector<7x84xf32> to vector<5x84xf32>
    %cst_191 = arith.constant dense<0.000000e+00> : vector<5x80xf32>
    %265 = tpu.matmul %264, %263, %cst_191 {dimension_numbers = #tpu.dot_dimension_numbers<[1], [0], [0], [1], [0, 0, 1, 1], [], []>} : vector<5x84xf32>, vector<84x80xf32>, vector<5x80xf32> -> vector<5x80xf32>
    %266 = arith.addf %262, %265 : vector<5x80xf32>
    %c88_192 = arith.constant 88 : index
    %c0_193 = arith.constant 0 : index
    %267 = vector.load %arg3[%c88_192, %c0_193] : memref<611x80xf32, #tpu.memory_space<vmem>>, vector<84x80xf32>
    %268 = vector.extract_strided_slice %261 {offsets = [0, 0], sizes = [5, 84], strides = [1, 1]} : vector<7x84xf32> to vector<5x84xf32>
    %cst_194 = arith.constant dense<0.000000e+00> : vector<5x80xf32>
    %269 = tpu.matmul %268, %267, %cst_194 {dimension_numbers = #tpu.dot_dimension_numbers<[1], [0], [0], [1], [0, 0, 1, 1], [], []>} : vector<5x84xf32>, vector<84x80xf32>, vector<5x80xf32> -> vector<5x80xf32>
    %270 = arith.addf %266, %269 : vector<5x80xf32>
    %c176_195 = arith.constant 176 : index
    %c0_196 = arith.constant 0 : index
    %271 = vector.load %arg3[%c176_195, %c0_196] : memref<611x80xf32, #tpu.memory_space<vmem>>, vector<84x80xf32>
    %272 = vector.extract_strided_slice %246 {offsets = [1, 0], sizes = [5, 84], strides = [1, 1]} : vector<7x84xf32> to vector<5x84xf32>
    %cst_197 = arith.constant dense<0.000000e+00> : vector<5x80xf32>
    %273 = tpu.matmul %272, %271, %cst_197 {dimension_numbers = #tpu.dot_dimension_numbers<[1], [0], [0], [1], [0, 0, 1, 1], [], []>} : vector<5x84xf32>, vector<84x80xf32>, vector<5x80xf32> -> vector<5x80xf32>
    %274 = arith.addf %270, %273 : vector<5x80xf32>
    %c264_198 = arith.constant 264 : index
    %c0_199 = arith.constant 0 : index
    %275 = vector.load %arg3[%c264_198, %c0_199] : memref<611x80xf32, #tpu.memory_space<vmem>>, vector<84x80xf32>
    %276 = vector.extract_strided_slice %261 {offsets = [1, 0], sizes = [5, 84], strides = [1, 1]} : vector<7x84xf32> to vector<5x84xf32>
    %cst_200 = arith.constant dense<0.000000e+00> : vector<5x80xf32>
    %277 = tpu.matmul %276, %275, %cst_200 {dimension_numbers = #tpu.dot_dimension_numbers<[1], [0], [0], [1], [0, 0, 1, 1], [], []>} : vector<5x84xf32>, vector<84x80xf32>, vector<5x80xf32> -> vector<5x80xf32>
    %278 = arith.addf %274, %277 : vector<5x80xf32>
    %c352_201 = arith.constant 352 : index
    %c0_202 = arith.constant 0 : index
    %279 = vector.load %arg3[%c352_201, %c0_202] : memref<611x80xf32, #tpu.memory_space<vmem>>, vector<84x80xf32>
    %280 = vector.extract_strided_slice %246 {offsets = [2, 0], sizes = [5, 84], strides = [1, 1]} : vector<7x84xf32> to vector<5x84xf32>
    %cst_203 = arith.constant dense<0.000000e+00> : vector<5x80xf32>
    %281 = tpu.matmul %280, %279, %cst_203 {dimension_numbers = #tpu.dot_dimension_numbers<[1], [0], [0], [1], [0, 0, 1, 1], [], []>} : vector<5x84xf32>, vector<84x80xf32>, vector<5x80xf32> -> vector<5x80xf32>
    %282 = arith.addf %278, %281 : vector<5x80xf32>
    %c440_204 = arith.constant 440 : index
    %c0_205 = arith.constant 0 : index
    %283 = vector.load %arg3[%c440_204, %c0_205] : memref<611x80xf32, #tpu.memory_space<vmem>>, vector<84x80xf32>
    %284 = vector.extract_strided_slice %261 {offsets = [2, 0], sizes = [5, 84], strides = [1, 1]} : vector<7x84xf32> to vector<5x84xf32>
    %cst_206 = arith.constant dense<0.000000e+00> : vector<5x80xf32>
    %285 = tpu.matmul %284, %283, %cst_206 {dimension_numbers = #tpu.dot_dimension_numbers<[1], [0], [0], [1], [0, 0, 1, 1], [], []>} : vector<5x84xf32>, vector<84x80xf32>, vector<5x80xf32> -> vector<5x80xf32>
    %286 = arith.addf %282, %285 : vector<5x80xf32>
    %287 = vector.broadcast %165 : vector<1x80xf32> to vector<5x80xf32>
    %288 = arith.addf %286, %287 : vector<5x80xf32>
    %cst_207 = arith.constant dense<0.000000e+00> : vector<80xf32>
    %289 = vector.multi_reduction <add>, %288, %cst_207 [0] : vector<5x80xf32> to vector<80xf32>
    %290 = vector.shape_cast %289 : vector<80xf32> to vector<1x80xf32>
    %291 = arith.addf %227, %290 : vector<1x80xf32>
    %292 = arith.mulf %288, %288 : vector<5x80xf32>
    %cst_208 = arith.constant dense<0.000000e+00> : vector<80xf32>
    %293 = vector.multi_reduction <add>, %292, %cst_208 [0] : vector<5x80xf32> to vector<80xf32>
    %294 = vector.shape_cast %293 : vector<80xf32> to vector<1x80xf32>
    %295 = arith.addf %231, %294 : vector<1x80xf32>
    %c528 = arith.constant 528 : index
    %c0_209 = arith.constant 0 : index
    %296 = vector.load %arg3[%c528, %c0_209] : memref<611x80xf32, #tpu.memory_space<vmem>>, vector<80x80xf32>
    %cst_210 = arith.constant dense<0.000000e+00> : vector<1x80xf32>
    %297 = tpu.matmul %291, %296, %cst_210 {dimension_numbers = #tpu.dot_dimension_numbers<[1], [0], [0], [1], [0, 0, 1, 1], [], []>} : vector<1x80xf32>, vector<80x80xf32>, vector<1x80xf32> -> vector<1x80xf32>
    %cst_211 = arith.constant 5.000000e-01 : f32
    %298 = vector.broadcast %cst_211 : f32 to vector<1x80xf32>
    %299 = arith.mulf %298, %297 : vector<1x80xf32>
    %cst_212 = arith.constant dense<0.000000e+00> : vector<1x80xf32>
    %300 = tpu.matmul %295, %296, %cst_212 {dimension_numbers = #tpu.dot_dimension_numbers<[1], [0], [0], [1], [0, 0, 1, 1], [], []>} : vector<1x80xf32>, vector<80x80xf32>, vector<1x80xf32> -> vector<1x80xf32>
    %cst_213 = arith.constant 5.000000e-01 : f32
    %301 = vector.broadcast %cst_213 : f32 to vector<1x80xf32>
    %302 = arith.mulf %301, %300 : vector<1x80xf32>
    %303 = arith.mulf %299, %299 : vector<1x80xf32>
    %304 = arith.subf %302, %303 : vector<1x80xf32>
    %cst_214 = arith.constant 9.99999974E-6 : f32
    %305 = vector.broadcast %cst_214 : f32 to vector<1x80xf32>
    %306 = arith.addf %304, %305 : vector<1x80xf32>
    %307 = math.rsqrt %306 : vector<1x80xf32>
    %c609 = arith.constant 609 : index
    %c0_215 = arith.constant 0 : index
    %308 = vector.load %arg3[%c609, %c0_215] : memref<611x80xf32, #tpu.memory_space<vmem>>, vector<1x80xf32>
    %c610 = arith.constant 610 : index
    %c0_216 = arith.constant 0 : index
    %309 = vector.load %arg3[%c610, %c0_216] : memref<611x80xf32, #tpu.memory_space<vmem>>, vector<1x80xf32>
    %c656 = arith.constant 656 : index
    %c0_217 = arith.constant 0 : index
    %310 = vector.load %arg4[%c656, %c0_217] : memref<663x128xf32, #tpu.memory_space<vmem>>, vector<1x128xf32>
    %311 = vector.broadcast %299 : vector<1x80xf32> to vector<5x80xf32>
    %312 = arith.subf %224, %311 : vector<5x80xf32>
    %313 = vector.broadcast %308 : vector<1x80xf32> to vector<5x80xf32>
    %314 = arith.mulf %313, %312 : vector<5x80xf32>
    %315 = vector.broadcast %307 : vector<1x80xf32> to vector<5x80xf32>
    %316 = arith.mulf %314, %315 : vector<5x80xf32>
    %317 = vector.broadcast %309 : vector<1x80xf32> to vector<5x80xf32>
    %318 = arith.addf %316, %317 : vector<5x80xf32>
    %cst_218 = arith.constant 0.000000e+00 : f32
    %319 = vector.broadcast %cst_218 : f32 to vector<5x80xf32>
    %320 = arith.subf %319, %318 : vector<5x80xf32>
    %321 = math.exp %320 : vector<5x80xf32>
    %cst_219 = arith.constant 1.000000e+00 : f32
    %322 = vector.broadcast %cst_219 : f32 to vector<5x80xf32>
    %323 = arith.addf %322, %321 : vector<5x80xf32>
    %cst_220 = arith.constant 1.000000e+00 : f32
    %324 = vector.broadcast %cst_220 : f32 to vector<5x80xf32>
    %325 = arith.divf %324, %323 : vector<5x80xf32>
    %326 = vector.extract_strided_slice %325 {offsets = [0, 0], sizes = [1, 80], strides = [1, 1]} : vector<5x80xf32> to vector<1x80xf32>
    %c0_221 = arith.constant 0 : index
    %c0_222 = arith.constant 0 : index
    %327 = vector.load %arg4[%c0_221, %c0_222] : memref<663x128xf32, #tpu.memory_space<vmem>>, vector<80x128xf32>
    %cst_223 = arith.constant dense<0.000000e+00> : vector<1x128xf32>
    %328 = tpu.matmul %326, %327, %cst_223 {dimension_numbers = #tpu.dot_dimension_numbers<[1], [0], [0], [1], [0, 0, 1, 1], [], []>} : vector<1x80xf32>, vector<80x128xf32>, vector<1x128xf32> -> vector<1x128xf32>
    %329 = arith.addf %310, %328 : vector<1x128xf32>
    %330 = vector.extract_strided_slice %325 {offsets = [1, 0], sizes = [1, 80], strides = [1, 1]} : vector<5x80xf32> to vector<1x80xf32>
    %c80 = arith.constant 80 : index
    %c0_224 = arith.constant 0 : index
    %331 = vector.load %arg4[%c80, %c0_224] : memref<663x128xf32, #tpu.memory_space<vmem>>, vector<80x128xf32>
    %cst_225 = arith.constant dense<0.000000e+00> : vector<1x128xf32>
    %332 = tpu.matmul %330, %331, %cst_225 {dimension_numbers = #tpu.dot_dimension_numbers<[1], [0], [0], [1], [0, 0, 1, 1], [], []>} : vector<1x80xf32>, vector<80x128xf32>, vector<1x128xf32> -> vector<1x128xf32>
    %333 = arith.addf %329, %332 : vector<1x128xf32>
    %334 = vector.extract_strided_slice %325 {offsets = [2, 0], sizes = [1, 80], strides = [1, 1]} : vector<5x80xf32> to vector<1x80xf32>
    %c160_226 = arith.constant 160 : index
    %c0_227 = arith.constant 0 : index
    %335 = vector.load %arg4[%c160_226, %c0_227] : memref<663x128xf32, #tpu.memory_space<vmem>>, vector<80x128xf32>
    %cst_228 = arith.constant dense<0.000000e+00> : vector<1x128xf32>
    %336 = tpu.matmul %334, %335, %cst_228 {dimension_numbers = #tpu.dot_dimension_numbers<[1], [0], [0], [1], [0, 0, 1, 1], [], []>} : vector<1x80xf32>, vector<80x128xf32>, vector<1x128xf32> -> vector<1x128xf32>
    %337 = arith.addf %333, %336 : vector<1x128xf32>
    %338 = vector.extract_strided_slice %325 {offsets = [3, 0], sizes = [1, 80], strides = [1, 1]} : vector<5x80xf32> to vector<1x80xf32>
    %c240 = arith.constant 240 : index
    %c0_229 = arith.constant 0 : index
    %339 = vector.load %arg4[%c240, %c0_229] : memref<663x128xf32, #tpu.memory_space<vmem>>, vector<80x128xf32>
    %cst_230 = arith.constant dense<0.000000e+00> : vector<1x128xf32>
    %340 = tpu.matmul %338, %339, %cst_230 {dimension_numbers = #tpu.dot_dimension_numbers<[1], [0], [0], [1], [0, 0, 1, 1], [], []>} : vector<1x80xf32>, vector<80x128xf32>, vector<1x128xf32> -> vector<1x128xf32>
    %341 = arith.addf %337, %340 : vector<1x128xf32>
    %342 = vector.extract_strided_slice %325 {offsets = [4, 0], sizes = [1, 80], strides = [1, 1]} : vector<5x80xf32> to vector<1x80xf32>
    %c320 = arith.constant 320 : index
    %c0_231 = arith.constant 0 : index
    %343 = vector.load %arg4[%c320, %c0_231] : memref<663x128xf32, #tpu.memory_space<vmem>>, vector<80x128xf32>
    %cst_232 = arith.constant dense<0.000000e+00> : vector<1x128xf32>
    %344 = tpu.matmul %342, %343, %cst_232 {dimension_numbers = #tpu.dot_dimension_numbers<[1], [0], [0], [1], [0, 0, 1, 1], [], []>} : vector<1x80xf32>, vector<80x128xf32>, vector<1x128xf32> -> vector<1x128xf32>
    %345 = arith.addf %341, %344 : vector<1x128xf32>
    %346 = vector.broadcast %299 : vector<1x80xf32> to vector<5x80xf32>
    %347 = arith.subf %288, %346 : vector<5x80xf32>
    %348 = vector.broadcast %308 : vector<1x80xf32> to vector<5x80xf32>
    %349 = arith.mulf %348, %347 : vector<5x80xf32>
    %350 = vector.broadcast %307 : vector<1x80xf32> to vector<5x80xf32>
    %351 = arith.mulf %349, %350 : vector<5x80xf32>
    %352 = vector.broadcast %309 : vector<1x80xf32> to vector<5x80xf32>
    %353 = arith.addf %351, %352 : vector<5x80xf32>
    %cst_233 = arith.constant 0.000000e+00 : f32
    %354 = vector.broadcast %cst_233 : f32 to vector<5x80xf32>
    %355 = arith.subf %354, %353 : vector<5x80xf32>
    %356 = math.exp %355 : vector<5x80xf32>
    %cst_234 = arith.constant 1.000000e+00 : f32
    %357 = vector.broadcast %cst_234 : f32 to vector<5x80xf32>
    %358 = arith.addf %357, %356 : vector<5x80xf32>
    %cst_235 = arith.constant 1.000000e+00 : f32
    %359 = vector.broadcast %cst_235 : f32 to vector<5x80xf32>
    %360 = arith.divf %359, %358 : vector<5x80xf32>
    %361 = vector.extract_strided_slice %360 {offsets = [0, 0], sizes = [1, 80], strides = [1, 1]} : vector<5x80xf32> to vector<1x80xf32>
    %c0_236 = arith.constant 0 : index
    %c0_237 = arith.constant 0 : index
    %362 = vector.load %arg4[%c0_236, %c0_237] : memref<663x128xf32, #tpu.memory_space<vmem>>, vector<80x128xf32>
    %cst_238 = arith.constant dense<0.000000e+00> : vector<1x128xf32>
    %363 = tpu.matmul %361, %362, %cst_238 {dimension_numbers = #tpu.dot_dimension_numbers<[1], [0], [0], [1], [0, 0, 1, 1], [], []>} : vector<1x80xf32>, vector<80x128xf32>, vector<1x128xf32> -> vector<1x128xf32>
    %364 = arith.addf %310, %363 : vector<1x128xf32>
    %365 = vector.extract_strided_slice %360 {offsets = [1, 0], sizes = [1, 80], strides = [1, 1]} : vector<5x80xf32> to vector<1x80xf32>
    %c80_239 = arith.constant 80 : index
    %c0_240 = arith.constant 0 : index
    %366 = vector.load %arg4[%c80_239, %c0_240] : memref<663x128xf32, #tpu.memory_space<vmem>>, vector<80x128xf32>
    %cst_241 = arith.constant dense<0.000000e+00> : vector<1x128xf32>
    %367 = tpu.matmul %365, %366, %cst_241 {dimension_numbers = #tpu.dot_dimension_numbers<[1], [0], [0], [1], [0, 0, 1, 1], [], []>} : vector<1x80xf32>, vector<80x128xf32>, vector<1x128xf32> -> vector<1x128xf32>
    %368 = arith.addf %364, %367 : vector<1x128xf32>
    %369 = vector.extract_strided_slice %360 {offsets = [2, 0], sizes = [1, 80], strides = [1, 1]} : vector<5x80xf32> to vector<1x80xf32>
    %c160_242 = arith.constant 160 : index
    %c0_243 = arith.constant 0 : index
    %370 = vector.load %arg4[%c160_242, %c0_243] : memref<663x128xf32, #tpu.memory_space<vmem>>, vector<80x128xf32>
    %cst_244 = arith.constant dense<0.000000e+00> : vector<1x128xf32>
    %371 = tpu.matmul %369, %370, %cst_244 {dimension_numbers = #tpu.dot_dimension_numbers<[1], [0], [0], [1], [0, 0, 1, 1], [], []>} : vector<1x80xf32>, vector<80x128xf32>, vector<1x128xf32> -> vector<1x128xf32>
    %372 = arith.addf %368, %371 : vector<1x128xf32>
    %373 = vector.extract_strided_slice %360 {offsets = [3, 0], sizes = [1, 80], strides = [1, 1]} : vector<5x80xf32> to vector<1x80xf32>
    %c240_245 = arith.constant 240 : index
    %c0_246 = arith.constant 0 : index
    %374 = vector.load %arg4[%c240_245, %c0_246] : memref<663x128xf32, #tpu.memory_space<vmem>>, vector<80x128xf32>
    %cst_247 = arith.constant dense<0.000000e+00> : vector<1x128xf32>
    %375 = tpu.matmul %373, %374, %cst_247 {dimension_numbers = #tpu.dot_dimension_numbers<[1], [0], [0], [1], [0, 0, 1, 1], [], []>} : vector<1x80xf32>, vector<80x128xf32>, vector<1x128xf32> -> vector<1x128xf32>
    %376 = arith.addf %372, %375 : vector<1x128xf32>
    %377 = vector.extract_strided_slice %360 {offsets = [4, 0], sizes = [1, 80], strides = [1, 1]} : vector<5x80xf32> to vector<1x80xf32>
    %c320_248 = arith.constant 320 : index
    %c0_249 = arith.constant 0 : index
    %378 = vector.load %arg4[%c320_248, %c0_249] : memref<663x128xf32, #tpu.memory_space<vmem>>, vector<80x128xf32>
    %cst_250 = arith.constant dense<0.000000e+00> : vector<1x128xf32>
    %379 = tpu.matmul %377, %378, %cst_250 {dimension_numbers = #tpu.dot_dimension_numbers<[1], [0], [0], [1], [0, 0, 1, 1], [], []>} : vector<1x80xf32>, vector<80x128xf32>, vector<1x128xf32> -> vector<1x128xf32>
    %380 = arith.addf %376, %379 : vector<1x128xf32>
    %381 = tpu.concatenate %345, %380 in 0 : vector<1x128xf32>, vector<1x128xf32> -> vector<2x128xf32>
    %c657 = arith.constant 657 : index
    %c0_251 = arith.constant 0 : index
    %382 = vector.load %arg4[%c657, %c0_251] : memref<663x128xf32, #tpu.memory_space<vmem>>, vector<1x128xf32>
    %c658 = arith.constant 658 : index
    %c0_252 = arith.constant 0 : index
    %383 = vector.load %arg4[%c658, %c0_252] : memref<663x128xf32, #tpu.memory_space<vmem>>, vector<1x128xf32>
    %cst_253 = arith.constant dense<0.000000e+00> : vector<128xf32>
    %384 = vector.multi_reduction <add>, %381, %cst_253 [0] : vector<2x128xf32> to vector<128xf32>
    %385 = vector.shape_cast %384 : vector<128xf32> to vector<1x128xf32>
    %cst_254 = arith.constant 2.000000e+00 : f32
    %386 = vector.broadcast %cst_254 : f32 to vector<1x128xf32>
    %387 = arith.divf %385, %386 : vector<1x128xf32>
    %388 = vector.broadcast %387 : vector<1x128xf32> to vector<2x128xf32>
    %389 = arith.subf %381, %388 : vector<2x128xf32>
    %390 = vector.broadcast %387 : vector<1x128xf32> to vector<2x128xf32>
    %391 = arith.subf %381, %390 : vector<2x128xf32>
    %392 = arith.mulf %389, %391 : vector<2x128xf32>
    %cst_255 = arith.constant dense<0.000000e+00> : vector<128xf32>
    %393 = vector.multi_reduction <add>, %392, %cst_255 [0] : vector<2x128xf32> to vector<128xf32>
    %394 = vector.shape_cast %393 : vector<128xf32> to vector<1x128xf32>
    %cst_256 = arith.constant 2.000000e+00 : f32
    %395 = vector.broadcast %cst_256 : f32 to vector<1x128xf32>
    %396 = arith.divf %394, %395 : vector<1x128xf32>
    %397 = vector.broadcast %387 : vector<1x128xf32> to vector<2x128xf32>
    %398 = arith.subf %381, %397 : vector<2x128xf32>
    %399 = vector.broadcast %382 : vector<1x128xf32> to vector<2x128xf32>
    %400 = arith.mulf %399, %398 : vector<2x128xf32>
    %cst_257 = arith.constant 9.99999974E-6 : f32
    %401 = vector.broadcast %cst_257 : f32 to vector<1x128xf32>
    %402 = arith.addf %396, %401 : vector<1x128xf32>
    %403 = math.rsqrt %402 : vector<1x128xf32>
    %404 = vector.broadcast %403 : vector<1x128xf32> to vector<2x128xf32>
    %405 = arith.mulf %400, %404 : vector<2x128xf32>
    %406 = vector.broadcast %383 : vector<1x128xf32> to vector<2x128xf32>
    %407 = arith.addf %405, %406 : vector<2x128xf32>
    %cst_258 = arith.constant 0.000000e+00 : f32
    %408 = vector.broadcast %cst_258 : f32 to vector<2x128xf32>
    %409 = arith.subf %408, %407 : vector<2x128xf32>
    %410 = math.exp %409 : vector<2x128xf32>
    %cst_259 = arith.constant 1.000000e+00 : f32
    %411 = vector.broadcast %cst_259 : f32 to vector<2x128xf32>
    %412 = arith.addf %411, %410 : vector<2x128xf32>
    %cst_260 = arith.constant 1.000000e+00 : f32
    %413 = vector.broadcast %cst_260 : f32 to vector<2x128xf32>
    %414 = arith.divf %413, %412 : vector<2x128xf32>
    %c400 = arith.constant 400 : index
    %c0_261 = arith.constant 0 : index
    %415 = vector.load %arg4[%c400, %c0_261] : memref<663x128xf32, #tpu.memory_space<vmem>>, vector<128x128xf32>
    %cst_262 = arith.constant dense<0.000000e+00> : vector<2x128xf32>
    %416 = tpu.matmul %414, %415, %cst_262 {dimension_numbers = #tpu.dot_dimension_numbers<[1], [0], [0], [1], [0, 0, 1, 1], [], []>} : vector<2x128xf32>, vector<128x128xf32>, vector<2x128xf32> -> vector<2x128xf32>
    %c659 = arith.constant 659 : index
    %c0_263 = arith.constant 0 : index
    %417 = vector.load %arg4[%c659, %c0_263] : memref<663x128xf32, #tpu.memory_space<vmem>>, vector<1x128xf32>
    %418 = vector.broadcast %417 : vector<1x128xf32> to vector<2x128xf32>
    %419 = arith.addf %416, %418 : vector<2x128xf32>
    %c660 = arith.constant 660 : index
    %c0_264 = arith.constant 0 : index
    %420 = vector.load %arg4[%c660, %c0_264] : memref<663x128xf32, #tpu.memory_space<vmem>>, vector<1x128xf32>
    %c661 = arith.constant 661 : index
    %c0_265 = arith.constant 0 : index
    %421 = vector.load %arg4[%c661, %c0_265] : memref<663x128xf32, #tpu.memory_space<vmem>>, vector<1x128xf32>
    %cst_266 = arith.constant dense<0.000000e+00> : vector<128xf32>
    %422 = vector.multi_reduction <add>, %419, %cst_266 [0] : vector<2x128xf32> to vector<128xf32>
    %423 = vector.shape_cast %422 : vector<128xf32> to vector<1x128xf32>
    %cst_267 = arith.constant 2.000000e+00 : f32
    %424 = vector.broadcast %cst_267 : f32 to vector<1x128xf32>
    %425 = arith.divf %423, %424 : vector<1x128xf32>
    %426 = vector.broadcast %425 : vector<1x128xf32> to vector<2x128xf32>
    %427 = arith.subf %419, %426 : vector<2x128xf32>
    %428 = vector.broadcast %425 : vector<1x128xf32> to vector<2x128xf32>
    %429 = arith.subf %419, %428 : vector<2x128xf32>
    %430 = arith.mulf %427, %429 : vector<2x128xf32>
    %cst_268 = arith.constant dense<0.000000e+00> : vector<128xf32>
    %431 = vector.multi_reduction <add>, %430, %cst_268 [0] : vector<2x128xf32> to vector<128xf32>
    %432 = vector.shape_cast %431 : vector<128xf32> to vector<1x128xf32>
    %cst_269 = arith.constant 2.000000e+00 : f32
    %433 = vector.broadcast %cst_269 : f32 to vector<1x128xf32>
    %434 = arith.divf %432, %433 : vector<1x128xf32>
    %435 = vector.broadcast %425 : vector<1x128xf32> to vector<2x128xf32>
    %436 = arith.subf %419, %435 : vector<2x128xf32>
    %437 = vector.broadcast %420 : vector<1x128xf32> to vector<2x128xf32>
    %438 = arith.mulf %437, %436 : vector<2x128xf32>
    %cst_270 = arith.constant 9.99999974E-6 : f32
    %439 = vector.broadcast %cst_270 : f32 to vector<1x128xf32>
    %440 = arith.addf %434, %439 : vector<1x128xf32>
    %441 = math.rsqrt %440 : vector<1x128xf32>
    %442 = vector.broadcast %441 : vector<1x128xf32> to vector<2x128xf32>
    %443 = arith.mulf %438, %442 : vector<2x128xf32>
    %444 = vector.broadcast %421 : vector<1x128xf32> to vector<2x128xf32>
    %445 = arith.addf %443, %444 : vector<2x128xf32>
    %cst_271 = arith.constant 0.000000e+00 : f32
    %446 = vector.broadcast %cst_271 : f32 to vector<2x128xf32>
    %447 = arith.subf %446, %445 : vector<2x128xf32>
    %448 = math.exp %447 : vector<2x128xf32>
    %cst_272 = arith.constant 1.000000e+00 : f32
    %449 = vector.broadcast %cst_272 : f32 to vector<2x128xf32>
    %450 = arith.addf %449, %448 : vector<2x128xf32>
    %cst_273 = arith.constant 1.000000e+00 : f32
    %451 = vector.broadcast %cst_273 : f32 to vector<2x128xf32>
    %452 = arith.divf %451, %450 : vector<2x128xf32>
    %c528_274 = arith.constant 528 : index
    %c0_275 = arith.constant 0 : index
    %453 = vector.load %arg4[%c528_274, %c0_275] : memref<663x128xf32, #tpu.memory_space<vmem>>, vector<128x128xf32>
    %cst_276 = arith.constant dense<0.000000e+00> : vector<2x128xf32>
    %454 = tpu.matmul %452, %453, %cst_276 {dimension_numbers = #tpu.dot_dimension_numbers<[1], [0], [0], [1], [0, 0, 1, 1], [], []>} : vector<2x128xf32>, vector<128x128xf32>, vector<2x128xf32> -> vector<2x128xf32>
    %c662 = arith.constant 662 : index
    %c0_277 = arith.constant 0 : index
    %455 = vector.load %arg4[%c662, %c0_277] : memref<663x128xf32, #tpu.memory_space<vmem>>, vector<1x128xf32>
    %456 = vector.broadcast %455 : vector<1x128xf32> to vector<2x128xf32>
    %457 = arith.addf %454, %456 : vector<2x128xf32>
    %458 = vector.extract_strided_slice %457 {offsets = [0, 0], sizes = [2, 10], strides = [1, 1]} : vector<2x128xf32> to vector<2x10xf32>
    %cst_278 = arith.constant dense<0xFF800000> : vector<2xf32>
    %459 = vector.multi_reduction <maximumf>, %458, %cst_278 [1] : vector<2x10xf32> to vector<2xf32>
    %460 = vector.shape_cast %459 : vector<2xf32> to vector<2x1xf32>
    %461 = vector.broadcast %460 : vector<2x1xf32> to vector<2x10xf32>
    %462 = arith.subf %458, %461 : vector<2x10xf32>
    %463 = math.exp %462 : vector<2x10xf32>
    %cst_279 = arith.constant dense<0.000000e+00> : vector<2xf32>
    %464 = vector.multi_reduction <add>, %463, %cst_279 [1] : vector<2x10xf32> to vector<2xf32>
    %465 = vector.shape_cast %464 : vector<2xf32> to vector<2x1xf32>
    %466 = vector.broadcast %465 : vector<2x1xf32> to vector<2x10xf32>
    %467 = arith.divf %463, %466 : vector<2x10xf32>
    %c0_280 = arith.constant 0 : index
    %c0_281 = arith.constant 0 : index
    %468 = vector.load %arg5[%c0_280, %c0_281] : memref<2x10xf32, #tpu.memory_space<vmem>>, vector<2x10xf32>
    tpu.vector_store %arg5[%c0_280, %c0_281], %467 {strides = array<i32>} : memref<2x10xf32, #tpu.memory_space<vmem>>, vector<2x10xf32>,
    return
  }
  func.func @transform_0(%arg0: i32) -> (i32, i32, i32, i32) {
    %c0_i32 = arith.constant 0 : i32
    %c0_i32_0 = arith.constant 0 : i32
    %c0_i32_1 = arith.constant 0 : i32
    %c0_i32_2 = arith.constant 0 : i32
    %c0_i32_3 = arith.constant 0 : i32
    return %c0_i32, %c0_i32_0, %c0_i32_1, %c0_i32_2 : i32, i32, i32, i32
  }
  func.func @transform_1(%arg0: i32) -> (i32, i32) {
    %c0_i32 = arith.constant 0 : i32
    %c0_i32_0 = arith.constant 0 : i32
    %c0_i32_1 = arith.constant 0 : i32
    return %c0_i32, %c0_i32_0 : i32, i32
  }
  func.func @transform_2(%arg0: i32) -> (i32, i32) {
    %c0_i32 = arith.constant 0 : i32
    %c0_i32_0 = arith.constant 0 : i32
    %c0_i32_1 = arith.constant 0 : i32
    return %c0_i32, %c0_i32_0 : i32, i32
  }
  func.func @transform_3(%arg0: i32) -> (i32, i32) {
    %c0_i32 = arith.constant 0 : i32
    %c0_i32_0 = arith.constant 0 : i32
    %c0_i32_1 = arith.constant 0 : i32
    return %c0_i32, %c0_i32_0 : i32, i32
  }
  func.func @transform_4(%arg0: i32) -> (i32, i32) {
    %c0_i32 = arith.constant 0 : i32
    %c0_i32_0 = arith.constant 0 : i32
    %c0_i32_1 = arith.constant 0 : i32
    return %c0_i32, %c0_i32_0 : i32, i32
  }
}

</mosaic_0001>

<llo_original>
// kernel: lenet_bn_forward.1
$region0: #{lenet_bn_forward.1}
  #allocation0 [shape = 'u32[]', space=smem, size = 0x4, offset = 0x4, fixed_abs, tag = 'smem constant byte address 0x4 - core index']
  #allocation1 [shape = 'u32[144,128]{1,0:T(1,128)}', space=vmem, size = 0x12000, scoped, tag = 'internal scratch']
  %s0 = inlined_call_operand.vmem [shape: f32[2,4,8,32], index: 0, kind: input, shape index: {}]
  %s1 = inlined_call_operand.vmem [shape: f32[283,84], index: 1, kind: input, shape index: {}]
  %s2 = inlined_call_operand.vmem [shape: f32[611,80], index: 2, kind: input, shape index: {}]
  %s3 = inlined_call_operand.vmem [shape: f32[663,128], index: 3, kind: input, shape index: {}]
  %s4 = inlined_call_operand.hbm [shape: f32[2,10], index: 4, kind: output, shape index: {}]
  %s5 = sld [smem:[#allocation0]]
  $region26: #{lenet_bn_forward.1} parent=0
    _
  %s7 = ssub.s32 1, %s5
  %s8 = scalar_select 0, %s7, %s5
  $region1: #{lenet_bn_forward.1} parent=0
    #allocation2 [shape = 'u8[1024]{0}', space=vmem, size = 0x400, scoped, tag = 'output window, operand 0, single buffered']
    #allocation3 [shape = 's32[1]{0}', space=sflag, size = 0x4, scoped, tag = 'scoped memory for lenet_bn_forward.1']
    %9 = vsyncpa [#allocation3], 0
    // Predicated region
    $region2: #{lenet_bn_forward.1} parent=1 // pred_check
      _
    $region3: #{lenet_bn_forward.1} parent=1 // pred_check_branch
      %11 = sbr.rel (0) target = $region5
    $region4: #{lenet_bn_forward.1} parent=1 // pred_region
      _
    $region5: #{lenet_bn_forward.1} parent=1 // pred_fallthru
      _
    // Predicated region
    $region6: #{lenet_bn_forward.1} parent=1 // pred_check
      _
    $region7: #{lenet_bn_forward.1} parent=1 // pred_check_branch
      %13 = sbr.rel (0) target = $region9
    $region8: #{lenet_bn_forward.1} parent=1 // pred_region
      _
    $region9: #{lenet_bn_forward.1} parent=1 // pred_fallthru
      _
    // Predicated region
    $region10: #{lenet_bn_forward.1} parent=1 // pred_check
      _
    $region11: #{lenet_bn_forward.1} parent=1 // pred_check_branch
      %15 = sbr.rel (0) target = $region13
    $region12: #{lenet_bn_forward.1} parent=1 // pred_region
      _
    $region13: #{lenet_bn_forward.1} parent=1 // pred_fallthru
      _
    // Predicated region
    $region14: #{lenet_bn_forward.1} parent=1 // pred_check
      _
    $region15: #{lenet_bn_forward.1} parent=1 // pred_check_branch
      %17 = sbr.rel (0) target = $region17
    $region16: #{lenet_bn_forward.1} parent=1 // pred_region
      _
    $region17: #{lenet_bn_forward.1} parent=1 // pred_fallthru
      _
    %v18 = vld [vmem:[%s1 + $0x118] sm:$0x1]
    %v19 = vld [vmem:[%s1] sm:$0xff]
    %v20 = vld [vmem:[%s1 + $0x8] sm:$0xff]
    %v21 = vld [vmem:[%s1 + $0x10] sm:$0xff]
    %v22 = vld [vmem:[%s1 + $0x18] sm:$0xff]
    %v23 = vld [vmem:[%s0] sm:$0x7f]
    %s24 = scalar_lea.vmem %s0, 16
    %v25 = vld [vmem:[%s24] sm:$0x7f]
    %v26 = vld [vmem:[%s1 + $0x20] sm:$0xff]
    %v27 = vld [vmem:[%s1 + $0x28] sm:$0xff]
    %v28 = vld [vmem:[%s1 + $0x30] sm:$0xff]
    %v29 = vld [vmem:[%s1 + $0x38] sm:$0xff]
    %s30 = scalar_lea.vmem %s0, 8
    %v31 = vld [vmem:[%s30] sm:$0x7f]
    %vm32 = vcmask 261120
    %v34 = vsel %vm32, %v31, 0
    %36 = vmatprep.subr.mxu0 0.0
    %37 = vmatpush1.msra.mxu0 %v26
    %38 = vmatprep.subr.mxu0 0.0
    %39 = vmatpush1.msra.mxu0 %v27
    %40 = vmatprep.subr.mxu0 0.0
    %41 = vmatpush1.msra.mxu0 %v28
    %42 = vmatprep.subr.mxu0 0.0
    %43 = vmatpush1.msra.mxu0 %v29
    %44 = vmatprep.subr.mxu0 0.0
    %45 = vmatpush1.msra.mxu0 0.0
    %46 = vmatprep.subr.mxu0 0.0
    %47 = vmatpush1.msra.mxu0 0.0
    %48 = vmatprep.subr.mxu0 0.0
    %49 = vmatpush1.msra.mxu0 0.0
    %50 = vmatprep.subr.mxu0 0.0
    %51 = vmatpush1.msra.mxu0 0.0
    %52 = vmatprep.subr.mxu0 0.0
    %53 = vmatpush1.msra.mxu0 0.0
    %54 = vmatprep.subr.mxu0 0.0
    %55 = vmatpush1.msra.mxu0 0.0
    %56 = vmatprep.subr.mxu0 0.0
    %57 = vmatpush1.msra.mxu0 0.0
    %58 = vmatprep.subr.mxu0 0.0
    %59 = vmatpush1.msra.mxu0 0.0
    %60 = vmatprep.subr.mxu0 0.0
    %61 = vmatpush1.msra.mxu0 0.0
    %62 = vmatprep.subr.mxu0 0.0
    %63 = vmatpush1.msra.mxu0 0.0
    %64 = vmatprep.subr.mxu0 0.0
    %65 = vmatpush1.msra.mxu0 0.0
    %66 = vmatprep.subr.mxu0 0.0
    %67 = vmatpush1.msra.mxu0 0.0
    %68 = vmatprep.subr.mxu0 0.0
    %69 = vmatpush1.msra.mxu0 0.0
    %70 = vmatprep.subr.mxu0 0.0
    %71 = vmatpush1.msra.mxu0 0.0
    %72 = vmatprep.subr.mxu0 0.0
    %73 = vmatpush1.msra.mxu0 0.0
    %74 = vmatprep.subr.mxu0 0.0
    %75 = vmatpush1.msra.mxu0 0.0
    %76 = vmatprep.subr.mxu0 0.0
    %77 = vmatpush1.msra.mxu0 0.0
    %78 = vmatprep.subr.mxu0 0.0
    %79 = vmatpush1.msra.mxu0 0.0
    %80 = vmatprep.subr.mxu0 0.0
    %81 = vmatpush1.msra.mxu0 0.0
    %82 = vmatprep.subr.mxu0 0.0
    %83 = vmatpush1.msra.mxu0 0.0
    %84 = vmatprep.subr.mxu0 0.0
    %85 = vmatpush1.msra.mxu0 0.0
    %86 = vmatprep.subr.mxu0 0.0
    %87 = vmatpush1.msra.mxu0 0.0
    %88 = vmatprep.subr.mxu0 0.0
    %89 = vmatpush1.msra.mxu0 0.0
    %90 = vmatprep.subr.mxu0 0.0
    %91 = vmatpush1.msra.mxu0 0.0
    %92 = vmatprep.subr.mxu0 0.0
    %93 = vmatpush1.msra.mxu0 0.0
    %94 = vmatprep.subr.mxu0 0.0
    %95 = vmatpush1.msra.mxu0 0.0
    %96 = vmatprep.subr.mxu0 0.0
    %97 = vmatpush1.msra.mxu0 0.0
    %98 = vmatprep.subr.mxu0 0.0
    %99 = vmatpush1.msra.mxu0 0.0
    %100 = vmatprep.mubr.f32.mxu0 0.0
    %101 = vmatmul.mubr.f32.gmra.mrb[0].mxu0 %v34
    %v102 = vpop.f32.mrb[0].mxu0
    %v103 = vadd.f32 0.0, %v102
    %v104 = vpop.f32.mrb[0].mxu0
    %105 = vdwg.mxu0
    %v107 = vsel %vm32, %v23, 0
    %109 = vmatprep.subr.mxu0 0.0
    %110 = vmatpush1.msra.mxu0 %v19
    %111 = vmatprep.subr.mxu0 0.0
    %112 = vmatpush1.msra.mxu0 %v20
    %113 = vmatprep.subr.mxu0 0.0
    %114 = vmatpush1.msra.mxu0 %v21
    %115 = vmatprep.subr.mxu0 0.0
    %116 = vmatpush1.msra.mxu0 %v22
    %117 = vmatprep.subr.mxu0 0.0
    %118 = vmatpush1.msra.mxu0 0.0
    %119 = vmatprep.subr.mxu0 0.0
    %120 = vmatpush1.msra.mxu0 0.0
    %121 = vmatprep.subr.mxu0 0.0
    %122 = vmatpush1.msra.mxu0 0.0
    %123 = vmatprep.subr.mxu0 0.0
    %124 = vmatpush1.msra.mxu0 0.0
    %125 = vmatprep.subr.mxu0 0.0
    %126 = vmatpush1.msra.mxu0 0.0
    %127 = vmatprep.subr.mxu0 0.0
    %128 = vmatpush1.msra.mxu0 0.0
    %129 = vmatprep.subr.mxu0 0.0
    %130 = vmatpush1.msra.mxu0 0.0
    %131 = vmatprep.subr.mxu0 0.0
    %132 = vmatpush1.msra.mxu0 0.0
    %133 = vmatprep.subr.mxu0 0.0
    %134 = vmatpush1.msra.mxu0 0.0
    %135 = vmatprep.subr.mxu0 0.0
    %136 = vmatpush1.msra.mxu0 0.0
    %137 = vmatprep.subr.mxu0 0.0
    %138 = vmatpush1.msra.mxu0 0.0
    %139 = vmatprep.subr.mxu0 0.0
    %140 = vmatpush1.msra.mxu0 0.0
    %141 = vmatprep.subr.mxu0 0.0
    %142 = vmatpush1.msra.mxu0 0.0
    %143 = vmatprep.subr.mxu0 0.0
    %144 = vmatpush1.msra.mxu0 0.0
    %145 = vmatprep.subr.mxu0 0.0
    %146 = vmatpush1.msra.mxu0 0.0
    %147 = vmatprep.subr.mxu0 0.0
    %148 = vmatpush1.msra.mxu0 0.0
    %149 = vmatprep.subr.mxu0 0.0
    %150 = vmatpush1.msra.mxu0 0.0
    %151 = vmatprep.subr.mxu0 0.0
    %152 = vmatpush1.msra.mxu0 0.0
    %153 = vmatprep.subr.mxu0 0.0
    %154 = vmatpush1.msra.mxu0 0.0
    %155 = vmatprep.subr.mxu0 0.0
    %156 = vmatpush1.msra.mxu0 0.0
    %157 = vmatprep.subr.mxu0 0.0
    %158 = vmatpush1.msra.mxu0 0.0
    %159 = vmatprep.subr.mxu0 0.0
    %160 = vmatpush1.msra.mxu0 0.0
    %161 = vmatprep.subr.mxu0 0.0
    %162 = vmatpush1.msra.mxu0 0.0
    %163 = vmatprep.subr.mxu0 0.0
    %164 = vmatpush1.msra.mxu0 0.0
    %165 = vmatprep.subr.mxu0 0.0
    %166 = vmatpush1.msra.mxu0 0.0
    %167 = vmatprep.subr.mxu0 0.0
    %168 = vmatpush1.msra.mxu0 0.0
    %169 = vmatprep.subr.mxu0 0.0
    %170 = vmatpush1.msra.mxu0 0.0
    %171 = vmatprep.subr.mxu0 0.0
    %172 = vmatpush1.msra.mxu0 0.0
    %173 = vmatprep.mubr.f32.mxu0 0.0
    %174 = vmatmul.mubr.f32.gmra.mrb[0].mxu0 %v107
    %v175 = vpop.f32.mrb[0].mxu0
    %v176 = vadd.f32 %v103, %v175
    %v177 = vpop.f32.mrb[0].mxu0
    %178 = vdwg.mxu0
    %s179 = scalar_lea.vmem %s0, 24
    %v180 = vld [vmem:[%s179] sm:$0x7f]
    %v182 = vsel %vm32, %v180, 0
    %184 = vmatprep.subr.mxu0 0.0
    %185 = vmatpush1.msra.mxu0 %v26
    %186 = vmatprep.subr.mxu0 0.0
    %187 = vmatpush1.msra.mxu0 %v27
    %188 = vmatprep.subr.mxu0 0.0
    %189 = vmatpush1.msra.mxu0 %v28
    %190 = vmatprep.subr.mxu0 0.0
    %191 = vmatpush1.msra.mxu0 %v29
    %192 = vmatprep.subr.mxu0 0.0
    %193 = vmatpush1.msra.mxu0 0.0
    %194 = vmatprep.subr.mxu0 0.0
    %195 = vmatpush1.msra.mxu0 0.0
    %196 = vmatprep.subr.mxu0 0.0
    %197 = vmatpush1.msra.mxu0 0.0
    %198 = vmatprep.subr.mxu0 0.0
    %199 = vmatpush1.msra.mxu0 0.0
    %200 = vmatprep.subr.mxu0 0.0
    %201 = vmatpush1.msra.mxu0 0.0
    %202 = vmatprep.subr.mxu0 0.0
    %203 = vmatpush1.msra.mxu0 0.0
    %204 = vmatprep.subr.mxu0 0.0
    %205 = vmatpush1.msra.mxu0 0.0
    %206 = vmatprep.subr.mxu0 0.0
    %207 = vmatpush1.msra.mxu0 0.0
    %208 = vmatprep.subr.mxu0 0.0
    %209 = vmatpush1.msra.mxu0 0.0
    %210 = vmatprep.subr.mxu0 0.0
    %211 = vmatpush1.msra.mxu0 0.0
    %212 = vmatprep.subr.mxu0 0.0
    %213 = vmatpush1.msra.mxu0 0.0
    %214 = vmatprep.subr.mxu0 0.0
    %215 = vmatpush1.msra.mxu0 0.0
    %216 = vmatprep.subr.mxu0 0.0
    %217 = vmatpush1.msra.mxu0 0.0
    %218 = vmatprep.subr.mxu0 0.0
    %219 = vmatpush1.msra.mxu0 0.0
    %220 = vmatprep.subr.mxu0 0.0
    %221 = vmatpush1.msra.mxu0 0.0
    %222 = vmatprep.subr.mxu0 0.0
    %223 = vmatpush1.msra.mxu0 0.0
    %224 = vmatprep.subr.mxu0 0.0
    %225 = vmatpush1.msra.mxu0 0.0
    %226 = vmatprep.subr.mxu0 0.0
    %227 = vmatpush1.msra.mxu0 0.0
    %228 = vmatprep.subr.mxu0 0.0
    %229 = vmatpush1.msra.mxu0 0.0
    %230 = vmatprep.subr.mxu0 0.0
    %231 = vmatpush1.msra.mxu0 0.0
    %232 = vmatprep.subr.mxu0 0.0
    %233 = vmatpush1.msra.mxu0 0.0
    %234 = vmatprep.subr.mxu0 0.0
    %235 = vmatpush1.msra.mxu0 0.0
    %236 = vmatprep.subr.mxu0 0.0
    %237 = vmatpush1.msra.mxu0 0.0
    %238 = vmatprep.subr.mxu0 0.0
    %239 = vmatpush1.msra.mxu0 0.0
    %240 = vmatprep.subr.mxu0 0.0
    %241 = vmatpush1.msra.mxu0 0.0
    %242 = vmatprep.subr.mxu0 0.0
    %243 = vmatpush1.msra.mxu0 0.0
    %244 = vmatprep.subr.mxu0 0.0
    %245 = vmatpush1.msra.mxu0 0.0
    %246 = vmatprep.subr.mxu0 0.0
    %247 = vmatpush1.msra.mxu0 0.0
    %248 = vmatprep.mubr.f32.mxu0 0.0
    %249 = vmatmul.mubr.f32.gmra.mrb[0].mxu0 %v182
    %v250 = vpop.f32.mrb[0].mxu0
    %v251 = vadd.f32 0.0, %v250
    %v252 = vpop.f32.mrb[0].mxu0
    %253 = vdwg.mxu0
    %v255 = vsel %vm32, %v25, 0
    %257 = vmatprep.subr.mxu0 0.0
    %258 = vmatpush1.msra.mxu0 %v19
    %259 = vmatprep.subr.mxu0 0.0
    %260 = vmatpush1.msra.mxu0 %v20
    %261 = vmatprep.subr.mxu0 0.0
    %262 = vmatpush1.msra.mxu0 %v21
    %263 = vmatprep.subr.mxu0 0.0
    %264 = vmatpush1.msra.mxu0 %v22
    %265 = vmatprep.subr.mxu0 0.0
    %266 = vmatpush1.msra.mxu0 0.0
    %267 = vmatprep.subr.mxu0 0.0
    %268 = vmatpush1.msra.mxu0 0.0
    %269 = vmatprep.subr.mxu0 0.0
    %270 = vmatpush1.msra.mxu0 0.0
    %271 = vmatprep.subr.mxu0 0.0
    %272 = vmatpush1.msra.mxu0 0.0
    %273 = vmatprep.subr.mxu0 0.0
    %274 = vmatpush1.msra.mxu0 0.0
    %275 = vmatprep.subr.mxu0 0.0
    %276 = vmatpush1.msra.mxu0 0.0
    %277 = vmatprep.subr.mxu0 0.0
    %278 = vmatpush1.msra.mxu0 0.0
    %279 = vmatprep.subr.mxu0 0.0
    %280 = vmatpush1.msra.mxu0 0.0
    %281 = vmatprep.subr.mxu0 0.0
    %282 = vmatpush1.msra.mxu0 0.0
    %283 = vmatprep.subr.mxu0 0.0
    %284 = vmatpush1.msra.mxu0 0.0
    %285 = vmatprep.subr.mxu0 0.0
    %286 = vmatpush1.msra.mxu0 0.0
    %287 = vmatprep.subr.mxu0 0.0
    %288 = vmatpush1.msra.mxu0 0.0
    %289 = vmatprep.subr.mxu0 0.0
    %290 = vmatpush1.msra.mxu0 0.0
    %291 = vmatprep.subr.mxu0 0.0
    %292 = vmatpush1.msra.mxu0 0.0
    %293 = vmatprep.subr.mxu0 0.0
    %294 = vmatpush1.msra.mxu0 0.0
    %295 = vmatprep.subr.mxu0 0.0
    %296 = vmatpush1.msra.mxu0 0.0
    %297 = vmatprep.subr.mxu0 0.0
    %298 = vmatpush1.msra.mxu0 0.0
    %299 = vmatprep.subr.mxu0 0.0
    %300 = vmatpush1.msra.mxu0 0.0
    %301 = vmatprep.subr.mxu0 0.0
    %302 = vmatpush1.msra.mxu0 0.0
    %303 = vmatprep.subr.mxu0 0.0
    %304 = vmatpush1.msra.mxu0 0.0
    %305 = vmatprep.subr.mxu0 0.0
    %306 = vmatpush1.msra.mxu0 0.0
    %307 = vmatprep.subr.mxu0 0.0
    %308 = vmatpush1.msra.mxu0 0.0
    %309 = vmatprep.subr.mxu0 0.0
    %310 = vmatpush1.msra.mxu0 0.0
    %311 = vmatprep.subr.mxu0 0.0
    %312 = vmatpush1.msra.mxu0 0.0
    %313 = vmatprep.subr.mxu0 0.0
    %314 = vmatpush1.msra.mxu0 0.0
    %315 = vmatprep.subr.mxu0 0.0
    %316 = vmatpush1.msra.mxu0 0.0
    %317 = vmatprep.subr.mxu0 0.0
    %318 = vmatpush1.msra.mxu0 0.0
    %319 = vmatprep.subr.mxu0 0.0
    %320 = vmatpush1.msra.mxu0 0.0
    %321 = vmatprep.mubr.f32.mxu0 0.0
    %322 = vmatmul.mubr.f32.gmra.mrb[0].mxu0 %v255
    %v323 = vpop.f32.mrb[0].mxu0
    %v324 = vadd.f32 %v251, %v323
    %v325 = vpop.f32.mrb[0].mxu0
    %326 = vdwg.mxu0
    %v327 = vld [vmem:[%s1 + $0x40] sm:$0xff]
    %v328 = vld [vmem:[%s1 + $0x48] sm:$0xff]
    %v329 = vld [vmem:[%s1 + $0x50] sm:$0xff]
    %v330 = vld [vmem:[%s1 + $0x58] sm:$0xff]
    %331 = vmatprep.subr.mxu0 0.0
    %332 = vmatpush1.msra.mxu0 %v327
    %333 = vmatprep.subr.mxu0 0.0
    %334 = vmatpush1.msra.mxu0 %v328
    %335 = vmatprep.subr.mxu0 0.0
    %336 = vmatpush1.msra.mxu0 %v329
    %337 = vmatprep.subr.mxu0 0.0
    %338 = vmatpush1.msra.mxu0 %v330
    %339 = vmatprep.subr.mxu0 0.0
    %340 = vmatpush1.msra.mxu0 0.0
    %341 = vmatprep.subr.mxu0 0.0
    %342 = vmatpush1.msra.mxu0 0.0
    %343 = vmatprep.subr.mxu0 0.0
    %344 = vmatpush1.msra.mxu0 0.0
    %345 = vmatprep.subr.mxu0 0.0
    %346 = vmatpush1.msra.mxu0 0.0
    %347 = vmatprep.subr.mxu0 0.0
    %348 = vmatpush1.msra.mxu0 0.0
    %349 = vmatprep.subr.mxu0 0.0
    %350 = vmatpush1.msra.mxu0 0.0
    %351 = vmatprep.subr.mxu0 0.0
    %352 = vmatpush1.msra.mxu0 0.0
    %353 = vmatprep.subr.mxu0 0.0
    %354 = vmatpush1.msra.mxu0 0.0
    %355 = vmatprep.subr.mxu0 0.0
    %356 = vmatpush1.msra.mxu0 0.0
    %357 = vmatprep.subr.mxu0 0.0
    %358 = vmatpush1.msra.mxu0 0.0
    %359 = vmatprep.subr.mxu0 0.0
    %360 = vmatpush1.msra.mxu0 0.0
    %361 = vmatprep.subr.mxu0 0.0
    %362 = vmatpush1.msra.mxu0 0.0
    %363 = vmatprep.subr.mxu0 0.0
    %364 = vmatpush1.msra.mxu0 0.0
    %365 = vmatprep.subr.mxu0 0.0
    %366 = vmatpush1.msra.mxu0 0.0
    %367 = vmatprep.subr.mxu0 0.0
    %368 = vmatpush1.msra.mxu0 0.0
    %369 = vmatprep.subr.mxu0 0.0
    %370 = vmatpush1.msra.mxu0 0.0
    %371 = vmatprep.subr.mxu0 0.0
    %372 = vmatpush1.msra.mxu0 0.0
    %373 = vmatprep.subr.mxu0 0.0
    %374 = vmatpush1.msra.mxu0 0.0
    %375 = vmatprep.subr.mxu0 0.0
    %376 = vmatpush1.msra.mxu0 0.0
    %377 = vmatprep.subr.mxu0 0.0
    %378 = vmatpush1.msra.mxu0 0.0
    %379 = vmatprep.subr.mxu0 0.0
    %380 = vmatpush1.msra.mxu0 0.0
    %381 = vmatprep.subr.mxu0 0.0
    %382 = vmatpush1.msra.mxu0 0.0
    %383 = vmatprep.subr.mxu0 0.0
    %384 = vmatpush1.msra.mxu0 0.0
    %385 = vmatprep.subr.mxu0 0.0
    %386 = vmatpush1.msra.mxu0 0.0
    %387 = vmatprep.subr.mxu0 0.0
    %388 = vmatpush1.msra.mxu0 0.0
    %389 = vmatprep.subr.mxu0 0.0
    %390 = vmatpush1.msra.mxu0 0.0
    %391 = vmatprep.subr.mxu0 0.0
    %392 = vmatpush1.msra.mxu0 0.0
    %393 = vmatprep.subr.mxu0 0.0
    %394 = vmatpush1.msra.mxu0 0.0
    %395 = vmatprep.mubr.f32.mxu0 0.0
    %396 = vmatmul.mubr.f32.gmra.mrb[0].mxu0 %v255
    %v397 = vpop.f32.mrb[0].mxu0
    %v398 = vadd.f32 0.0, %v397
    %v399 = vpop.f32.mrb[0].mxu0
    %400 = vdwg.mxu0
    %v401 = vadd.f32 %v176, %v398
    %v402 = vld [vmem:[%s0 + $0x1] sm:$0x7f]
    %v404 = vsel %vm32, %v402, 0
    %406 = vmatprep.subr.mxu0 0.0
    %407 = vmatpush1.msra.mxu0 %v327
    %408 = vmatprep.subr.mxu0 0.0
    %409 = vmatpush1.msra.mxu0 %v328
    %410 = vmatprep.subr.mxu0 0.0
    %411 = vmatpush1.msra.mxu0 %v329
    %412 = vmatprep.subr.mxu0 0.0
    %413 = vmatpush1.msra.mxu0 %v330
    %414 = vmatprep.subr.mxu0 0.0
    %415 = vmatpush1.msra.mxu0 0.0
    %416 = vmatprep.subr.mxu0 0.0
    %417 = vmatpush1.msra.mxu0 0.0
    %418 = vmatprep.subr.mxu0 0.0
    %419 = vmatpush1.msra.mxu0 0.0
    %420 = vmatprep.subr.mxu0 0.0
    %421 = vmatpush1.msra.mxu0 0.0
    %422 = vmatprep.subr.mxu0 0.0
    %423 = vmatpush1.msra.mxu0 0.0
    %424 = vmatprep.subr.mxu0 0.0
    %425 = vmatpush1.msra.mxu0 0.0
    %426 = vmatprep.subr.mxu0 0.0
    %427 = vmatpush1.msra.mxu0 0.0
    %428 = vmatprep.subr.mxu0 0.0
    %429 = vmatpush1.msra.mxu0 0.0
    %430 = vmatprep.subr.mxu0 0.0
    %431 = vmatpush1.msra.mxu0 0.0
    %432 = vmatprep.subr.mxu0 0.0
    %433 = vmatpush1.msra.mxu0 0.0
    %434 = vmatprep.subr.mxu0 0.0
    %435 = vmatpush1.msra.mxu0 0.0
    %436 = vmatprep.subr.mxu0 0.0
    %437 = vmatpush1.msra.mxu0 0.0
    %438 = vmatprep.subr.mxu0 0.0
    %439 = vmatpush1.msra.mxu0 0.0
    %440 = vmatprep.subr.mxu0 0.0
    %441 = vmatpush1.msra.mxu0 0.0
    %442 = vmatprep.subr.mxu0 0.0
    %443 = vmatpush1.msra.mxu0 0.0
    %444 = vmatprep.subr.mxu0 0.0
    %445 = vmatpush1.msra.mxu0 0.0
    %446 = vmatprep.subr.mxu0 0.0
    %447 = vmatpush1.msra.mxu0 0.0
    %448 = vmatprep.subr.mxu0 0.0
    %449 = vmatpush1.msra.mxu0 0.0
    %450 = vmatprep.subr.mxu0 0.0
    %451 = vmatpush1.msra.mxu0 0.0
    %452 = vmatprep.subr.mxu0 0.0
    %453 = vmatpush1.msra.mxu0 0.0
    %454 = vmatprep.subr.mxu0 0.0
    %455 = vmatpush1.msra.mxu0 0.0
    %456 = vmatprep.subr.mxu0 0.0
    %457 = vmatpush1.msra.mxu0 0.0
    %458 = vmatprep.subr.mxu0 0.0
    %459 = vmatpush1.msra.mxu0 0.0
    %460 = vmatprep.subr.mxu0 0.0
    %461 = vmatpush1.msra.mxu0 0.0
    %462 = vmatprep.subr.mxu0 0.0
    %463 = vmatpush1.msra.mxu0 0.0
    %464 = vmatprep.subr.mxu0 0.0
    %465 = vmatpush1.msra.mxu0 0.0
    %466 = vmatprep.subr.mxu0 0.0
    %467 = vmatpush1.msra.mxu0 0.0
    %468 = vmatprep.subr.mxu0 0.0
    %469 = vmatpush1.msra.mxu0 0.0
    %470 = vmatprep.mubr.f32.mxu0 0.0
    %471 = vmatmul.mubr.f32.gmra.mrb[0].mxu0 %v404
    %v472 = vpop.f32.mrb[0].mxu0
    %v473 = vadd.f32 0.0, %v472
    %v474 = vpop.f32.mrb[0].mxu0
    %475 = vdwg.mxu0
    %v476 = vadd.f32 %v324, %v473
    %v477 = vld [vmem:[%s1 + $0x60] sm:$0xff]
    %v478 = vld [vmem:[%s1 + $0x68] sm:$0xff]
    %v479 = vld [vmem:[%s1 + $0x70] sm:$0xff]
    %v480 = vld [vmem:[%s1 + $0x78] sm:$0xff]
    %481 = vmatprep.subr.mxu0 0.0
    %482 = vmatpush1.msra.mxu0 %v477
    %483 = vmatprep.subr.mxu0 0.0
    %484 = vmatpush1.msra.mxu0 %v478
    %485 = vmatprep.subr.mxu0 0.0
    %486 = vmatpush1.msra.mxu0 %v479
    %487 = vmatprep.subr.mxu0 0.0
    %488 = vmatpush1.msra.mxu0 %v480
    %489 = vmatprep.subr.mxu0 0.0
    %490 = vmatpush1.msra.mxu0 0.0
    %491 = vmatprep.subr.mxu0 0.0
    %492 = vmatpush1.msra.mxu0 0.0
    %493 = vmatprep.subr.mxu0 0.0
    %494 = vmatpush1.msra.mxu0 0.0
    %495 = vmatprep.subr.mxu0 0.0
    %496 = vmatpush1.msra.mxu0 0.0
    %497 = vmatprep.subr.mxu0 0.0
    %498 = vmatpush1.msra.mxu0 0.0
    %499 = vmatprep.subr.mxu0 0.0
    %500 = vmatpush1.msra.mxu0 0.0
    %501 = vmatprep.subr.mxu0 0.0
    %502 = vmatpush1.msra.mxu0 0.0
    %503 = vmatprep.subr.mxu0 0.0
    %504 = vmatpush1.msra.mxu0 0.0
    %505 = vmatprep.subr.mxu0 0.0
    %506 = vmatpush1.msra.mxu0 0.0
    %507 = vmatprep.subr.mxu0 0.0
    %508 = vmatpush1.msra.mxu0 0.0
    %509 = vmatprep.subr.mxu0 0.0
    %510 = vmatpush1.msra.mxu0 0.0
    %511 = vmatprep.subr.mxu0 0.0
    %512 = vmatpush1.msra.mxu0 0.0
    %513 = vmatprep.subr.mxu0 0.0
    %514 = vmatpush1.msra.mxu0 0.0
    %515 = vmatprep.subr.mxu0 0.0
    %516 = vmatpush1.msra.mxu0 0.0
    %517 = vmatprep.subr.mxu0 0.0
    %518 = vmatpush1.msra.mxu0 0.0
    %519 = vmatprep.subr.mxu0 0.0
    %520 = vmatpush1.msra.mxu0 0.0
    %521 = vmatprep.subr.mxu0 0.0
    %522 = vmatpush1.msra.mxu0 0.0
    %523 = vmatprep.subr.mxu0 0.0
    %524 = vmatpush1.msra.mxu0 0.0
    %525 = vmatprep.subr.mxu0 0.0
    %526 = vmatpush1.msra.mxu0 0.0
    %527 = vmatprep.subr.mxu0 0.0
    %528 = vmatpush1.msra.mxu0 0.0
    %529 = vmatprep.subr.mxu0 0.0
    %530 = vmatpush1.msra.mxu0 0.0
    %531 = vmatprep.subr.mxu0 0.0
    %532 = vmatpush1.msra.mxu0 0.0
    %533 = vmatprep.subr.mxu0 0.0
    %534 = vmatpush1.msra.mxu0 0.0
    %535 = vmatprep.subr.mxu0 0.0
    %536 = vmatpush1.msra.mxu0 0.0
    %537 = vmatprep.subr.mxu0 0.0
    %538 = vmatpush1.msra.mxu0 0.0
    %539 = vmatprep.subr.mxu0 0.0
    %540 = vmatpush1.msra.mxu0 0.0
    %541 = vmatprep.subr.mxu0 0.0
    %542 = vmatpush1.msra.mxu0 0.0
    %543 = vmatprep.subr.mxu0 0.0
    %544 = vmatpush1.msra.mxu0 0.0
    %545 = vmatprep.mubr.f32.mxu0 0.0
    %546 = vmatmul.mubr.f32.gmra.mrb[0].mxu0 %v182
    %v547 = vpop.f32.mrb[0].mxu0
    %v548 = vadd.f32 0.0, %v547
    %v549 = vpop.f32.mrb[0].mxu0
    %550 = vdwg.mxu0
    %v551 = vadd.f32 %v401, %v548
    %v552 = vld [vmem:[%s30 + $0x1] sm:$0x7f]
    %v554 = vsel %vm32, %v552, 0
    %556 = vmatprep.subr.mxu0 0.0
    %557 = vmatpush1.msra.mxu0 %v477
    %558 = vmatprep.subr.mxu0 0.0
    %559 = vmatpush1.msra.mxu0 %v478
    %560 = vmatprep.subr.mxu0 0.0
    %561 = vmatpush1.msra.mxu0 %v479
    %562 = vmatprep.subr.mxu0 0.0
    %563 = vmatpush1.msra.mxu0 %v480
    %564 = vmatprep.subr.mxu0 0.0
    %565 = vmatpush1.msra.mxu0 0.0
    %566 = vmatprep.subr.mxu0 0.0
    %567 = vmatpush1.msra.mxu0 0.0
    %568 = vmatprep.subr.mxu0 0.0
    %569 = vmatpush1.msra.mxu0 0.0
    %570 = vmatprep.subr.mxu0 0.0
    %571 = vmatpush1.msra.mxu0 0.0
    %572 = vmatprep.subr.mxu0 0.0
    %573 = vmatpush1.msra.mxu0 0.0
    %574 = vmatprep.subr.mxu0 0.0
    %575 = vmatpush1.msra.mxu0 0.0
    %576 = vmatprep.subr.mxu0 0.0
    %577 = vmatpush1.msra.mxu0 0.0
    %578 = vmatprep.subr.mxu0 0.0
    %579 = vmatpush1.msra.mxu0 0.0
    %580 = vmatprep.subr.mxu0 0.0
    %581 = vmatpush1.msra.mxu0 0.0
    %582 = vmatprep.subr.mxu0 0.0
    %583 = vmatpush1.msra.mxu0 0.0
    %584 = vmatprep.subr.mxu0 0.0
    %585 = vmatpush1.msra.mxu0 0.0
    %586 = vmatprep.subr.mxu0 0.0
    %587 = vmatpush1.msra.mxu0 0.0
    %588 = vmatprep.subr.mxu0 0.0
    %589 = vmatpush1.msra.mxu0 0.0
    %590 = vmatprep.subr.mxu0 0.0
    %591 = vmatpush1.msra.mxu0 0.0
    %592 = vmatprep.subr.mxu0 0.0
    %593 = vmatpush1.msra.mxu0 0.0
    %594 = vmatprep.subr.mxu0 0.0
    %595 = vmatpush1.msra.mxu0 0.0
    %596 = vmatprep.subr.mxu0 0.0
    %597 = vmatpush1.msra.mxu0 0.0
    %598 = vmatprep.subr.mxu0 0.0
    %599 = vmatpush1.msra.mxu0 0.0
    %600 = vmatprep.subr.mxu0 0.0
    %601 = vmatpush1.msra.mxu0 0.0
    %602 = vmatprep.subr.mxu0 0.0
    %603 = vmatpush1.msra.mxu0 0.0
    %604 = vmatprep.subr.mxu0 0.0
    %605 = vmatpush1.msra.mxu0 0.0
    %606 = vmatprep.subr.mxu0 0.0
    %607 = vmatpush1.msra.mxu0 0.0
    %608 = vmatprep.subr.mxu0 0.0
    %609 = vmatpush1.msra.mxu0 0.0
    %610 = vmatprep.subr.mxu0 0.0
    %611 = vmatpush1.msra.mxu0 0.0
    %612 = vmatprep.subr.mxu0 0.0
    %613 = vmatpush1.msra.mxu0 0.0
    %614 = vmatprep.subr.mxu0 0.0
    %615 = vmatpush1.msra.mxu0 0.0
    %616 = vmatprep.subr.mxu0 0.0
    %617 = vmatpush1.msra.mxu0 0.0
    %618 = vmatprep.subr.mxu0 0.0
    %619 = vmatpush1.msra.mxu0 0.0
    %620 = vmatprep.mubr.f32.mxu0 0.0
    %621 = vmatmul.mubr.f32.gmra.mrb[0].mxu0 %v554
    %v622 = vpop.f32.mrb[0].mxu0
    %v623 = vadd.f32 0.0, %v622
    %v624 = vpop.f32.mrb[0].mxu0
    %625 = vdwg.mxu0
    %v626 = vadd.f32 %v476, %v623
    %v627 = vld [vmem:[%s1 + $0x80] sm:$0xff]
    %v628 = vld [vmem:[%s1 + $0x88] sm:$0xff]
    %v629 = vld [vmem:[%s1 + $0x90] sm:$0xff]
    %v630 = vld [vmem:[%s1 + $0x98] sm:$0xff]
    %631 = vmatprep.subr.mxu0 0.0
    %632 = vmatpush1.msra.mxu0 %v627
    %633 = vmatprep.subr.mxu0 0.0
    %634 = vmatpush1.msra.mxu0 %v628
    %635 = vmatprep.subr.mxu0 0.0
    %636 = vmatpush1.msra.mxu0 %v629
    %637 = vmatprep.subr.mxu0 0.0
    %638 = vmatpush1.msra.mxu0 %v630
    %639 = vmatprep.subr.mxu0 0.0
    %640 = vmatpush1.msra.mxu0 0.0
    %641 = vmatprep.subr.mxu0 0.0
    %642 = vmatpush1.msra.mxu0 0.0
    %643 = vmatprep.subr.mxu0 0.0
    %644 = vmatpush1.msra.mxu0 0.0
    %645 = vmatprep.subr.mxu0 0.0
    %646 = vmatpush1.msra.mxu0 0.0
    %647 = vmatprep.subr.mxu0 0.0
    %648 = vmatpush1.msra.mxu0 0.0
    %649 = vmatprep.subr.mxu0 0.0
    %650 = vmatpush1.msra.mxu0 0.0
    %651 = vmatprep.subr.mxu0 0.0
    %652 = vmatpush1.msra.mxu0 0.0
    %653 = vmatprep.subr.mxu0 0.0
    %654 = vmatpush1.msra.mxu0 0.0
    %655 = vmatprep.subr.mxu0 0.0
    %656 = vmatpush1.msra.mxu0 0.0
    %657 = vmatprep.subr.mxu0 0.0
    %658 = vmatpush1.msra.mxu0 0.0
    %659 = vmatprep.subr.mxu0 0.0
    %660 = vmatpush1.msra.mxu0 0.0
    %661 = vmatprep.subr.mxu0 0.0
    %662 = vmatpush1.msra.mxu0 0.0
    %663 = vmatprep.subr.mxu0 0.0
    %664 = vmatpush1.msra.mxu0 0.0
    %665 = vmatprep.subr.mxu0 0.0
    %666 = vmatpush1.msra.mxu0 0.0
    %667 = vmatprep.subr.mxu0 0.0
    %668 = vmatpush1.msra.mxu0 0.0
    %669 = vmatprep.subr.mxu0 0.0
    %670 = vmatpush1.msra.mxu0 0.0
    %671 = vmatprep.subr.mxu0 0.0
    %672 = vmatpush1.msra.mxu0 0.0
    %673 = vmatprep.subr.mxu0 0.0
    %674 = vmatpush1.msra.mxu0 0.0
    %675 = vmatprep.subr.mxu0 0.0
    %676 = vmatpush1.msra.mxu0 0.0
    %677 = vmatprep.subr.mxu0 0.0
    %678 = vmatpush1.msra.mxu0 0.0
    %679 = vmatprep.subr.mxu0 0.0
    %680 = vmatpush1.msra.mxu0 0.0
    %681 = vmatprep.subr.mxu0 0.0
    %682 = vmatpush1.msra.mxu0 0.0
    %683 = vmatprep.subr.mxu0 0.0
    %684 = vmatpush1.msra.mxu0 0.0
    %685 = vmatprep.subr.mxu0 0.0
    %686 = vmatpush1.msra.mxu0 0.0
    %687 = vmatprep.subr.mxu0 0.0
    %688 = vmatpush1.msra.mxu0 0.0
    %689 = vmatprep.subr.mxu0 0.0
    %690 = vmatpush1.msra.mxu0 0.0
    %691 = vmatprep.subr.mxu0 0.0
    %692 = vmatpush1.msra.mxu0 0.0
    %693 = vmatprep.subr.mxu0 0.0
    %694 = vmatpush1.msra.mxu0 0.0
    %695 = vmatprep.mubr.f32.mxu0 0.0
    %696 = vmatmul.mubr.f32.gmra.mrb[0].mxu0 %v404
    %v697 = vpop.f32.mrb[0].mxu0
    %v698 = vadd.f32 0.0, %v697
    %v699 = vpop.f32.mrb[0].mxu0
    %700 = vdwg.mxu0
    %v701 = vadd.f32 %v551, %v698
    %v702 = vld [vmem:[%s24 + $0x1] sm:$0x7f]
    %v704 = vsel %vm32, %v702, 0
    %706 = vmatprep.subr.mxu0 0.0
    %707 = vmatpush1.msra.mxu0 %v627
    %708 = vmatprep.subr.mxu0 0.0
    %709 = vmatpush1.msra.mxu0 %v628
    %710 = vmatprep.subr.mxu0 0.0
    %711 = vmatpush1.msra.mxu0 %v629
    %712 = vmatprep.subr.mxu0 0.0
    %713 = vmatpush1.msra.mxu0 %v630
    %714 = vmatprep.subr.mxu0 0.0
    %715 = vmatpush1.msra.mxu0 0.0
    %716 = vmatprep.subr.mxu0 0.0
    %717 = vmatpush1.msra.mxu0 0.0
    %718 = vmatprep.subr.mxu0 0.0
    %719 = vmatpush1.msra.mxu0 0.0
    %720 = vmatprep.subr.mxu0 0.0
    %721 = vmatpush1.msra.mxu0 0.0
    %722 = vmatprep.subr.mxu0 0.0
    %723 = vmatpush1.msra.mxu0 0.0
    %724 = vmatprep.subr.mxu0 0.0
    %725 = vmatpush1.msra.mxu0 0.0
    %726 = vmatprep.subr.mxu0 0.0
    %727 = vmatpush1.msra.mxu0 0.0
    %728 = vmatprep.subr.mxu0 0.0
    %729 = vmatpush1.msra.mxu0 0.0
    %730 = vmatprep.subr.mxu0 0.0
    %731 = vmatpush1.msra.mxu0 0.0
    %732 = vmatprep.subr.mxu0 0.0
    %733 = vmatpush1.msra.mxu0 0.0
    %734 = vmatprep.subr.mxu0 0.0
    %735 = vmatpush1.msra.mxu0 0.0
    %736 = vmatprep.subr.mxu0 0.0
    %737 = vmatpush1.msra.mxu0 0.0
    %738 = vmatprep.subr.mxu0 0.0
    %739 = vmatpush1.msra.mxu0 0.0
    %740 = vmatprep.subr.mxu0 0.0
    %741 = vmatpush1.msra.mxu0 0.0
    %742 = vmatprep.subr.mxu0 0.0
    %743 = vmatpush1.msra.mxu0 0.0
    %744 = vmatprep.subr.mxu0 0.0
    %745 = vmatpush1.msra.mxu0 0.0
    %746 = vmatprep.subr.mxu0 0.0
    %747 = vmatpush1.msra.mxu0 0.0
    %748 = vmatprep.subr.mxu0 0.0
    %749 = vmatpush1.msra.mxu0 0.0
    %750 = vmatprep.subr.mxu0 0.0
    %751 = vmatpush1.msra.mxu0 0.0
    %752 = vmatprep.subr.mxu0 0.0
    %753 = vmatpush1.msra.mxu0 0.0
    %754 = vmatprep.subr.mxu0 0.0
    %755 = vmatpush1.msra.mxu0 0.0
    %756 = vmatprep.subr.mxu0 0.0
    %757 = vmatpush1.msra.mxu0 0.0
    %758 = vmatprep.subr.mxu0 0.0
    %759 = vmatpush1.msra.mxu0 0.0
    %760 = vmatprep.subr.mxu0 0.0
    %761 = vmatpush1.msra.mxu0 0.0
    %762 = vmatprep.subr.mxu0 0.0
    %763 = vmatpush1.msra.mxu0 0.0
    %764 = vmatprep.subr.mxu0 0.0
    %765 = vmatpush1.msra.mxu0 0.0
    %766 = vmatprep.subr.mxu0 0.0
    %767 = vmatpush1.msra.mxu0 0.0
    %768 = vmatprep.subr.mxu0 0.0
    %769 = vmatpush1.msra.mxu0 0.0
    %770 = vmatprep.mubr.f32.mxu0 0.0
    %771 = vmatmul.mubr.f32.gmra.mrb[0].mxu0 %v704
    %v772 = vpop.f32.mrb[0].mxu0
    %v773 = vadd.f32 0.0, %v772
    %v774 = vpop.f32.mrb[0].mxu0
    %775 = vdwg.mxu0
    %v776 = vadd.f32 %v626, %v773
    %v777 = vld [vmem:[%s1 + $0xa0] sm:$0xff]
    %v778 = vld [vmem:[%s1 + $0xa8] sm:$0xff]
    %v779 = vld [vmem:[%s1 + $0xb0] sm:$0xff]
    %v780 = vld [vmem:[%s1 + $0xb8] sm:$0xff]
    %781 = vmatprep.subr.mxu0 0.0
    %782 = vmatpush1.msra.mxu0 %v777
    %783 = vmatprep.subr.mxu0 0.0
    %784 = vmatpush1.msra.mxu0 %v778
    %785 = vmatprep.subr.mxu0 0.0
    %786 = vmatpush1.msra.mxu0 %v779
    %787 = vmatprep.subr.mxu0 0.0
    %788 = vmatpush1.msra.mxu0 %v780
    %789 = vmatprep.subr.mxu0 0.0
    %790 = vmatpush1.msra.mxu0 0.0
    %791 = vmatprep.subr.mxu0 0.0
    %792 = vmatpush1.msra.mxu0 0.0
    %793 = vmatprep.subr.mxu0 0.0
    %794 = vmatpush1.msra.mxu0 0.0
    %795 = vmatprep.subr.mxu0 0.0
    %796 = vmatpush1.msra.mxu0 0.0
    %797 = vmatprep.subr.mxu0 0.0
    %798 = vmatpush1.msra.mxu0 0.0
    %799 = vmatprep.subr.mxu0 0.0
    %800 = vmatpush1.msra.mxu0 0.0
    %801 = vmatprep.subr.mxu0 0.0
    %802 = vmatpush1.msra.mxu0 0.0
    %803 = vmatprep.subr.mxu0 0.0
    %804 = vmatpush1.msra.mxu0 0.0
    %805 = vmatprep.subr.mxu0 0.0
    %806 = vmatpush1.msra.mxu0 0.0
    %807 = vmatprep.subr.mxu0 0.0
    %808 = vmatpush1.msra.mxu0 0.0
    %809 = vmatprep.subr.mxu0 0.0
    %810 = vmatpush1.msra.mxu0 0.0
    %811 = vmatprep.subr.mxu0 0.0
    %812 = vmatpush1.msra.mxu0 0.0
    %813 = vmatprep.subr.mxu0 0.0
    %814 = vmatpush1.msra.mxu0 0.0
    %815 = vmatprep.subr.mxu0 0.0
    %816 = vmatpush1.msra.mxu0 0.0
    %817 = vmatprep.subr.mxu0 0.0
    %818 = vmatpush1.msra.mxu0 0.0
    %819 = vmatprep.subr.mxu0 0.0
    %820 = vmatpush1.msra.mxu0 0.0
    %821 = vmatprep.subr.mxu0 0.0
    %822 = vmatpush1.msra.mxu0 0.0
    %823 = vmatprep.subr.mxu0 0.0
    %824 = vmatpush1.msra.mxu0 0.0
    %825 = vmatprep.subr.mxu0 0.0
    %826 = vmatpush1.msra.mxu0 0.0
    %827 = vmatprep.subr.mxu0 0.0
    %828 = vmatpush1.msra.mxu0 0.0
    %829 = vmatprep.subr.mxu0 0.0
    %830 = vmatpush1.msra.mxu0 0.0
    %831 = vmatprep.subr.mxu0 0.0
    %832 = vmatpush1.msra.mxu0 0.0
    %833 = vmatprep.subr.mxu0 0.0
    %834 = vmatpush1.msra.mxu0 0.0
    %835 = vmatprep.subr.mxu0 0.0
    %836 = vmatpush1.msra.mxu0 0.0
    %837 = vmatprep.subr.mxu0 0.0
    %838 = vmatpush1.msra.mxu0 0.0
    %839 = vmatprep.subr.mxu0 0.0
    %840 = vmatpush1.msra.mxu0 0.0
    %841 = vmatprep.subr.mxu0 0.0
    %842 = vmatpush1.msra.mxu0 0.0
    %843 = vmatprep.subr.mxu0 0.0
    %844 = vmatpush1.msra.mxu0 0.0
    %845 = vmatprep.mubr.f32.mxu0 0.0
    %846 = vmatmul.mubr.f32.gmra.mrb[0].mxu0 %v554
    %v847 = vpop.f32.mrb[0].mxu0
    %v848 = vadd.f32 0.0, %v847
    %v849 = vpop.f32.mrb[0].mxu0
    %850 = vdwg.mxu0
    %v851 = vadd.f32 %v701, %v848
    %v852 = vld [vmem:[%s179 + $0x1] sm:$0x7f]
    %v854 = vsel %vm32, %v852, 0
    %856 = vmatprep.subr.mxu0 0.0
    %857 = vmatpush1.msra.mxu0 %v777
    %858 = vmatprep.subr.mxu0 0.0
    %859 = vmatpush1.msra.mxu0 %v778
    %860 = vmatprep.subr.mxu0 0.0
    %861 = vmatpush1.msra.mxu0 %v779
    %862 = vmatprep.subr.mxu0 0.0
    %863 = vmatpush1.msra.mxu0 %v780
    %864 = vmatprep.subr.mxu0 0.0
    %865 = vmatpush1.msra.mxu0 0.0
    %866 = vmatprep.subr.mxu0 0.0
    %867 = vmatpush1.msra.mxu0 0.0
    %868 = vmatprep.subr.mxu0 0.0
    %869 = vmatpush1.msra.mxu0 0.0
    %870 = vmatprep.subr.mxu0 0.0
    %871 = vmatpush1.msra.mxu0 0.0
    %872 = vmatprep.subr.mxu0 0.0
    %873 = vmatpush1.msra.mxu0 0.0
    %874 = vmatprep.subr.mxu0 0.0
    %875 = vmatpush1.msra.mxu0 0.0
    %876 = vmatprep.subr.mxu0 0.0
    %877 = vmatpush1.msra.mxu0 0.0
    %878 = vmatprep.subr.mxu0 0.0
    %879 = vmatpush1.msra.mxu0 0.0
    %880 = vmatprep.subr.mxu0 0.0
    %881 = vmatpush1.msra.mxu0 0.0
    %882 = vmatprep.subr.mxu0 0.0
    %883 = vmatpush1.msra.mxu0 0.0
    %884 = vmatprep.subr.mxu0 0.0
    %885 = vmatpush1.msra.mxu0 0.0
    %886 = vmatprep.subr.mxu0 0.0
    %887 = vmatpush1.msra.mxu0 0.0
    %888 = vmatprep.subr.mxu0 0.0
    %889 = vmatpush1.msra.mxu0 0.0
    %890 = vmatprep.subr.mxu0 0.0
    %891 = vmatpush1.msra.mxu0 0.0
    %892 = vmatprep.subr.mxu0 0.0
    %893 = vmatpush1.msra.mxu0 0.0
    %894 = vmatprep.subr.mxu0 0.0
    %895 = vmatpush1.msra.mxu0 0.0
    %896 = vmatprep.subr.mxu0 0.0
    %897 = vmatpush1.msra.mxu0 0.0
    %898 = vmatprep.subr.mxu0 0.0
    %899 = vmatpush1.msra.mxu0 0.0
    %900 = vmatprep.subr.mxu0 0.0
    %901 = vmatpush1.msra.mxu0 0.0
    %902 = vmatprep.subr.mxu0 0.0
    %903 = vmatpush1.msra.mxu0 0.0
    %904 = vmatprep.subr.mxu0 0.0
    %905 = vmatpush1.msra.mxu0 0.0
    %906 = vmatprep.subr.mxu0 0.0
    %907 = vmatpush1.msra.mxu0 0.0
    %908 = vmatprep.subr.mxu0 0.0
    %909 = vmatpush1.msra.mxu0 0.0
    %910 = vmatprep.subr.mxu0 0.0
    %911 = vmatpush1.msra.mxu0 0.0
    %912 = vmatprep.subr.mxu0 0.0
    %913 = vmatpush1.msra.mxu0 0.0
    %914 = vmatprep.subr.mxu0 0.0
    %915 = vmatpush1.msra.mxu0 0.0
    %916 = vmatprep.subr.mxu0 0.0
    %917 = vmatpush1.msra.mxu0 0.0
    %918 = vmatprep.subr.mxu0 0.0
    %919 = vmatpush1.msra.mxu0 0.0
    %920 = vmatprep.mubr.f32.mxu0 0.0
    %921 = vmatmul.mubr.f32.gmra.mrb[0].mxu0 %v854
    %v922 = vpop.f32.mrb[0].mxu0
    %v923 = vadd.f32 0.0, %v922
    %v924 = vpop.f32.mrb[0].mxu0
    %925 = vdwg.mxu0
    %v926 = vadd.f32 %v776, %v923
    %v927 = vlaneseq
    %v928 = vshrl.u32 %v927, 7
    %v929 = vsub.s32 0, %v928
    %v930 = vrot.slane %v18, %v929
    %v931 = vadd.f32 %v851, %v930
    %v932 = vadd.f32 %v926, %v930
    %vm933 = vcmask 686080
    %v934 = vsel %vm933, %v931, 0.0
    %v935 = vrot.slane %v934, 4
    %v936 = vadd.f32 %v934, %v935
    %v937 = vrot.slane %v936, 2
    %v938 = vadd.f32 %v936, %v937
    %v939 = vrot.slane %v938, 1
    %v940 = vadd.f32 %v938, %v939
    %v941 = vadd.f32 %v940, 0.0
    %v942 = vsel %vm933, %v932, 0.0
    %v943 = vrot.slane %v942, 4
    %v944 = vadd.f32 %v942, %v943
    %v945 = vrot.slane %v944, 2
    %v946 = vadd.f32 %v944, %v945
    %v947 = vrot.slane %v946, 1
    %v948 = vadd.f32 %v946, %v947
    %v949 = vadd.f32 %v941, %v948
    %v950 = vmul.f32 %v931, %v931
    %v951 = vsel %vm933, %v950, 0.0
    %v952 = vrot.slane %v951, 4
    %v953 = vadd.f32 %v951, %v952
    %v954 = vrot.slane %v953, 2
    %v955 = vadd.f32 %v953, %v954
    %v956 = vrot.slane %v955, 1
    %v957 = vadd.f32 %v955, %v956
    %v958 = vadd.f32 %v957, 0.0
    %v959 = vmul.f32 %v932, %v932
    %v960 = vsel %vm933, %v959, 0.0
    %v961 = vrot.slane %v960, 4
    %v962 = vadd.f32 %v960, %v961
    %v963 = vrot.slane %v962, 2
    %v964 = vadd.f32 %v962, %v963
    %v965 = vrot.slane %v964, 1
    %v966 = vadd.f32 %v964, %v965
    %v967 = vadd.f32 %v958, %v966
    %s968 = scalar_lea.vmem %s0, 32
    %v969 = vld [vmem:[%s968] sm:$0x7f]
    %s970 = scalar_lea.vmem %s0, 48
    %v971 = vld [vmem:[%s970] sm:$0x7f]
    %s972 = scalar_lea.vmem %s0, 40
    %v973 = vld [vmem:[%s972] sm:$0x7f]
    %v975 = vsel %vm32, %v973, 0
    %977 = vmatprep.subr.mxu0 0.0
    %978 = vmatpush1.msra.mxu0 %v26
    %979 = vmatprep.subr.mxu0 0.0
    %980 = vmatpush1.msra.mxu0 %v27
    %981 = vmatprep.subr.mxu0 0.0
    %982 = vmatpush1.msra.mxu0 %v28
    %983 = vmatprep.subr.mxu0 0.0
    %984 = vmatpush1.msra.mxu0 %v29
    %985 = vmatprep.subr.mxu0 0.0
    %986 = vmatpush1.msra.mxu0 0.0
    %987 = vmatprep.subr.mxu0 0.0
    %988 = vmatpush1.msra.mxu0 0.0
    %989 = vmatprep.subr.mxu0 0.0
    %990 = vmatpush1.msra.mxu0 0.0
    %991 = vmatprep.subr.mxu0 0.0
    %992 = vmatpush1.msra.mxu0 0.0
    %993 = vmatprep.subr.mxu0 0.0
    %994 = vmatpush1.msra.mxu0 0.0
    %995 = vmatprep.subr.mxu0 0.0
    %996 = vmatpush1.msra.mxu0 0.0
    %997 = vmatprep.subr.mxu0 0.0
    %998 = vmatpush1.msra.mxu0 0.0
    %999 = vmatprep.subr.mxu0 0.0
    %1000 = vmatpush1.msra.mxu0 0.0
    %1001 = vmatprep.subr.mxu0 0.0
    %1002 = vmatpush1.msra.mxu0 0.0
    %1003 = vmatprep.subr.mxu0 0.0
    %1004 = vmatpush1.msra.mxu0 0.0
    %1005 = vmatprep.subr.mxu0 0.0
    %1006 = vmatpush1.msra.mxu0 0.0
    %1007 = vmatprep.subr.mxu0 0.0
    %1008 = vmatpush1.msra.mxu0 0.0
    %1009 = vmatprep.subr.mxu0 0.0
    %1010 = vmatpush1.msra.mxu0 0.0
    %1011 = vmatprep.subr.mxu0 0.0
    %1012 = vmatpush1.msra.mxu0 0.0
    %1013 = vmatprep.subr.mxu0 0.0
    %1014 = vmatpush1.msra.mxu0 0.0
    %1015 = vmatprep.subr.mxu0 0.0
    %1016 = vmatpush1.msra.mxu0 0.0
    %1017 = vmatprep.subr.mxu0 0.0
    %1018 = vmatpush1.msra.mxu0 0.0
    %1019 = vmatprep.subr.mxu0 0.0
    %1020 = vmatpush1.msra.mxu0 0.0
    %1021 = vmatprep.subr.mxu0 0.0
    %1022 = vmatpush1.msra.mxu0 0.0
    %1023 = vmatprep.subr.mxu0 0.0
    %1024 = vmatpush1.msra.mxu0 0.0
    %1025 = vmatprep.subr.mxu0 0.0
    %1026 = vmatpush1.msra.mxu0 0.0
    %1027 = vmatprep.subr.mxu0 0.0
    %1028 = vmatpush1.msra.mxu0 0.0
    %1029 = vmatprep.subr.mxu0 0.0
    %1030 = vmatpush1.msra.mxu0 0.0
    %1031 = vmatprep.subr.mxu0 0.0
    %1032 = vmatpush1.msra.mxu0 0.0
    %1033 = vmatprep.subr.mxu0 0.0
    %1034 = vmatpush1.msra.mxu0 0.0
    %1035 = vmatprep.subr.mxu0 0.0
    %1036 = vmatpush1.msra.mxu0 0.0
    %1037 = vmatprep.subr.mxu0 0.0
    %1038 = vmatpush1.msra.mxu0 0.0
    %1039 = vmatprep.subr.mxu0 0.0
    %1040 = vmatpush1.msra.mxu0 0.0
    %1041 = vmatprep.mubr.f32.mxu0 0.0
    %1042 = vmatmul.mubr.f32.gmra.mrb[0].mxu0 %v975
    %v1043 = vpop.f32.mrb[0].mxu0
    %v1044 = vadd.f32 0.0, %v1043
    %v1045 = vpop.f32.mrb[0].mxu0
    %1046 = vdwg.mxu0
    %v1048 = vsel %vm32, %v969, 0
    %1050 = vmatprep.subr.mxu0 0.0
    %1051 = vmatpush1.msra.mxu0 %v19
    %1052 = vmatprep.subr.mxu0 0.0
    %1053 = vmatpush1.msra.mxu0 %v20
    %1054 = vmatprep.subr.mxu0 0.0
    %1055 = vmatpush1.msra.mxu0 %v21
    %1056 = vmatprep.subr.mxu0 0.0
    %1057 = vmatpush1.msra.mxu0 %v22
    %1058 = vmatprep.subr.mxu0 0.0
    %1059 = vmatpush1.msra.mxu0 0.0
    %1060 = vmatprep.subr.mxu0 0.0
    %1061 = vmatpush1.msra.mxu0 0.0
    %1062 = vmatprep.subr.mxu0 0.0
    %1063 = vmatpush1.msra.mxu0 0.0
    %1064 = vmatprep.subr.mxu0 0.0
    %1065 = vmatpush1.msra.mxu0 0.0
    %1066 = vmatprep.subr.mxu0 0.0
    %1067 = vmatpush1.msra.mxu0 0.0
    %1068 = vmatprep.subr.mxu0 0.0
    %1069 = vmatpush1.msra.mxu0 0.0
    %1070 = vmatprep.subr.mxu0 0.0
    %1071 = vmatpush1.msra.mxu0 0.0
    %1072 = vmatprep.subr.mxu0 0.0
    %1073 = vmatpush1.msra.mxu0 0.0
    %1074 = vmatprep.subr.mxu0 0.0
    %1075 = vmatpush1.msra.mxu0 0.0
    %1076 = vmatprep.subr.mxu0 0.0
    %1077 = vmatpush1.msra.mxu0 0.0
    %1078 = vmatprep.subr.mxu0 0.0
    %1079 = vmatpush1.msra.mxu0 0.0
    %1080 = vmatprep.subr.mxu0 0.0
    %1081 = vmatpush1.msra.mxu0 0.0
    %1082 = vmatprep.subr.mxu0 0.0
    %1083 = vmatpush1.msra.mxu0 0.0
    %1084 = vmatprep.subr.mxu0 0.0
    %1085 = vmatpush1.msra.mxu0 0.0
    %1086 = vmatprep.subr.mxu0 0.0
    %1087 = vmatpush1.msra.mxu0 0.0
    %1088 = vmatprep.subr.mxu0 0.0
    %1089 = vmatpush1.msra.mxu0 0.0
    %1090 = vmatprep.subr.mxu0 0.0
    %1091 = vmatpush1.msra.mxu0 0.0
    %1092 = vmatprep.subr.mxu0 0.0
    %1093 = vmatpush1.msra.mxu0 0.0
    %1094 = vmatprep.subr.mxu0 0.0
    %1095 = vmatpush1.msra.mxu0 0.0
    %1096 = vmatprep.subr.mxu0 0.0
    %1097 = vmatpush1.msra.mxu0 0.0
    %1098 = vmatprep.subr.mxu0 0.0
    %1099 = vmatpush1.msra.mxu0 0.0
    %1100 = vmatprep.subr.mxu0 0.0
    %1101 = vmatpush1.msra.mxu0 0.0
    %1102 = vmatprep.subr.mxu0 0.0
    %1103 = vmatpush1.msra.mxu0 0.0
    %1104 = vmatprep.subr.mxu0 0.0
    %1105 = vmatpush1.msra.mxu0 0.0
    %1106 = vmatprep.subr.mxu0 0.0
    %1107 = vmatpush1.msra.mxu0 0.0
    %1108 = vmatprep.subr.mxu0 0.0
    %1109 = vmatpush1.msra.mxu0 0.0
    %1110 = vmatprep.subr.mxu0 0.0
    %1111 = vmatpush1.msra.mxu0 0.0
    %1112 = vmatprep.subr.mxu0 0.0
    %1113 = vmatpush1.msra.mxu0 0.0
    %1114 = vmatprep.mubr.f32.mxu0 0.0
    %1115 = vmatmul.mubr.f32.gmra.mrb[0].mxu0 %v1048
    %v1116 = vpop.f32.mrb[0].mxu0
    %v1117 = vadd.f32 %v1044, %v1116
    %v1118 = vpop.f32.mrb[0].mxu0
    %1119 = vdwg.mxu0
    %s1120 = scalar_lea.vmem %s0, 56
    %v1121 = vld [vmem:[%s1120] sm:$0x7f]
    %v1123 = vsel %vm32, %v1121, 0
    %1125 = vmatprep.subr.mxu0 0.0
    %1126 = vmatpush1.msra.mxu0 %v26
    %1127 = vmatprep.subr.mxu0 0.0
    %1128 = vmatpush1.msra.mxu0 %v27
    %1129 = vmatprep.subr.mxu0 0.0
    %1130 = vmatpush1.msra.mxu0 %v28
    %1131 = vmatprep.subr.mxu0 0.0
    %1132 = vmatpush1.msra.mxu0 %v29
    %1133 = vmatprep.subr.mxu0 0.0
    %1134 = vmatpush1.msra.mxu0 0.0
    %1135 = vmatprep.subr.mxu0 0.0
    %1136 = vmatpush1.msra.mxu0 0.0
    %1137 = vmatprep.subr.mxu0 0.0
    %1138 = vmatpush1.msra.mxu0 0.0
    %1139 = vmatprep.subr.mxu0 0.0
    %1140 = vmatpush1.msra.mxu0 0.0
    %1141 = vmatprep.subr.mxu0 0.0
    %1142 = vmatpush1.msra.mxu0 0.0
    %1143 = vmatprep.subr.mxu0 0.0
    %1144 = vmatpush1.msra.mxu0 0.0
    %1145 = vmatprep.subr.mxu0 0.0
    %1146 = vmatpush1.msra.mxu0 0.0
    %1147 = vmatprep.subr.mxu0 0.0
    %1148 = vmatpush1.msra.mxu0 0.0
    %1149 = vmatprep.subr.mxu0 0.0
    %1150 = vmatpush1.msra.mxu0 0.0
    %1151 = vmatprep.subr.mxu0 0.0
    %1152 = vmatpush1.msra.mxu0 0.0
    %1153 = vmatprep.subr.mxu0 0.0
    %1154 = vmatpush1.msra.mxu0 0.0
    %1155 = vmatprep.subr.mxu0 0.0
    %1156 = vmatpush1.msra.mxu0 0.0
    %1157 = vmatprep.subr.mxu0 0.0
    %1158 = vmatpush1.msra.mxu0 0.0
    %1159 = vmatprep.subr.mxu0 0.0
    %1160 = vmatpush1.msra.mxu0 0.0
    %1161 = vmatprep.subr.mxu0 0.0
    %1162 = vmatpush1.msra.mxu0 0.0
    %1163 = vmatprep.subr.mxu0 0.0
    %1164 = vmatpush1.msra.mxu0 0.0
    %1165 = vmatprep.subr.mxu0 0.0
    %1166 = vmatpush1.msra.mxu0 0.0
    %1167 = vmatprep.subr.mxu0 0.0
    %1168 = vmatpush1.msra.mxu0 0.0
    %1169 = vmatprep.subr.mxu0 0.0
    %1170 = vmatpush1.msra.mxu0 0.0
    %1171 = vmatprep.subr.mxu0 0.0
    %1172 = vmatpush1.msra.mxu0 0.0
    %1173 = vmatprep.subr.mxu0 0.0
    %1174 = vmatpush1.msra.mxu0 0.0
    %1175 = vmatprep.subr.mxu0 0.0
    %1176 = vmatpush1.msra.mxu0 0.0
    %1177 = vmatprep.subr.mxu0 0.0
    %1178 = vmatpush1.msra.mxu0 0.0
    %1179 = vmatprep.subr.mxu0 0.0
    %1180 = vmatpush1.msra.mxu0 0.0
    %1181 = vmatprep.subr.mxu0 0.0
    %1182 = vmatpush1.msra.mxu0 0.0
    %1183 = vmatprep.subr.mxu0 0.0
    %1184 = vmatpush1.msra.mxu0 0.0
    %1185 = vmatprep.subr.mxu0 0.0
    %1186 = vmatpush1.msra.mxu0 0.0
    %1187 = vmatprep.subr.mxu0 0.0
    %1188 = vmatpush1.msra.mxu0 0.0
    %1189 = vmatprep.mubr.f32.mxu0 0.0
    %1190 = vmatmul.mubr.f32.gmra.mrb[0].mxu0 %v1123
    %v1191 = vpop.f32.mrb[0].mxu0
    %v1192 = vadd.f32 0.0, %v1191
    %v1193 = vpop.f32.mrb[0].mxu0
    %1194 = vdwg.mxu0
    %v1196 = vsel %vm32, %v971, 0
    %1198 = vmatprep.subr.mxu0 0.0
    %1199 = vmatpush1.msra.mxu0 %v19
    %1200 = vmatprep.subr.mxu0 0.0
    %1201 = vmatpush1.msra.mxu0 %v20
    %1202 = vmatprep.subr.mxu0 0.0
    %1203 = vmatpush1.msra.mxu0 %v21
    %1204 = vmatprep.subr.mxu0 0.0
    %1205 = vmatpush1.msra.mxu0 %v22
    %1206 = vmatprep.subr.mxu0 0.0
    %1207 = vmatpush1.msra.mxu0 0.0
    %1208 = vmatprep.subr.mxu0 0.0
    %1209 = vmatpush1.msra.mxu0 0.0
    %1210 = vmatprep.subr.mxu0 0.0
    %1211 = vmatpush1.msra.mxu0 0.0
    %1212 = vmatprep.subr.mxu0 0.0
    %1213 = vmatpush1.msra.mxu0 0.0
    %1214 = vmatprep.subr.mxu0 0.0
    %1215 = vmatpush1.msra.mxu0 0.0
    %1216 = vmatprep.subr.mxu0 0.0
    %1217 = vmatpush1.msra.mxu0 0.0
    %1218 = vmatprep.subr.mxu0 0.0
    %1219 = vmatpush1.msra.mxu0 0.0
    %1220 = vmatprep.subr.mxu0 0.0
    %1221 = vmatpush1.msra.mxu0 0.0
    %1222 = vmatprep.subr.mxu0 0.0
    %1223 = vmatpush1.msra.mxu0 0.0
    %1224 = vmatprep.subr.mxu0 0.0
    %1225 = vmatpush1.msra.mxu0 0.0
    %1226 = vmatprep.subr.mxu0 0.0
    %1227 = vmatpush1.msra.mxu0 0.0
    %1228 = vmatprep.subr.mxu0 0.0
    %1229 = vmatpush1.msra.mxu0 0.0
    %1230 = vmatprep.subr.mxu0 0.0
    %1231 = vmatpush1.msra.mxu0 0.0
    %1232 = vmatprep.subr.mxu0 0.0
    %1233 = vmatpush1.msra.mxu0 0.0
    %1234 = vmatprep.subr.mxu0 0.0
    %1235 = vmatpush1.msra.mxu0 0.0
    %1236 = vmatprep.subr.mxu0 0.0
    %1237 = vmatpush1.msra.mxu0 0.0
    %1238 = vmatprep.subr.mxu0 0.0
    %1239 = vmatpush1.msra.mxu0 0.0
    %1240 = vmatprep.subr.mxu0 0.0
    %1241 = vmatpush1.msra.mxu0 0.0
    %1242 = vmatprep.subr.mxu0 0.0
    %1243 = vmatpush1.msra.mxu0 0.0
    %1244 = vmatprep.subr.mxu0 0.0
    %1245 = vmatpush1.msra.mxu0 0.0
    %1246 = vmatprep.subr.mxu0 0.0
    %1247 = vmatpush1.msra.mxu0 0.0
    %1248 = vmatprep.subr.mxu0 0.0
    %1249 = vmatpush1.msra.mxu0 0.0
    %1250 = vmatprep.subr.mxu0 0.0
    %1251 = vmatpush1.msra.mxu0 0.0
    %1252 = vmatprep.subr.mxu0 0.0
    %1253 = vmatpush1.msra.mxu0 0.0
    %1254 = vmatprep.subr.mxu0 0.0
    %1255 = vmatpush1.msra.mxu0 0.0
    %1256 = vmatprep.subr.mxu0 0.0
    %1257 = vmatpush1.msra.mxu0 0.0
    %1258 = vmatprep.subr.mxu0 0.0
    %1259 = vmatpush1.msra.mxu0 0.0
    %1260 = vmatprep.subr.mxu0 0.0
    %1261 = vmatpush1.msra.mxu0 0.0
    %1262 = vmatprep.mubr.f32.mxu0 0.0
    %1263 = vmatmul.mubr.f32.gmra.mrb[0].mxu0 %v1196
    %v1264 = vpop.f32.mrb[0].mxu0
    %v1265 = vadd.f32 %v1192, %v1264
    %v1266 = vpop.f32.mrb[0].mxu0
    %1267 = vdwg.mxu0
    %1268 = vmatprep.subr.mxu0 0.0
    %1269 = vmatpush1.msra.mxu0 %v327
    %1270 = vmatprep.subr.mxu0 0.0
    %1271 = vmatpush1.msra.mxu0 %v328
    %1272 = vmatprep.subr.mxu0 0.0
    %1273 = vmatpush1.msra.mxu0 %v329
    %1274 = vmatprep.subr.mxu0 0.0
    %1275 = vmatpush1.msra.mxu0 %v330
    %1276 = vmatprep.subr.mxu0 0.0
    %1277 = vmatpush1.msra.mxu0 0.0
    %1278 = vmatprep.subr.mxu0 0.0
    %1279 = vmatpush1.msra.mxu0 0.0
    %1280 = vmatprep.subr.mxu0 0.0
    %1281 = vmatpush1.msra.mxu0 0.0
    %1282 = vmatprep.subr.mxu0 0.0
    %1283 = vmatpush1.msra.mxu0 0.0
    %1284 = vmatprep.subr.mxu0 0.0
    %1285 = vmatpush1.msra.mxu0 0.0
    %1286 = vmatprep.subr.mxu0 0.0
    %1287 = vmatpush1.msra.mxu0 0.0
    %1288 = vmatprep.subr.mxu0 0.0
    %1289 = vmatpush1.msra.mxu0 0.0
    %1290 = vmatprep.subr.mxu0 0.0
    %1291 = vmatpush1.msra.mxu0 0.0
    %1292 = vmatprep.subr.mxu0 0.0
    %1293 = vmatpush1.msra.mxu0 0.0
    %1294 = vmatprep.subr.mxu0 0.0
    %1295 = vmatpush1.msra.mxu0 0.0
    %1296 = vmatprep.subr.mxu0 0.0
    %1297 = vmatpush1.msra.mxu0 0.0
    %1298 = vmatprep.subr.mxu0 0.0
    %1299 = vmatpush1.msra.mxu0 0.0
    %1300 = vmatprep.subr.mxu0 0.0
    %1301 = vmatpush1.msra.mxu0 0.0
    %1302 = vmatprep.subr.mxu0 0.0
    %1303 = vmatpush1.msra.mxu0 0.0
    %1304 = vmatprep.subr.mxu0 0.0
    %1305 = vmatpush1.msra.mxu0 0.0
    %1306 = vmatprep.subr.mxu0 0.0
    %1307 = vmatpush1.msra.mxu0 0.0
    %1308 = vmatprep.subr.mxu0 0.0
    %1309 = vmatpush1.msra.mxu0 0.0
    %1310 = vmatprep.subr.mxu0 0.0
    %1311 = vmatpush1.msra.mxu0 0.0
    %1312 = vmatprep.subr.mxu0 0.0
    %1313 = vmatpush1.msra.mxu0 0.0
    %1314 = vmatprep.subr.mxu0 0.0
    %1315 = vmatpush1.msra.mxu0 0.0
    %1316 = vmatprep.subr.mxu0 0.0
    %1317 = vmatpush1.msra.mxu0 0.0
    %1318 = vmatprep.subr.mxu0 0.0
    %1319 = vmatpush1.msra.mxu0 0.0
    %1320 = vmatprep.subr.mxu0 0.0
    %1321 = vmatpush1.msra.mxu0 0.0
    %1322 = vmatprep.subr.mxu0 0.0
    %1323 = vmatpush1.msra.mxu0 0.0
    %1324 = vmatprep.subr.mxu0 0.0
    %1325 = vmatpush1.msra.mxu0 0.0
    %1326 = vmatprep.subr.mxu0 0.0
    %1327 = vmatpush1.msra.mxu0 0.0
    %1328 = vmatprep.subr.mxu0 0.0
    %1329 = vmatpush1.msra.mxu0 0.0
    %1330 = vmatprep.subr.mxu0 0.0
    %1331 = vmatpush1.msra.mxu0 0.0
    %1332 = vmatprep.mubr.f32.mxu0 0.0
    %1333 = vmatmul.mubr.f32.gmra.mrb[0].mxu0 %v1196
    %v1334 = vpop.f32.mrb[0].mxu0
    %v1335 = vadd.f32 0.0, %v1334
    %v1336 = vpop.f32.mrb[0].mxu0
    %1337 = vdwg.mxu0
    %v1338 = vadd.f32 %v1117, %v1335
    %v1339 = vld [vmem:[%s968 + $0x1] sm:$0x7f]
    %v1341 = vsel %vm32, %v1339, 0
    %1343 = vmatprep.subr.mxu0 0.0
    %1344 = vmatpush1.msra.mxu0 %v327
    %1345 = vmatprep.subr.mxu0 0.0
    %1346 = vmatpush1.msra.mxu0 %v328
    %1347 = vmatprep.subr.mxu0 0.0
    %1348 = vmatpush1.msra.mxu0 %v329
    %1349 = vmatprep.subr.mxu0 0.0
    %1350 = vmatpush1.msra.mxu0 %v330
    %1351 = vmatprep.subr.mxu0 0.0
    %1352 = vmatpush1.msra.mxu0 0.0
    %1353 = vmatprep.subr.mxu0 0.0
    %1354 = vmatpush1.msra.mxu0 0.0
    %1355 = vmatprep.subr.mxu0 0.0
    %1356 = vmatpush1.msra.mxu0 0.0
    %1357 = vmatprep.subr.mxu0 0.0
    %1358 = vmatpush1.msra.mxu0 0.0
    %1359 = vmatprep.subr.mxu0 0.0
    %1360 = vmatpush1.msra.mxu0 0.0
    %1361 = vmatprep.subr.mxu0 0.0
    %1362 = vmatpush1.msra.mxu0 0.0
    %1363 = vmatprep.subr.mxu0 0.0
    %1364 = vmatpush1.msra.mxu0 0.0
    %1365 = vmatprep.subr.mxu0 0.0
    %1366 = vmatpush1.msra.mxu0 0.0
    %1367 = vmatprep.subr.mxu0 0.0
    %1368 = vmatpush1.msra.mxu0 0.0
    %1369 = vmatprep.subr.mxu0 0.0
    %1370 = vmatpush1.msra.mxu0 0.0
    %1371 = vmatprep.subr.mxu0 0.0
    %1372 = vmatpush1.msra.mxu0 0.0
    %1373 = vmatprep.subr.mxu0 0.0
    %1374 = vmatpush1.msra.mxu0 0.0
    %1375 = vmatprep.subr.mxu0 0.0
    %1376 = vmatpush1.msra.mxu0 0.0
    %1377 = vmatprep.subr.mxu0 0.0
    %1378 = vmatpush1.msra.mxu0 0.0
    %1379 = vmatprep.subr.mxu0 0.0
    %1380 = vmatpush1.msra.mxu0 0.0
    %1381 = vmatprep.subr.mxu0 0.0
    %1382 = vmatpush1.msra.mxu0 0.0
    %1383 = vmatprep.subr.mxu0 0.0
    %1384 = vmatpush1.msra.mxu0 0.0
    %1385 = vmatprep.subr.mxu0 0.0
    %1386 = vmatpush1.msra.mxu0 0.0
    %1387 = vmatprep.subr.mxu0 0.0
    %1388 = vmatpush1.msra.mxu0 0.0
    %1389 = vmatprep.subr.mxu0 0.0
    %1390 = vmatpush1.msra.mxu0 0.0
    %1391 = vmatprep.subr.mxu0 0.0
    %1392 = vmatpush1.msra.mxu0 0.0
    %1393 = vmatprep.subr.mxu0 0.0
    %1394 = vmatpush1.msra.mxu0 0.0
    %1395 = vmatprep.subr.mxu0 0.0
    %1396 = vmatpush1.msra.mxu0 0.0
    %1397 = vmatprep.subr.mxu0 0.0
    %1398 = vmatpush1.msra.mxu0 0.0
    %1399 = vmatprep.subr.mxu0 0.0
    %1400 = vmatpush1.msra.mxu0 0.0
    %1401 = vmatprep.subr.mxu0 0.0
    %1402 = vmatpush1.msra.mxu0 0.0
    %1403 = vmatprep.subr.mxu0 0.0
    %1404 = vmatpush1.msra.mxu0 0.0
    %1405 = vmatprep.subr.mxu0 0.0
    %1406 = vmatpush1.msra.mxu0 0.0
    %1407 = vmatprep.mubr.f32.mxu0 0.0
    %1408 = vmatmul.mubr.f32.gmra.mrb[0].mxu0 %v1341
    %v1409 = vpop.f32.mrb[0].mxu0
    %v1410 = vadd.f32 0.0, %v1409
    %v1411 = vpop.f32.mrb[0].mxu0
    %1412 = vdwg.mxu0
    %v1413 = vadd.f32 %v1265, %v1410
    %1414 = vmatprep.subr.mxu0 0.0
    %1415 = vmatpush1.msra.mxu0 %v477
    %1416 = vmatprep.subr.mxu0 0.0
    %1417 = vmatpush1.msra.mxu0 %v478
    %1418 = vmatprep.subr.mxu0 0.0
    %1419 = vmatpush1.msra.mxu0 %v479
    %1420 = vmatprep.subr.mxu0 0.0
    %1421 = vmatpush1.msra.mxu0 %v480
    %1422 = vmatprep.subr.mxu0 0.0
    %1423 = vmatpush1.msra.mxu0 0.0
    %1424 = vmatprep.subr.mxu0 0.0
    %1425 = vmatpush1.msra.mxu0 0.0
    %1426 = vmatprep.subr.mxu0 0.0
    %1427 = vmatpush1.msra.mxu0 0.0
    %1428 = vmatprep.subr.mxu0 0.0
    %1429 = vmatpush1.msra.mxu0 0.0
    %1430 = vmatprep.subr.mxu0 0.0
    %1431 = vmatpush1.msra.mxu0 0.0
    %1432 = vmatprep.subr.mxu0 0.0
    %1433 = vmatpush1.msra.mxu0 0.0
    %1434 = vmatprep.subr.mxu0 0.0
    %1435 = vmatpush1.msra.mxu0 0.0
    %1436 = vmatprep.subr.mxu0 0.0
    %1437 = vmatpush1.msra.mxu0 0.0
    %1438 = vmatprep.subr.mxu0 0.0
    %1439 = vmatpush1.msra.mxu0 0.0
    %1440 = vmatprep.subr.mxu0 0.0
    %1441 = vmatpush1.msra.mxu0 0.0
    %1442 = vmatprep.subr.mxu0 0.0
    %1443 = vmatpush1.msra.mxu0 0.0
    %1444 = vmatprep.subr.mxu0 0.0
    %1445 = vmatpush1.msra.mxu0 0.0
    %1446 = vmatprep.subr.mxu0 0.0
    %1447 = vmatpush1.msra.mxu0 0.0
    %1448 = vmatprep.subr.mxu0 0.0
    %1449 = vmatpush1.msra.mxu0 0.0
    %1450 = vmatprep.subr.mxu0 0.0
    %1451 = vmatpush1.msra.mxu0 0.0
    %1452 = vmatprep.subr.mxu0 0.0
    %1453 = vmatpush1.msra.mxu0 0.0
    %1454 = vmatprep.subr.mxu0 0.0
    %1455 = vmatpush1.msra.mxu0 0.0
    %1456 = vmatprep.subr.mxu0 0.0
    %1457 = vmatpush1.msra.mxu0 0.0
    %1458 = vmatprep.subr.mxu0 0.0
    %1459 = vmatpush1.msra.mxu0 0.0
    %1460 = vmatprep.subr.mxu0 0.0
    %1461 = vmatpush1.msra.mxu0 0.0
    %1462 = vmatprep.subr.mxu0 0.0
    %1463 = vmatpush1.msra.mxu0 0.0
    %1464 = vmatprep.subr.mxu0 0.0
    %1465 = vmatpush1.msra.mxu0 0.0
    %1466 = vmatprep.subr.mxu0 0.0
    %1467 = vmatpush1.msra.mxu0 0.0
    %1468 = vmatprep.subr.mxu0 0.0
    %1469 = vmatpush1.msra.mxu0 0.0
    %1470 = vmatprep.subr.mxu0 0.0
    %1471 = vmatpush1.msra.mxu0 0.0
    %1472 = vmatprep.subr.mxu0 0.0
    %1473 = vmatpush1.msra.mxu0 0.0
    %1474 = vmatprep.subr.mxu0 0.0
    %1475 = vmatpush1.msra.mxu0 0.0
    %1476 = vmatprep.subr.mxu0 0.0
    %1477 = vmatpush1.msra.mxu0 0.0
    %1478 = vmatprep.mubr.f32.mxu0 0.0
    %1479 = vmatmul.mubr.f32.gmra.mrb[0].mxu0 %v1123
    %v1480 = vpop.f32.mrb[0].mxu0
    %v1481 = vadd.f32 0.0, %v1480
    %v1482 = vpop.f32.mrb[0].mxu0
    %1483 = vdwg.mxu0
    %v1484 = vadd.f32 %v1338, %v1481
    %v1485 = vld [vmem:[%s972 + $0x1] sm:$0x7f]
    %v1487 = vsel %vm32, %v1485, 0
    %1489 = vmatprep.subr.mxu0 0.0
    %1490 = vmatpush1.msra.mxu0 %v477
    %1491 = vmatprep.subr.mxu0 0.0
    %1492 = vmatpush1.msra.mxu0 %v478
    %1493 = vmatprep.subr.mxu0 0.0
    %1494 = vmatpush1.msra.mxu0 %v479
    %1495 = vmatprep.subr.mxu0 0.0
    %1496 = vmatpush1.msra.mxu0 %v480
    %1497 = vmatprep.subr.mxu0 0.0
    %1498 = vmatpush1.msra.mxu0 0.0
    %1499 = vmatprep.subr.mxu0 0.0
    %1500 = vmatpush1.msra.mxu0 0.0
    %1501 = vmatprep.subr.mxu0 0.0
    %1502 = vmatpush1.msra.mxu0 0.0
    %1503 = vmatprep.subr.mxu0 0.0
    %1504 = vmatpush1.msra.mxu0 0.0
    %1505 = vmatprep.subr.mxu0 0.0
    %1506 = vmatpush1.msra.mxu0 0.0
    %1507 = vmatprep.subr.mxu0 0.0
    %1508 = vmatpush1.msra.mxu0 0.0
    %1509 = vmatprep.subr.mxu0 0.0
    %1510 = vmatpush1.msra.mxu0 0.0
    %1511 = vmatprep.subr.mxu0 0.0
    %1512 = vmatpush1.msra.mxu0 0.0
    %1513 = vmatprep.subr.mxu0 0.0
    %1514 = vmatpush1.msra.mxu0 0.0
    %1515 = vmatprep.subr.mxu0 0.0
    %1516 = vmatpush1.msra.mxu0 0.0
    %1517 = vmatprep.subr.mxu0 0.0
    %1518 = vmatpush1.msra.mxu0 0.0
    %1519 = vmatprep.subr.mxu0 0.0
    %1520 = vmatpush1.msra.mxu0 0.0
    %1521 = vmatprep.subr.mxu0 0.0
    %1522 = vmatpush1.msra.mxu0 0.0
    %1523 = vmatprep.subr.mxu0 0.0
    %1524 = vmatpush1.msra.mxu0 0.0
    %1525 = vmatprep.subr.mxu0 0.0
    %1526 = vmatpush1.msra.mxu0 0.0
    %1527 = vmatprep.subr.mxu0 0.0
    %1528 = vmatpush1.msra.mxu0 0.0
    %1529 = vmatprep.subr.mxu0 0.0
    %1530 = vmatpush1.msra.mxu0 0.0
    %1531 = vmatprep.subr.mxu0 0.0
    %1532 = vmatpush1.msra.mxu0 0.0
    %1533 = vmatprep.subr.mxu0 0.0
    %1534 = vmatpush1.msra.mxu0 0.0
    %1535 = vmatprep.subr.mxu0 0.0
    %1536 = vmatpush1.msra.mxu0 0.0
    %1537 = vmatprep.subr.mxu0 0.0
    %1538 = vmatpush1.msra.mxu0 0.0
    %1539 = vmatprep.subr.mxu0 0.0
    %1540 = vmatpush1.msra.mxu0 0.0
    %1541 = vmatprep.subr.mxu0 0.0
    %1542 = vmatpush1.msra.mxu0 0.0
    %1543 = vmatprep.subr.mxu0 0.0
    %1544 = vmatpush1.msra.mxu0 0.0
    %1545 = vmatprep.subr.mxu0 0.0
    %1546 = vmatpush1.msra.mxu0 0.0
    %1547 = vmatprep.subr.mxu0 0.0
    %1548 = vmatpush1.msra.mxu0 0.0
    %1549 = vmatprep.subr.mxu0 0.0
    %1550 = vmatpush1.msra.mxu0 0.0
    %1551 = vmatprep.subr.mxu0 0.0
    %1552 = vmatpush1.msra.mxu0 0.0
    %1553 = vmatprep.mubr.f32.mxu0 0.0
    %1554 = vmatmul.mubr.f32.gmra.mrb[0].mxu0 %v1487
    %v1555 = vpop.f32.mrb[0].mxu0
    %v1556 = vadd.f32 0.0, %v1555
    %v1557 = vpop.f32.mrb[0].mxu0
    %1558 = vdwg.mxu0
    %v1559 = vadd.f32 %v1413, %v1556
    %1560 = vmatprep.subr.mxu0 0.0
    %1561 = vmatpush1.msra.mxu0 %v627
    %1562 = vmatprep.subr.mxu0 0.0
    %1563 = vmatpush1.msra.mxu0 %v628
    %1564 = vmatprep.subr.mxu0 0.0
    %1565 = vmatpush1.msra.mxu0 %v629
    %1566 = vmatprep.subr.mxu0 0.0
    %1567 = vmatpush1.msra.mxu0 %v630
    %1568 = vmatprep.subr.mxu0 0.0
    %1569 = vmatpush1.msra.mxu0 0.0
    %1570 = vmatprep.subr.mxu0 0.0
    %1571 = vmatpush1.msra.mxu0 0.0
    %1572 = vmatprep.subr.mxu0 0.0
    %1573 = vmatpush1.msra.mxu0 0.0
    %1574 = vmatprep.subr.mxu0 0.0
    %1575 = vmatpush1.msra.mxu0 0.0
    %1576 = vmatprep.subr.mxu0 0.0
    %1577 = vmatpush1.msra.mxu0 0.0
    %1578 = vmatprep.subr.mxu0 0.0
    %1579 = vmatpush1.msra.mxu0 0.0
    %1580 = vmatprep.subr.mxu0 0.0
    %1581 = vmatpush1.msra.mxu0 0.0
    %1582 = vmatprep.subr.mxu0 0.0
    %1583 = vmatpush1.msra.mxu0 0.0
    %1584 = vmatprep.subr.mxu0 0.0
    %1585 = vmatpush1.msra.mxu0 0.0
    %1586 = vmatprep.subr.mxu0 0.0
    %1587 = vmatpush1.msra.mxu0 0.0
    %1588 = vmatprep.subr.mxu0 0.0
    %1589 = vmatpush1.msra.mxu0 0.0
    %1590 = vmatprep.subr.mxu0 0.0
    %1591 = vmatpush1.msra.mxu0 0.0
    %1592 = vmatprep.subr.mxu0 0.0
    %1593 = vmatpush1.msra.mxu0 0.0
    %1594 = vmatprep.subr.mxu0 0.0
    %1595 = vmatpush1.msra.mxu0 0.0
    %1596 = vmatprep.subr.mxu0 0.0
    %1597 = vmatpush1.msra.mxu0 0.0
    %1598 = vmatprep.subr.mxu0 0.0
    %1599 = vmatpush1.msra.mxu0 0.0
    %1600 = vmatprep.subr.mxu0 0.0
    %1601 = vmatpush1.msra.mxu0 0.0
    %1602 = vmatprep.subr.mxu0 0.0
    %1603 = vmatpush1.msra.mxu0 0.0
    %1604 = vmatprep.subr.mxu0 0.0
    %1605 = vmatpush1.msra.mxu0 0.0
    %1606 = vmatprep.subr.mxu0 0.0
    %1607 = vmatpush1.msra.mxu0 0.0
    %1608 = vmatprep.subr.mxu0 0.0
    %1609 = vmatpush1.msra.mxu0 0.0
    %1610 = vmatprep.subr.mxu0 0.0
    %1611 = vmatpush1.msra.mxu0 0.0
    %1612 = vmatprep.subr.mxu0 0.0
    %1613 = vmatpush1.msra.mxu0 0.0
    %1614 = vmatprep.subr.mxu0 0.0
    %1615 = vmatpush1.msra.mxu0 0.0
    %1616 = vmatprep.subr.mxu0 0.0
    %1617 = vmatpush1.msra.mxu0 0.0
    %1618 = vmatprep.subr.mxu0 0.0
    %1619 = vmatpush1.msra.mxu0 0.0
    %1620 = vmatprep.subr.mxu0 0.0
    %1621 = vmatpush1.msra.mxu0 0.0
    %1622 = vmatprep.subr.mxu0 0.0
    %1623 = vmatpush1.msra.mxu0 0.0
    %1624 = vmatprep.mubr.f32.mxu0 0.0
    %1625 = vmatmul.mubr.f32.gmra.mrb[0].mxu0 %v1341
    %v1626 = vpop.f32.mrb[0].mxu0
    %v1627 = vadd.f32 0.0, %v1626
    %v1628 = vpop.f32.mrb[0].mxu0
    %1629 = vdwg.mxu0
    %v1630 = vadd.f32 %v1484, %v1627
    %v1631 = vld [vmem:[%s970 + $0x1] sm:$0x7f]
    %v1633 = vsel %vm32, %v1631, 0
    %1635 = vmatprep.subr.mxu0 0.0
    %1636 = vmatpush1.msra.mxu0 %v627
    %1637 = vmatprep.subr.mxu0 0.0
    %1638 = vmatpush1.msra.mxu0 %v628
    %1639 = vmatprep.subr.mxu0 0.0
    %1640 = vmatpush1.msra.mxu0 %v629
    %1641 = vmatprep.subr.mxu0 0.0
    %1642 = vmatpush1.msra.mxu0 %v630
    %1643 = vmatprep.subr.mxu0 0.0
    %1644 = vmatpush1.msra.mxu0 0.0
    %1645 = vmatprep.subr.mxu0 0.0
    %1646 = vmatpush1.msra.mxu0 0.0
    %1647 = vmatprep.subr.mxu0 0.0
    %1648 = vmatpush1.msra.mxu0 0.0
    %1649 = vmatprep.subr.mxu0 0.0
    %1650 = vmatpush1.msra.mxu0 0.0
    %1651 = vmatprep.subr.mxu0 0.0
    %1652 = vmatpush1.msra.mxu0 0.0
    %1653 = vmatprep.subr.mxu0 0.0
    %1654 = vmatpush1.msra.mxu0 0.0
    %1655 = vmatprep.subr.mxu0 0.0
    %1656 = vmatpush1.msra.mxu0 0.0
    %1657 = vmatprep.subr.mxu0 0.0
    %1658 = vmatpush1.msra.mxu0 0.0
    %1659 = vmatprep.subr.mxu0 0.0
    %1660 = vmatpush1.msra.mxu0 0.0
    %1661 = vmatprep.subr.mxu0 0.0
    %1662 = vmatpush1.msra.mxu0 0.0
    %1663 = vmatprep.subr.mxu0 0.0
    %1664 = vmatpush1.msra.mxu0 0.0
    %1665 = vmatprep.subr.mxu0 0.0
    %1666 = vmatpush1.msra.mxu0 0.0
    %1667 = vmatprep.subr.mxu0 0.0
    %1668 = vmatpush1.msra.mxu0 0.0
    %1669 = vmatprep.subr.mxu0 0.0
    %1670 = vmatpush1.msra.mxu0 0.0
    %1671 = vmatprep.subr.mxu0 0.0
    %1672 = vmatpush1.msra.mxu0 0.0
    %1673 = vmatprep.subr.mxu0 0.0
    %1674 = vmatpush1.msra.mxu0 0.0
    %1675 = vmatprep.subr.mxu0 0.0
    %1676 = vmatpush1.msra.mxu0 0.0
    %1677 = vmatprep.subr.mxu0 0.0
    %1678 = vmatpush1.msra.mxu0 0.0
    %1679 = vmatprep.subr.mxu0 0.0
    %1680 = vmatpush1.msra.mxu0 0.0
    %1681 = vmatprep.subr.mxu0 0.0
    %1682 = vmatpush1.msra.mxu0 0.0
    %1683 = vmatprep.subr.mxu0 0.0
    %1684 = vmatpush1.msra.mxu0 0.0
    %1685 = vmatprep.subr.mxu0 0.0
    %1686 = vmatpush1.msra.mxu0 0.0
    %1687 = vmatprep.subr.mxu0 0.0
    %1688 = vmatpush1.msra.mxu0 0.0
    %1689 = vmatprep.subr.mxu0 0.0
    %1690 = vmatpush1.msra.mxu0 0.0
    %1691 = vmatprep.subr.mxu0 0.0
    %1692 = vmatpush1.msra.mxu0 0.0
    %1693 = vmatprep.subr.mxu0 0.0
    %1694 = vmatpush1.msra.mxu0 0.0
    %1695 = vmatprep.subr.mxu0 0.0
    %1696 = vmatpush1.msra.mxu0 0.0
    %1697 = vmatprep.subr.mxu0 0.0
    %1698 = vmatpush1.msra.mxu0 0.0
    %1699 = vmatprep.mubr.f32.mxu0 0.0
    %1700 = vmatmul.mubr.f32.gmra.mrb[0].mxu0 %v1633
    %v1701 = vpop.f32.mrb[0].mxu0
    %v1702 = vadd.f32 0.0, %v1701
    %v1703 = vpop.f32.mrb[0].mxu0
    %1704 = vdwg.mxu0
    %v1705 = vadd.f32 %v1559, %v1702
    %1706 = vmatprep.subr.mxu0 0.0
    %1707 = vmatpush1.msra.mxu0 %v777
    %1708 = vmatprep.subr.mxu0 0.0
    %1709 = vmatpush1.msra.mxu0 %v778
    %1710 = vmatprep.subr.mxu0 0.0
    %1711 = vmatpush1.msra.mxu0 %v779
    %1712 = vmatprep.subr.mxu0 0.0
    %1713 = vmatpush1.msra.mxu0 %v780
    %1714 = vmatprep.subr.mxu0 0.0
    %1715 = vmatpush1.msra.mxu0 0.0
    %1716 = vmatprep.subr.mxu0 0.0
    %1717 = vmatpush1.msra.mxu0 0.0
    %1718 = vmatprep.subr.mxu0 0.0
    %1719 = vmatpush1.msra.mxu0 0.0
    %1720 = vmatprep.subr.mxu0 0.0
    %1721 = vmatpush1.msra.mxu0 0.0
    %1722 = vmatprep.subr.mxu0 0.0
    %1723 = vmatpush1.msra.mxu0 0.0
    %1724 = vmatprep.subr.mxu0 0.0
    %1725 = vmatpush1.msra.mxu0 0.0
    %1726 = vmatprep.subr.mxu0 0.0
    %1727 = vmatpush1.msra.mxu0 0.0
    %1728 = vmatprep.subr.mxu0 0.0
    %1729 = vmatpush1.msra.mxu0 0.0
    %1730 = vmatprep.subr.mxu0 0.0
    %1731 = vmatpush1.msra.mxu0 0.0
    %1732 = vmatprep.subr.mxu0 0.0
    %1733 = vmatpush1.msra.mxu0 0.0
    %1734 = vmatprep.subr.mxu0 0.0
    %1735 = vmatpush1.msra.mxu0 0.0
    %1736 = vmatprep.subr.mxu0 0.0
    %1737 = vmatpush1.msra.mxu0 0.0
    %1738 = vmatprep.subr.mxu0 0.0
    %1739 = vmatpush1.msra.mxu0 0.0
    %1740 = vmatprep.subr.mxu0 0.0
    %1741 = vmatpush1.msra.mxu0 0.0
    %1742 = vmatprep.subr.mxu0 0.0
    %1743 = vmatpush1.msra.mxu0 0.0
    %1744 = vmatprep.subr.mxu0 0.0
    %1745 = vmatpush1.msra.mxu0 0.0
    %1746 = vmatprep.subr.mxu0 0.0
    %1747 = vmatpush1.msra.mxu0 0.0
    %1748 = vmatprep.subr.mxu0 0.0
    %1749 = vmatpush1.msra.mxu0 0.0
    %1750 = vmatprep.subr.mxu0 0.0
    %1751 = vmatpush1.msra.mxu0 0.0
    %1752 = vmatprep.subr.mxu0 0.0
    %1753 = vmatpush1.msra.mxu0 0.0
    %1754 = vmatprep.subr.mxu0 0.0
    %1755 = vmatpush1.msra.mxu0 0.0
    %1756 = vmatprep.subr.mxu0 0.0
    %1757 = vmatpush1.msra.mxu0 0.0
    %1758 = vmatprep.subr.mxu0 0.0
    %1759 = vmatpush1.msra.mxu0 0.0
    %1760 = vmatprep.subr.mxu0 0.0
    %1761 = vmatpush1.msra.mxu0 0.0
    %1762 = vmatprep.subr.mxu0 0.0
    %1763 = vmatpush1.msra.mxu0 0.0
    %1764 = vmatprep.subr.mxu0 0.0
    %1765 = vmatpush1.msra.mxu0 0.0
    %1766 = vmatprep.subr.mxu0 0.0
    %1767 = vmatpush1.msra.mxu0 0.0
    %1768 = vmatprep.subr.mxu0 0.0
    %1769 = vmatpush1.msra.mxu0 0.0
    %1770 = vmatprep.mubr.f32.mxu0 0.0
    %1771 = vmatmul.mubr.f32.gmra.mrb[0].mxu0 %v1487
    %v1772 = vpop.f32.mrb[0].mxu0
    %v1773 = vadd.f32 0.0, %v1772
    %v1774 = vpop.f32.mrb[0].mxu0
    %1775 = vdwg.mxu0
    %v1776 = vadd.f32 %v1630, %v1773
    %v1777 = vld [vmem:[%s1120 + $0x1] sm:$0x7f]
    %v1779 = vsel %vm32, %v1777, 0
    %1781 = vmatprep.subr.mxu0 0.0
    %1782 = vmatpush1.msra.mxu0 %v777
    %1783 = vmatprep.subr.mxu0 0.0
    %1784 = vmatpush1.msra.mxu0 %v778
    %1785 = vmatprep.subr.mxu0 0.0
    %1786 = vmatpush1.msra.mxu0 %v779
    %1787 = vmatprep.subr.mxu0 0.0
    %1788 = vmatpush1.msra.mxu0 %v780
    %1789 = vmatprep.subr.mxu0 0.0
    %1790 = vmatpush1.msra.mxu0 0.0
    %1791 = vmatprep.subr.mxu0 0.0
    %1792 = vmatpush1.msra.mxu0 0.0
    %1793 = vmatprep.subr.mxu0 0.0
    %1794 = vmatpush1.msra.mxu0 0.0
    %1795 = vmatprep.subr.mxu0 0.0
    %1796 = vmatpush1.msra.mxu0 0.0
    %1797 = vmatprep.subr.mxu0 0.0
    %1798 = vmatpush1.msra.mxu0 0.0
    %1799 = vmatprep.subr.mxu0 0.0
    %1800 = vmatpush1.msra.mxu0 0.0
    %1801 = vmatprep.subr.mxu0 0.0
    %1802 = vmatpush1.msra.mxu0 0.0
    %1803 = vmatprep.subr.mxu0 0.0
    %1804 = vmatpush1.msra.mxu0 0.0
    %1805 = vmatprep.subr.mxu0 0.0
    %1806 = vmatpush1.msra.mxu0 0.0
    %1807 = vmatprep.subr.mxu0 0.0
    %1808 = vmatpush1.msra.mxu0 0.0
    %1809 = vmatprep.subr.mxu0 0.0
    %1810 = vmatpush1.msra.mxu0 0.0
    %1811 = vmatprep.subr.mxu0 0.0
    %1812 = vmatpush1.msra.mxu0 0.0
    %1813 = vmatprep.subr.mxu0 0.0
    %1814 = vmatpush1.msra.mxu0 0.0
    %1815 = vmatprep.subr.mxu0 0.0
    %1816 = vmatpush1.msra.mxu0 0.0
    %1817 = vmatprep.subr.mxu0 0.0
    %1818 = vmatpush1.msra.mxu0 0.0
    %1819 = vmatprep.subr.mxu0 0.0
    %1820 = vmatpush1.msra.mxu0 0.0
    %1821 = vmatprep.subr.mxu0 0.0
    %1822 = vmatpush1.msra.mxu0 0.0
    %1823 = vmatprep.subr.mxu0 0.0
    %1824 = vmatpush1.msra.mxu0 0.0
    %1825 = vmatprep.subr.mxu0 0.0
    %1826 = vmatpush1.msra.mxu0 0.0
    %1827 = vmatprep.subr.mxu0 0.0
    %1828 = vmatpush1.msra.mxu0 0.0
    %1829 = vmatprep.subr.mxu0 0.0
    %1830 = vmatpush1.msra.mxu0 0.0
    %1831 = vmatprep.subr.mxu0 0.0
    %1832 = vmatpush1.msra.mxu0 0.0
    %1833 = vmatprep.subr.mxu0 0.0
    %1834 = vmatpush1.msra.mxu0 0.0
    %1835 = vmatprep.subr.mxu0 0.0
    %1836 = vmatpush1.msra.mxu0 0.0
    %1837 = vmatprep.subr.mxu0 0.0
    %1838 = vmatpush1.msra.mxu0 0.0
    %1839 = vmatprep.subr.mxu0 0.0
    %1840 = vmatpush1.msra.mxu0 0.0
    %1841 = vmatprep.subr.mxu0 0.0
    %1842 = vmatpush1.msra.mxu0 0.0
    %1843 = vmatprep.subr.mxu0 0.0
    %1844 = vmatpush1.msra.mxu0 0.0
    %1845 = vmatprep.mubr.f32.mxu0 0.0
    %1846 = vmatmul.mubr.f32.gmra.mrb[0].mxu0 %v1779
    %v1847 = vpop.f32.mrb[0].mxu0
    %v1848 = vadd.f32 0.0, %v1847
    %v1849 = vpop.f32.mrb[0].mxu0
    %1850 = vdwg.mxu0
    %v1851 = vadd.f32 %v1705, %v1848
    %v1852 = vadd.f32 %v1776, %v930
    %v1853 = vadd.f32 %v1851, %v930
    %v1854 = vsel %vm933, %v1852, 0.0
    %v1855 = vrot.slane %v1854, 4
    %v1856 = vadd.f32 %v1854, %v1855
    %v1857 = vrot.slane %v1856, 2
    %v1858 = vadd.f32 %v1856, %v1857
    %v1859 = vrot.slane %v1858, 1
    %v1860 = vadd.f32 %v1858, %v1859
    %v1861 = vadd.f32 %v949, %v1860
    %v1862 = vsel %vm933, %v1853, 0.0
    %v1863 = vrot.slane %v1862, 4
    %v1864 = vadd.f32 %v1862, %v1863
    %v1865 = vrot.slane %v1864, 2
    %v1866 = vadd.f32 %v1864, %v1865
    %v1867 = vrot.slane %v1866, 1
    %v1868 = vadd.f32 %v1866, %v1867
    %v1869 = vadd.f32 %v1861, %v1868
    %v1870 = vmul.f32 %v1852, %v1852
    %v1871 = vsel %vm933, %v1870, 0.0
    %v1872 = vrot.slane %v1871, 4
    %v1873 = vadd.f32 %v1871, %v1872
    %v1874 = vrot.slane %v1873, 2
    %v1875 = vadd.f32 %v1873, %v1874
    %v1876 = vrot.slane %v1875, 1
    %v1877 = vadd.f32 %v1875, %v1876
    %v1878 = vadd.f32 %v967, %v1877
    %v1879 = vmul.f32 %v1853, %v1853
    %v1880 = vsel %vm933, %v1879, 0.0
    %v1881 = vrot.slane %v1880, 4
    %v1882 = vadd.f32 %v1880, %v1881
    %v1883 = vrot.slane %v1882, 2
    %v1884 = vadd.f32 %v1882, %v1883
    %v1885 = vrot.slane %v1884, 1
    %v1886 = vadd.f32 %v1884, %v1885
    %v1887 = vadd.f32 %v1878, %v1886
    %v1888 = vld [vmem:[%s1 + $0xc0] sm:$0xff]
    %v1889 = vld [vmem:[%s1 + $0xc8] sm:$0xff]
    %v1890 = vld [vmem:[%s1 + $0xd0] sm:$0xff]
    %v1891 = vld [vmem:[%s1 + $0xd8] sm:$0xff]
    %v1892 = vld [vmem:[%s1 + $0xe0] sm:$0xff]
    %v1893 = vld [vmem:[%s1 + $0xe8] sm:$0xff]
    %v1894 = vld [vmem:[%s1 + $0xf0] sm:$0xff]
    %v1895 = vld [vmem:[%s1 + $0xf8] sm:$0xff]
    %v1896 = vld [vmem:[%s1 + $0x100] sm:$0xff]
    %v1897 = vld [vmem:[%s1 + $0x108] sm:$0xff]
    %v1898 = vld [vmem:[%s1 + $0x110] sm:$0xf]
    %vm1899 = vcmask 687104
    %v1901 = vsel %vm1899, %v1869, 0
    %vm1903 = vcmask 1043456
    %v1905 = vsel %vm1903, %v1898, 0
    %1907 = vmatprep.subr.mxu0 0.0
    %1908 = vmatpush1.msra.mxu0 %v1888
    %1909 = vmatprep.subr.mxu0 0.0
    %1910 = vmatpush1.msra.mxu0 %v1889
    %1911 = vmatprep.subr.mxu0 0.0
    %1912 = vmatpush1.msra.mxu0 %v1890
    %1913 = vmatprep.subr.mxu0 0.0
    %1914 = vmatpush1.msra.mxu0 %v1891
    %1915 = vmatprep.subr.mxu0 0.0
    %1916 = vmatpush1.msra.mxu0 %v1892
    %1917 = vmatprep.subr.mxu0 0.0
    %1918 = vmatpush1.msra.mxu0 %v1893
    %1919 = vmatprep.subr.mxu0 0.0
    %1920 = vmatpush1.msra.mxu0 %v1894
    %1921 = vmatprep.subr.mxu0 0.0
    %1922 = vmatpush1.msra.mxu0 %v1895
    %1923 = vmatprep.subr.mxu0 0.0
    %1924 = vmatpush1.msra.mxu0 %v1896
    %1925 = vmatprep.subr.mxu0 0.0
    %1926 = vmatpush1.msra.mxu0 %v1897
    %1927 = vmatprep.subr.mxu0 0.0
    %1928 = vmatpush1.msra.mxu0 %v1905
    %1929 = vmatprep.subr.mxu0 0.0
    %1930 = vmatpush1.msra.mxu0 0.0
    %1931 = vmatprep.subr.mxu0 0.0
    %1932 = vmatpush1.msra.mxu0 0.0
    %1933 = vmatprep.subr.mxu0 0.0
    %1934 = vmatpush1.msra.mxu0 0.0
    %1935 = vmatprep.subr.mxu0 0.0
    %1936 = vmatpush1.msra.mxu0 0.0
    %1937 = vmatprep.subr.mxu0 0.0
    %1938 = vmatpush1.msra.mxu0 0.0
    %1939 = vmatprep.subr.mxu0 0.0
    %1940 = vmatpush1.msra.mxu0 0.0
    %1941 = vmatprep.subr.mxu0 0.0
    %1942 = vmatpush1.msra.mxu0 0.0
    %1943 = vmatprep.subr.mxu0 0.0
    %1944 = vmatpush1.msra.mxu0 0.0
    %1945 = vmatprep.subr.mxu0 0.0
    %1946 = vmatpush1.msra.mxu0 0.0
    %1947 = vmatprep.subr.mxu0 0.0
    %1948 = vmatpush1.msra.mxu0 0.0
    %1949 = vmatprep.subr.mxu0 0.0
    %1950 = vmatpush1.msra.mxu0 0.0
    %1951 = vmatprep.subr.mxu0 0.0
    %1952 = vmatpush1.msra.mxu0 0.0
    %1953 = vmatprep.subr.mxu0 0.0
    %1954 = vmatpush1.msra.mxu0 0.0
    %1955 = vmatprep.subr.mxu0 0.0
    %1956 = vmatpush1.msra.mxu0 0.0
    %1957 = vmatprep.subr.mxu0 0.0
    %1958 = vmatpush1.msra.mxu0 0.0
    %1959 = vmatprep.subr.mxu0 0.0
    %1960 = vmatpush1.msra.mxu0 0.0
    %1961 = vmatprep.subr.mxu0 0.0
    %1962 = vmatpush1.msra.mxu0 0.0
    %1963 = vmatprep.subr.mxu0 0.0
    %1964 = vmatpush1.msra.mxu0 0.0
    %1965 = vmatprep.subr.mxu0 0.0
    %1966 = vmatpush1.msra.mxu0 0.0
    %1967 = vmatprep.subr.mxu0 0.0
    %1968 = vmatpush1.msra.mxu0 0.0
    %1969 = vmatprep.subr.mxu0 0.0
    %1970 = vmatpush1.msra.mxu0 0.0
    %1971 = vmatprep.mubr.f32.mxu0 0.0
    %1972 = vmatmul.mubr.f32.gmra.mrb[0].mxu0 %v1901
    %v1973 = vpop.f32.mrb[0].mxu0
    %v1974 = vadd.f32 0.0, %v1973
    %v1975 = vpop.f32.mrb[0].mxu0
    %1976 = vdwg.mxu0
    %v1977 = vmul.f32 %v1974, 0.5
    %v1979 = vsel %vm1899, %v1887, 0
    %1981 = vmatprep.subr.mxu0 0.0
    %1982 = vmatpush1.msra.mxu0 %v1888
    %1983 = vmatprep.subr.mxu0 0.0
    %1984 = vmatpush1.msra.mxu0 %v1889
    %1985 = vmatprep.subr.mxu0 0.0
    %1986 = vmatpush1.msra.mxu0 %v1890
    %1987 = vmatprep.subr.mxu0 0.0
    %1988 = vmatpush1.msra.mxu0 %v1891
    %1989 = vmatprep.subr.mxu0 0.0
    %1990 = vmatpush1.msra.mxu0 %v1892
    %1991 = vmatprep.subr.mxu0 0.0
    %1992 = vmatpush1.msra.mxu0 %v1893
    %1993 = vmatprep.subr.mxu0 0.0
    %1994 = vmatpush1.msra.mxu0 %v1894
    %1995 = vmatprep.subr.mxu0 0.0
    %1996 = vmatpush1.msra.mxu0 %v1895
    %1997 = vmatprep.subr.mxu0 0.0
    %1998 = vmatpush1.msra.mxu0 %v1896
    %1999 = vmatprep.subr.mxu0 0.0
    %2000 = vmatpush1.msra.mxu0 %v1897
    %2001 = vmatprep.subr.mxu0 0.0
    %2002 = vmatpush1.msra.mxu0 %v1905
    %2003 = vmatprep.subr.mxu0 0.0
    %2004 = vmatpush1.msra.mxu0 0.0
    %2005 = vmatprep.subr.mxu0 0.0
    %2006 = vmatpush1.msra.mxu0 0.0
    %2007 = vmatprep.subr.mxu0 0.0
    %2008 = vmatpush1.msra.mxu0 0.0
    %2009 = vmatprep.subr.mxu0 0.0
    %2010 = vmatpush1.msra.mxu0 0.0
    %2011 = vmatprep.subr.mxu0 0.0
    %2012 = vmatpush1.msra.mxu0 0.0
    %2013 = vmatprep.subr.mxu0 0.0
    %2014 = vmatpush1.msra.mxu0 0.0
    %2015 = vmatprep.subr.mxu0 0.0
    %2016 = vmatpush1.msra.mxu0 0.0
    %2017 = vmatprep.subr.mxu0 0.0
    %2018 = vmatpush1.msra.mxu0 0.0
    %2019 = vmatprep.subr.mxu0 0.0
    %2020 = vmatpush1.msra.mxu0 0.0
    %2021 = vmatprep.subr.mxu0 0.0
    %2022 = vmatpush1.msra.mxu0 0.0
    %2023 = vmatprep.subr.mxu0 0.0
    %2024 = vmatpush1.msra.mxu0 0.0
    %2025 = vmatprep.subr.mxu0 0.0
    %2026 = vmatpush1.msra.mxu0 0.0
    %2027 = vmatprep.subr.mxu0 0.0
    %2028 = vmatpush1.msra.mxu0 0.0
    %2029 = vmatprep.subr.mxu0 0.0
    %2030 = vmatpush1.msra.mxu0 0.0
    %2031 = vmatprep.subr.mxu0 0.0
    %2032 = vmatpush1.msra.mxu0 0.0
    %2033 = vmatprep.subr.mxu0 0.0
    %2034 = vmatpush1.msra.mxu0 0.0
    %2035 = vmatprep.subr.mxu0 0.0
    %2036 = vmatpush1.msra.mxu0 0.0
    %2037 = vmatprep.subr.mxu0 0.0
    %2038 = vmatpush1.msra.mxu0 0.0
    %2039 = vmatprep.subr.mxu0 0.0
    %2040 = vmatpush1.msra.mxu0 0.0
    %2041 = vmatprep.subr.mxu0 0.0
    %2042 = vmatpush1.msra.mxu0 0.0
    %2043 = vmatprep.subr.mxu0 0.0
    %2044 = vmatpush1.msra.mxu0 0.0
    %2045 = vmatprep.mubr.f32.mxu0 0.0
    %2046 = vmatmul.mubr.f32.gmra.mrb[0].mxu0 %v1979
    %v2047 = vpop.f32.mrb[0].mxu0
    %v2048 = vadd.f32 0.0, %v2047
    %v2049 = vpop.f32.mrb[0].mxu0
    %2050 = vdwg.mxu0
    %v2051 = vmul.f32 %v2048, 0.5
    %v2052 = vmul.f32 %v1977, %v1977
    %v2053 = vsub.f32 %v2051, %v2052
    %v2054 = vadd.f32 %v2053, 1e-05
    %v2055 = vrsqrt.pop %v2054
    %v2056 = vld [vmem:[%s1 + $0x119] sm:$0x1]
    %v2057 = vld [vmem:[%s1 + $0x11a] sm:$0x1]
    %v2058 = vld [vmem:[%s2 + $0x260] sm:$0x1]
    %v2059 = vlaneseq
    %v2060 = vshrl.u32 %v2059, 7
    %v2061 = vsub.s32 0, %v2060
    %v2062 = vrot.slane %v1977, %v2061
    %v2063 = vsub.f32 %v931, %v2062
    %v2064 = vlaneseq
    %v2065 = vshrl.u32 %v2064, 7
    %v2066 = vsub.s32 0, %v2065
    %v2067 = vrot.slane %v2056, %v2066
    %v2068 = vmul.f32 %v2067, %v2063
    %v2069 = vlaneseq
    %v2070 = vshrl.u32 %v2069, 7
    %v2071 = vsub.s32 0, %v2070
    %v2072 = vrot.slane %v2055, %v2071
    %v2073 = vmul.f32 %v2068, %v2072
    %v2074 = vlaneseq
    %v2075 = vshrl.u32 %v2074, 7
    %v2076 = vsub.s32 0, %v2075
    %v2077 = vrot.slane %v2057, %v2076
    %v2078 = vadd.f32 %v2073, %v2077
    %v2079 = vsub.f32 0.0, %v2078
    %v2080 = vmul.f32 %v2079, 1.442695
    %v2081 = vpow.pop %v2080
    %v2082 = vadd.f32 %v2081, 1.0
    %v2083 = vrcp.pop %v2082
    %v2084 = vmul.f32 1.0, %v2083
    %v2085 = vsub.f32 %v932, %v2062
    %v2086 = vmul.f32 %v2067, %v2085
    %v2087 = vmul.f32 %v2086, %v2072
    %v2088 = vadd.f32 %v2087, %v2077
    %v2089 = vsub.f32 0.0, %v2088
    %v2090 = vmul.f32 %v2089, 1.442695
    %v2091 = vpow.pop %v2090
    %v2092 = vadd.f32 %v2091, 1.0
    %v2093 = vrcp.pop %v2092
    %v2094 = vmul.f32 1.0, %v2093
    %v2095 = vld [vmem:[%s2] sm:$0xff]
    %v2096 = vld [vmem:[%s2 + $0x8] sm:$0xff]
    %v2097 = vld [vmem:[%s2 + $0x10] sm:$0xff]
    %v2098 = vld [vmem:[%s2 + $0x18] sm:$0xff]
    %v2099 = vld [vmem:[%s2 + $0x20] sm:$0xff]
    %v2100 = vld [vmem:[%s2 + $0x28] sm:$0xff]
    %v2101 = vld [vmem:[%s2 + $0x30] sm:$0xff]
    %v2102 = vld [vmem:[%s2 + $0x38] sm:$0xff]
    %v2103 = vld [vmem:[%s2 + $0x40] sm:$0xff]
    %v2104 = vld [vmem:[%s2 + $0x48] sm:$0xff]
    %v2105 = vld [vmem:[%s2 + $0x50] sm:$0xf]
    %v2106 = vld [vmem:[%s2 + $0x58] sm:$0xff]
    %v2107 = vld [vmem:[%s2 + $0x60] sm:$0xff]
    %v2108 = vld [vmem:[%s2 + $0x68] sm:$0xff]
    %v2109 = vld [vmem:[%s2 + $0x70] sm:$0xff]
    %v2110 = vld [vmem:[%s2 + $0x78] sm:$0xff]
    %v2111 = vld [vmem:[%s2 + $0x80] sm:$0xff]
    %v2112 = vld [vmem:[%s2 + $0x88] sm:$0xff]
    %v2113 = vld [vmem:[%s2 + $0x90] sm:$0xff]
    %v2114 = vld [vmem:[%s2 + $0x98] sm:$0xff]
    %v2115 = vld [vmem:[%s2 + $0xa0] sm:$0xff]
    %v2116 = vld [vmem:[%s2 + $0xa8] sm:$0xf]
    %v2118 = vsel %vm1899, %v2094, 0
    %v2121 = vsel %vm1903, %v2116, 0
    %2123 = vmatprep.subr.mxu0 0.0
    %2124 = vmatpush1.msra.mxu0 %v2106
    %2125 = vmatprep.subr.mxu0 0.0
    %2126 = vmatpush1.msra.mxu0 %v2107
    %2127 = vmatprep.subr.mxu0 0.0
    %2128 = vmatpush1.msra.mxu0 %v2108
    %2129 = vmatprep.subr.mxu0 0.0
    %2130 = vmatpush1.msra.mxu0 %v2109
    %2131 = vmatprep.subr.mxu0 0.0
    %2132 = vmatpush1.msra.mxu0 %v2110
    %2133 = vmatprep.subr.mxu0 0.0
    %2134 = vmatpush1.msra.mxu0 %v2111
    %2135 = vmatprep.subr.mxu0 0.0
    %2136 = vmatpush1.msra.mxu0 %v2112
    %2137 = vmatprep.subr.mxu0 0.0
    %2138 = vmatpush1.msra.mxu0 %v2113
    %2139 = vmatprep.subr.mxu0 0.0
    %2140 = vmatpush1.msra.mxu0 %v2114
    %2141 = vmatprep.subr.mxu0 0.0
    %2142 = vmatpush1.msra.mxu0 %v2115
    %2143 = vmatprep.subr.mxu0 0.0
    %2144 = vmatpush1.msra.mxu0 %v2121
    %2145 = vmatprep.subr.mxu0 0.0
    %2146 = vmatpush1.msra.mxu0 0.0
    %2147 = vmatprep.subr.mxu0 0.0
    %2148 = vmatpush1.msra.mxu0 0.0
    %2149 = vmatprep.subr.mxu0 0.0
    %2150 = vmatpush1.msra.mxu0 0.0
    %2151 = vmatprep.subr.mxu0 0.0
    %2152 = vmatpush1.msra.mxu0 0.0
    %2153 = vmatprep.subr.mxu0 0.0
    %2154 = vmatpush1.msra.mxu0 0.0
    %2155 = vmatprep.subr.mxu0 0.0
    %2156 = vmatpush1.msra.mxu0 0.0
    %2157 = vmatprep.subr.mxu0 0.0
    %2158 = vmatpush1.msra.mxu0 0.0
    %2159 = vmatprep.subr.mxu0 0.0
    %2160 = vmatpush1.msra.mxu0 0.0
    %2161 = vmatprep.subr.mxu0 0.0
    %2162 = vmatpush1.msra.mxu0 0.0
    %2163 = vmatprep.subr.mxu0 0.0
    %2164 = vmatpush1.msra.mxu0 0.0
    %2165 = vmatprep.subr.mxu0 0.0
    %2166 = vmatpush1.msra.mxu0 0.0
    %2167 = vmatprep.subr.mxu0 0.0
    %2168 = vmatpush1.msra.mxu0 0.0
    %2169 = vmatprep.subr.mxu0 0.0
    %2170 = vmatpush1.msra.mxu0 0.0
    %2171 = vmatprep.subr.mxu0 0.0
    %2172 = vmatpush1.msra.mxu0 0.0
    %2173 = vmatprep.subr.mxu0 0.0
    %2174 = vmatpush1.msra.mxu0 0.0
    %2175 = vmatprep.subr.mxu0 0.0
    %2176 = vmatpush1.msra.mxu0 0.0
    %2177 = vmatprep.subr.mxu0 0.0
    %2178 = vmatpush1.msra.mxu0 0.0
    %2179 = vmatprep.subr.mxu0 0.0
    %2180 = vmatpush1.msra.mxu0 0.0
    %2181 = vmatprep.subr.mxu0 0.0
    %2182 = vmatpush1.msra.mxu0 0.0
    %2183 = vmatprep.subr.mxu0 0.0
    %2184 = vmatpush1.msra.mxu0 0.0
    %2185 = vmatprep.subr.mxu0 0.0
    %2186 = vmatpush1.msra.mxu0 0.0
    %2187 = vmatprep.mubr.f32.mxu0 0.0
    %2188 = vmatmul.mubr.f32.gmra.mrb[0].mxu0 %v2118
    %v2189 = vpop.f32.mrb[0].mxu0
    %v2190 = vadd.f32 0.0, %v2189
    %v2191 = vpop.f32.mrb[0].mxu0
    %2192 = vdwg.mxu0
    %v2194 = vsel %vm1899, %v2084, 0
    %v2197 = vsel %vm1903, %v2105, 0
    %2199 = vmatprep.subr.mxu0 0.0
    %2200 = vmatpush1.msra.mxu0 %v2095
    %2201 = vmatprep.subr.mxu0 0.0
    %2202 = vmatpush1.msra.mxu0 %v2096
    %2203 = vmatprep.subr.mxu0 0.0
    %2204 = vmatpush1.msra.mxu0 %v2097
    %2205 = vmatprep.subr.mxu0 0.0
    %2206 = vmatpush1.msra.mxu0 %v2098
    %2207 = vmatprep.subr.mxu0 0.0
    %2208 = vmatpush1.msra.mxu0 %v2099
    %2209 = vmatprep.subr.mxu0 0.0
    %2210 = vmatpush1.msra.mxu0 %v2100
    %2211 = vmatprep.subr.mxu0 0.0
    %2212 = vmatpush1.msra.mxu0 %v2101
    %2213 = vmatprep.subr.mxu0 0.0
    %2214 = vmatpush1.msra.mxu0 %v2102
    %2215 = vmatprep.subr.mxu0 0.0
    %2216 = vmatpush1.msra.mxu0 %v2103
    %2217 = vmatprep.subr.mxu0 0.0
    %2218 = vmatpush1.msra.mxu0 %v2104
    %2219 = vmatprep.subr.mxu0 0.0
    %2220 = vmatpush1.msra.mxu0 %v2197
    %2221 = vmatprep.subr.mxu0 0.0
    %2222 = vmatpush1.msra.mxu0 0.0
    %2223 = vmatprep.subr.mxu0 0.0
    %2224 = vmatpush1.msra.mxu0 0.0
    %2225 = vmatprep.subr.mxu0 0.0
    %2226 = vmatpush1.msra.mxu0 0.0
    %2227 = vmatprep.subr.mxu0 0.0
    %2228 = vmatpush1.msra.mxu0 0.0
    %2229 = vmatprep.subr.mxu0 0.0
    %2230 = vmatpush1.msra.mxu0 0.0
    %2231 = vmatprep.subr.mxu0 0.0
    %2232 = vmatpush1.msra.mxu0 0.0
    %2233 = vmatprep.subr.mxu0 0.0
    %2234 = vmatpush1.msra.mxu0 0.0
    %2235 = vmatprep.subr.mxu0 0.0
    %2236 = vmatpush1.msra.mxu0 0.0
    %2237 = vmatprep.subr.mxu0 0.0
    %2238 = vmatpush1.msra.mxu0 0.0
    %2239 = vmatprep.subr.mxu0 0.0
    %2240 = vmatpush1.msra.mxu0 0.0
    %2241 = vmatprep.subr.mxu0 0.0
    %2242 = vmatpush1.msra.mxu0 0.0
    %2243 = vmatprep.subr.mxu0 0.0
    %2244 = vmatpush1.msra.mxu0 0.0
    %2245 = vmatprep.subr.mxu0 0.0
    %2246 = vmatpush1.msra.mxu0 0.0
    %2247 = vmatprep.subr.mxu0 0.0
    %2248 = vmatpush1.msra.mxu0 0.0
    %2249 = vmatprep.subr.mxu0 0.0
    %2250 = vmatpush1.msra.mxu0 0.0
    %2251 = vmatprep.subr.mxu0 0.0
    %2252 = vmatpush1.msra.mxu0 0.0
    %2253 = vmatprep.subr.mxu0 0.0
    %2254 = vmatpush1.msra.mxu0 0.0
    %2255 = vmatprep.subr.mxu0 0.0
    %2256 = vmatpush1.msra.mxu0 0.0
    %2257 = vmatprep.subr.mxu0 0.0
    %2258 = vmatpush1.msra.mxu0 0.0
    %2259 = vmatprep.subr.mxu0 0.0
    %2260 = vmatpush1.msra.mxu0 0.0
    %2261 = vmatprep.subr.mxu0 0.0
    %2262 = vmatpush1.msra.mxu0 0.0
    %2263 = vmatprep.mubr.f32.mxu0 0.0
    %2264 = vmatmul.mubr.f32.gmra.mrb[0].mxu0 %v2194
    %v2265 = vpop.f32.mrb[0].mxu0
    %v2266 = vadd.f32 %v2190, %v2265
    %v2267 = vpop.f32.mrb[0].mxu0
    %2268 = vdwg.mxu0
    %v2269 = vld [vmem:[%s2 + $0xb0] sm:$0xff]
    %v2270 = vld [vmem:[%s2 + $0xb8] sm:$0xff]
    %v2271 = vld [vmem:[%s2 + $0xc0] sm:$0xff]
    %v2272 = vld [vmem:[%s2 + $0xc8] sm:$0xff]
    %v2273 = vld [vmem:[%s2 + $0xd0] sm:$0xff]
    %v2274 = vld [vmem:[%s2 + $0xd8] sm:$0xff]
    %v2275 = vld [vmem:[%s2 + $0xe0] sm:$0xff]
    %v2276 = vld [vmem:[%s2 + $0xe8] sm:$0xff]
    %v2277 = vld [vmem:[%s2 + $0xf0] sm:$0xff]
    %v2278 = vld [vmem:[%s2 + $0xf8] sm:$0xff]
    %v2279 = vld [vmem:[%s2 + $0x100] sm:$0xf]
    %v2280 = vrot.slane %v2084, 1
    %v2281 = vsel %vm1899, %v2280, 0
    %v2284 = vsel %vm1903, %v2279, 0
    %2286 = vmatprep.subr.mxu0 0.0
    %2287 = vmatpush1.msra.mxu0 %v2269
    %2288 = vmatprep.subr.mxu0 0.0
    %2289 = vmatpush1.msra.mxu0 %v2270
    %2290 = vmatprep.subr.mxu0 0.0
    %2291 = vmatpush1.msra.mxu0 %v2271
    %2292 = vmatprep.subr.mxu0 0.0
    %2293 = vmatpush1.msra.mxu0 %v2272
    %2294 = vmatprep.subr.mxu0 0.0
    %2295 = vmatpush1.msra.mxu0 %v2273
    %2296 = vmatprep.subr.mxu0 0.0
    %2297 = vmatpush1.msra.mxu0 %v2274
    %2298 = vmatprep.subr.mxu0 0.0
    %2299 = vmatpush1.msra.mxu0 %v2275
    %2300 = vmatprep.subr.mxu0 0.0
    %2301 = vmatpush1.msra.mxu0 %v2276
    %2302 = vmatprep.subr.mxu0 0.0
    %2303 = vmatpush1.msra.mxu0 %v2277
    %2304 = vmatprep.subr.mxu0 0.0
    %2305 = vmatpush1.msra.mxu0 %v2278
    %2306 = vmatprep.subr.mxu0 0.0
    %2307 = vmatpush1.msra.mxu0 %v2284
    %2308 = vmatprep.subr.mxu0 0.0
    %2309 = vmatpush1.msra.mxu0 0.0
    %2310 = vmatprep.subr.mxu0 0.0
    %2311 = vmatpush1.msra.mxu0 0.0
    %2312 = vmatprep.subr.mxu0 0.0
    %2313 = vmatpush1.msra.mxu0 0.0
    %2314 = vmatprep.subr.mxu0 0.0
    %2315 = vmatpush1.msra.mxu0 0.0
    %2316 = vmatprep.subr.mxu0 0.0
    %2317 = vmatpush1.msra.mxu0 0.0
    %2318 = vmatprep.subr.mxu0 0.0
    %2319 = vmatpush1.msra.mxu0 0.0
    %2320 = vmatprep.subr.mxu0 0.0
    %2321 = vmatpush1.msra.mxu0 0.0
    %2322 = vmatprep.subr.mxu0 0.0
    %2323 = vmatpush1.msra.mxu0 0.0
    %2324 = vmatprep.subr.mxu0 0.0
    %2325 = vmatpush1.msra.mxu0 0.0
    %2326 = vmatprep.subr.mxu0 0.0
    %2327 = vmatpush1.msra.mxu0 0.0
    %2328 = vmatprep.subr.mxu0 0.0
    %2329 = vmatpush1.msra.mxu0 0.0
    %2330 = vmatprep.subr.mxu0 0.0
    %2331 = vmatpush1.msra.mxu0 0.0
    %2332 = vmatprep.subr.mxu0 0.0
    %2333 = vmatpush1.msra.mxu0 0.0
    %2334 = vmatprep.subr.mxu0 0.0
    %2335 = vmatpush1.msra.mxu0 0.0
    %2336 = vmatprep.subr.mxu0 0.0
    %2337 = vmatpush1.msra.mxu0 0.0
    %2338 = vmatprep.subr.mxu0 0.0
    %2339 = vmatpush1.msra.mxu0 0.0
    %2340 = vmatprep.subr.mxu0 0.0
    %2341 = vmatpush1.msra.mxu0 0.0
    %2342 = vmatprep.subr.mxu0 0.0
    %2343 = vmatpush1.msra.mxu0 0.0
    %2344 = vmatprep.subr.mxu0 0.0
    %2345 = vmatpush1.msra.mxu0 0.0
    %2346 = vmatprep.subr.mxu0 0.0
    %2347 = vmatpush1.msra.mxu0 0.0
    %2348 = vmatprep.subr.mxu0 0.0
    %2349 = vmatpush1.msra.mxu0 0.0
    %2350 = vmatprep.mubr.f32.mxu0 0.0
    %2351 = vmatmul.mubr.f32.gmra.mrb[0].mxu0 %v2281
    %v2352 = vpop.f32.mrb[0].mxu0
    %v2353 = vadd.f32 0.0, %v2352
    %v2354 = vpop.f32.mrb[0].mxu0
    %2355 = vdwg.mxu0
    %v2356 = vadd.f32 %v2266, %v2353
    %v2357 = vld [vmem:[%s2 + $0x108] sm:$0xff]
    %v2358 = vld [vmem:[%s2 + $0x110] sm:$0xff]
    %v2359 = vld [vmem:[%s2 + $0x118] sm:$0xff]
    %v2360 = vld [vmem:[%s2 + $0x120] sm:$0xff]
    %v2361 = vld [vmem:[%s2 + $0x128] sm:$0xff]
    %v2362 = vld [vmem:[%s2 + $0x130] sm:$0xff]
    %v2363 = vld [vmem:[%s2 + $0x138] sm:$0xff]
    %v2364 = vld [vmem:[%s2 + $0x140] sm:$0xff]
    %v2365 = vld [vmem:[%s2 + $0x148] sm:$0xff]
    %v2366 = vld [vmem:[%s2 + $0x150] sm:$0xff]
    %v2367 = vld [vmem:[%s2 + $0x158] sm:$0xf]
    %v2368 = vrot.slane %v2094, 1
    %v2369 = vsel %vm1899, %v2368, 0
    %v2372 = vsel %vm1903, %v2367, 0
    %2374 = vmatprep.subr.mxu0 0.0
    %2375 = vmatpush1.msra.mxu0 %v2357
    %2376 = vmatprep.subr.mxu0 0.0
    %2377 = vmatpush1.msra.mxu0 %v2358
    %2378 = vmatprep.subr.mxu0 0.0
    %2379 = vmatpush1.msra.mxu0 %v2359
    %2380 = vmatprep.subr.mxu0 0.0
    %2381 = vmatpush1.msra.mxu0 %v2360
    %2382 = vmatprep.subr.mxu0 0.0
    %2383 = vmatpush1.msra.mxu0 %v2361
    %2384 = vmatprep.subr.mxu0 0.0
    %2385 = vmatpush1.msra.mxu0 %v2362
    %2386 = vmatprep.subr.mxu0 0.0
    %2387 = vmatpush1.msra.mxu0 %v2363
    %2388 = vmatprep.subr.mxu0 0.0
    %2389 = vmatpush1.msra.mxu0 %v2364
    %2390 = vmatprep.subr.mxu0 0.0
    %2391 = vmatpush1.msra.mxu0 %v2365
    %2392 = vmatprep.subr.mxu0 0.0
    %2393 = vmatpush1.msra.mxu0 %v2366
    %2394 = vmatprep.subr.mxu0 0.0
    %2395 = vmatpush1.msra.mxu0 %v2372
    %2396 = vmatprep.subr.mxu0 0.0
    %2397 = vmatpush1.msra.mxu0 0.0
    %2398 = vmatprep.subr.mxu0 0.0
    %2399 = vmatpush1.msra.mxu0 0.0
    %2400 = vmatprep.subr.mxu0 0.0
    %2401 = vmatpush1.msra.mxu0 0.0
    %2402 = vmatprep.subr.mxu0 0.0
    %2403 = vmatpush1.msra.mxu0 0.0
    %2404 = vmatprep.subr.mxu0 0.0
    %2405 = vmatpush1.msra.mxu0 0.0
    %2406 = vmatprep.subr.mxu0 0.0
    %2407 = vmatpush1.msra.mxu0 0.0
    %2408 = vmatprep.subr.mxu0 0.0
    %2409 = vmatpush1.msra.mxu0 0.0
    %2410 = vmatprep.subr.mxu0 0.0
    %2411 = vmatpush1.msra.mxu0 0.0
    %2412 = vmatprep.subr.mxu0 0.0
    %2413 = vmatpush1.msra.mxu0 0.0
    %2414 = vmatprep.subr.mxu0 0.0
    %2415 = vmatpush1.msra.mxu0 0.0
    %2416 = vmatprep.subr.mxu0 0.0
    %2417 = vmatpush1.msra.mxu0 0.0
    %2418 = vmatprep.subr.mxu0 0.0
    %2419 = vmatpush1.msra.mxu0 0.0
    %2420 = vmatprep.subr.mxu0 0.0
    %2421 = vmatpush1.msra.mxu0 0.0
    %2422 = vmatprep.subr.mxu0 0.0
    %2423 = vmatpush1.msra.mxu0 0.0
    %2424 = vmatprep.subr.mxu0 0.0
    %2425 = vmatpush1.msra.mxu0 0.0
    %2426 = vmatprep.subr.mxu0 0.0
    %2427 = vmatpush1.msra.mxu0 0.0
    %2428 = vmatprep.subr.mxu0 0.0
    %2429 = vmatpush1.msra.mxu0 0.0
    %2430 = vmatprep.subr.mxu0 0.0
    %2431 = vmatpush1.msra.mxu0 0.0
    %2432 = vmatprep.subr.mxu0 0.0
    %2433 = vmatpush1.msra.mxu0 0.0
    %2434 = vmatprep.subr.mxu0 0.0
    %2435 = vmatpush1.msra.mxu0 0.0
    %2436 = vmatprep.subr.mxu0 0.0
    %2437 = vmatpush1.msra.mxu0 0.0
    %2438 = vmatprep.mubr.f32.mxu0 0.0
    %2439 = vmatmul.mubr.f32.gmra.mrb[0].mxu0 %v2369
    %v2440 = vpop.f32.mrb[0].mxu0
    %v2441 = vadd.f32 0.0, %v2440
    %v2442 = vpop.f32.mrb[0].mxu0
    %2443 = vdwg.mxu0
    %v2444 = vadd.f32 %v2356, %v2441
    %v2445 = vld [vmem:[%s2 + $0x160] sm:$0xff]
    %v2446 = vld [vmem:[%s2 + $0x168] sm:$0xff]
    %v2447 = vld [vmem:[%s2 + $0x170] sm:$0xff]
    %v2448 = vld [vmem:[%s2 + $0x178] sm:$0xff]
    %v2449 = vld [vmem:[%s2 + $0x180] sm:$0xff]
    %v2450 = vld [vmem:[%s2 + $0x188] sm:$0xff]
    %v2451 = vld [vmem:[%s2 + $0x190] sm:$0xff]
    %v2452 = vld [vmem:[%s2 + $0x198] sm:$0xff]
    %v2453 = vld [vmem:[%s2 + $0x1a0] sm:$0xff]
    %v2454 = vld [vmem:[%s2 + $0x1a8] sm:$0xff]
    %v2455 = vld [vmem:[%s2 + $0x1b0] sm:$0xf]
    %v2456 = vrot.slane %v2084, 2
    %v2457 = vsel %vm1899, %v2456, 0
    %v2460 = vsel %vm1903, %v2455, 0
    %2462 = vmatprep.subr.mxu0 0.0
    %2463 = vmatpush1.msra.mxu0 %v2445
    %2464 = vmatprep.subr.mxu0 0.0
    %2465 = vmatpush1.msra.mxu0 %v2446
    %2466 = vmatprep.subr.mxu0 0.0
    %2467 = vmatpush1.msra.mxu0 %v2447
    %2468 = vmatprep.subr.mxu0 0.0
    %2469 = vmatpush1.msra.mxu0 %v2448
    %2470 = vmatprep.subr.mxu0 0.0
    %2471 = vmatpush1.msra.mxu0 %v2449
    %2472 = vmatprep.subr.mxu0 0.0
    %2473 = vmatpush1.msra.mxu0 %v2450
    %2474 = vmatprep.subr.mxu0 0.0
    %2475 = vmatpush1.msra.mxu0 %v2451
    %2476 = vmatprep.subr.mxu0 0.0
    %2477 = vmatpush1.msra.mxu0 %v2452
    %2478 = vmatprep.subr.mxu0 0.0
    %2479 = vmatpush1.msra.mxu0 %v2453
    %2480 = vmatprep.subr.mxu0 0.0
    %2481 = vmatpush1.msra.mxu0 %v2454
    %2482 = vmatprep.subr.mxu0 0.0
    %2483 = vmatpush1.msra.mxu0 %v2460
    %2484 = vmatprep.subr.mxu0 0.0
    %2485 = vmatpush1.msra.mxu0 0.0
    %2486 = vmatprep.subr.mxu0 0.0
    %2487 = vmatpush1.msra.mxu0 0.0
    %2488 = vmatprep.subr.mxu0 0.0
    %2489 = vmatpush1.msra.mxu0 0.0
    %2490 = vmatprep.subr.mxu0 0.0
    %2491 = vmatpush1.msra.mxu0 0.0
    %2492 = vmatprep.subr.mxu0 0.0
    %2493 = vmatpush1.msra.mxu0 0.0
    %2494 = vmatprep.subr.mxu0 0.0
    %2495 = vmatpush1.msra.mxu0 0.0
    %2496 = vmatprep.subr.mxu0 0.0
    %2497 = vmatpush1.msra.mxu0 0.0
    %2498 = vmatprep.subr.mxu0 0.0
    %2499 = vmatpush1.msra.mxu0 0.0
    %2500 = vmatprep.subr.mxu0 0.0
    %2501 = vmatpush1.msra.mxu0 0.0
    %2502 = vmatprep.subr.mxu0 0.0
    %2503 = vmatpush1.msra.mxu0 0.0
    %2504 = vmatprep.subr.mxu0 0.0
    %2505 = vmatpush1.msra.mxu0 0.0
    %2506 = vmatprep.subr.mxu0 0.0
    %2507 = vmatpush1.msra.mxu0 0.0
    %2508 = vmatprep.subr.mxu0 0.0
    %2509 = vmatpush1.msra.mxu0 0.0
    %2510 = vmatprep.subr.mxu0 0.0
    %2511 = vmatpush1.msra.mxu0 0.0
    %2512 = vmatprep.subr.mxu0 0.0
    %2513 = vmatpush1.msra.mxu0 0.0
    %2514 = vmatprep.subr.mxu0 0.0
    %2515 = vmatpush1.msra.mxu0 0.0
    %2516 = vmatprep.subr.mxu0 0.0
    %2517 = vmatpush1.msra.mxu0 0.0
    %2518 = vmatprep.subr.mxu0 0.0
    %2519 = vmatpush1.msra.mxu0 0.0
    %2520 = vmatprep.subr.mxu0 0.0
    %2521 = vmatpush1.msra.mxu0 0.0
    %2522 = vmatprep.subr.mxu0 0.0
    %2523 = vmatpush1.msra.mxu0 0.0
    %2524 = vmatprep.subr.mxu0 0.0
    %2525 = vmatpush1.msra.mxu0 0.0
    %2526 = vmatprep.mubr.f32.mxu0 0.0
    %2527 = vmatmul.mubr.f32.gmra.mrb[0].mxu0 %v2457
    %v2528 = vpop.f32.mrb[0].mxu0
    %v2529 = vadd.f32 0.0, %v2528
    %v2530 = vpop.f32.mrb[0].mxu0
    %2531 = vdwg.mxu0
    %v2532 = vadd.f32 %v2444, %v2529
    %v2533 = vld [vmem:[%s2 + $0x1b8] sm:$0xff]
    %v2534 = vld [vmem:[%s2 + $0x1c0] sm:$0xff]
    %v2535 = vld [vmem:[%s2 + $0x1c8] sm:$0xff]
    %v2536 = vld [vmem:[%s2 + $0x1d0] sm:$0xff]
    %v2537 = vld [vmem:[%s2 + $0x1d8] sm:$0xff]
    %v2538 = vld [vmem:[%s2 + $0x1e0] sm:$0xff]
    %v2539 = vld [vmem:[%s2 + $0x1e8] sm:$0xff]
    %v2540 = vld [vmem:[%s2 + $0x1f0] sm:$0xff]
    %v2541 = vld [vmem:[%s2 + $0x1f8] sm:$0xff]
    %v2542 = vld [vmem:[%s2 + $0x200] sm:$0xff]
    %v2543 = vld [vmem:[%s2 + $0x208] sm:$0xf]
    %v2544 = vrot.slane %v2094, 2
    %v2545 = vsel %vm1899, %v2544, 0
    %v2548 = vsel %vm1903, %v2543, 0
    %2550 = vmatprep.subr.mxu0 0.0
    %2551 = vmatpush1.msra.mxu0 %v2533
    %2552 = vmatprep.subr.mxu0 0.0
    %2553 = vmatpush1.msra.mxu0 %v2534
    %2554 = vmatprep.subr.mxu0 0.0
    %2555 = vmatpush1.msra.mxu0 %v2535
    %2556 = vmatprep.subr.mxu0 0.0
    %2557 = vmatpush1.msra.mxu0 %v2536
    %2558 = vmatprep.subr.mxu0 0.0
    %2559 = vmatpush1.msra.mxu0 %v2537
    %2560 = vmatprep.subr.mxu0 0.0
    %2561 = vmatpush1.msra.mxu0 %v2538
    %2562 = vmatprep.subr.mxu0 0.0
    %2563 = vmatpush1.msra.mxu0 %v2539
    %2564 = vmatprep.subr.mxu0 0.0
    %2565 = vmatpush1.msra.mxu0 %v2540
    %2566 = vmatprep.subr.mxu0 0.0
    %2567 = vmatpush1.msra.mxu0 %v2541
    %2568 = vmatprep.subr.mxu0 0.0
    %2569 = vmatpush1.msra.mxu0 %v2542
    %2570 = vmatprep.subr.mxu0 0.0
    %2571 = vmatpush1.msra.mxu0 %v2548
    %2572 = vmatprep.subr.mxu0 0.0
    %2573 = vmatpush1.msra.mxu0 0.0
    %2574 = vmatprep.subr.mxu0 0.0
    %2575 = vmatpush1.msra.mxu0 0.0
    %2576 = vmatprep.subr.mxu0 0.0
    %2577 = vmatpush1.msra.mxu0 0.0
    %2578 = vmatprep.subr.mxu0 0.0
    %2579 = vmatpush1.msra.mxu0 0.0
    %2580 = vmatprep.subr.mxu0 0.0
    %2581 = vmatpush1.msra.mxu0 0.0
    %2582 = vmatprep.subr.mxu0 0.0
    %2583 = vmatpush1.msra.mxu0 0.0
    %2584 = vmatprep.subr.mxu0 0.0
    %2585 = vmatpush1.msra.mxu0 0.0
    %2586 = vmatprep.subr.mxu0 0.0
    %2587 = vmatpush1.msra.mxu0 0.0
    %2588 = vmatprep.subr.mxu0 0.0
    %2589 = vmatpush1.msra.mxu0 0.0
    %2590 = vmatprep.subr.mxu0 0.0
    %2591 = vmatpush1.msra.mxu0 0.0
    %2592 = vmatprep.subr.mxu0 0.0
    %2593 = vmatpush1.msra.mxu0 0.0
    %2594 = vmatprep.subr.mxu0 0.0
    %2595 = vmatpush1.msra.mxu0 0.0
    %2596 = vmatprep.subr.mxu0 0.0
    %2597 = vmatpush1.msra.mxu0 0.0
    %2598 = vmatprep.subr.mxu0 0.0
    %2599 = vmatpush1.msra.mxu0 0.0
    %2600 = vmatprep.subr.mxu0 0.0
    %2601 = vmatpush1.msra.mxu0 0.0
    %2602 = vmatprep.subr.mxu0 0.0
    %2603 = vmatpush1.msra.mxu0 0.0
    %2604 = vmatprep.subr.mxu0 0.0
    %2605 = vmatpush1.msra.mxu0 0.0
    %2606 = vmatprep.subr.mxu0 0.0
    %2607 = vmatpush1.msra.mxu0 0.0
    %2608 = vmatprep.subr.mxu0 0.0
    %2609 = vmatpush1.msra.mxu0 0.0
    %2610 = vmatprep.subr.mxu0 0.0
    %2611 = vmatpush1.msra.mxu0 0.0
    %2612 = vmatprep.subr.mxu0 0.0
    %2613 = vmatpush1.msra.mxu0 0.0
    %2614 = vmatprep.mubr.f32.mxu0 0.0
    %2615 = vmatmul.mubr.f32.gmra.mrb[0].mxu0 %v2545
    %v2616 = vpop.f32.mrb[0].mxu0
    %v2617 = vadd.f32 0.0, %v2616
    %v2618 = vpop.f32.mrb[0].mxu0
    %2619 = vdwg.mxu0
    %v2620 = vadd.f32 %v2532, %v2617
    %v2621 = vlaneseq
    %v2622 = vshrl.u32 %v2621, 7
    %v2623 = vsub.s32 0, %v2622
    %v2624 = vrot.slane %v2058, %v2623
    %v2625 = vadd.f32 %v2620, %v2624
    %vm2626 = vcmask 651264
    %v2627 = vsel %vm2626, %v2625, 0.0
    %v2628 = vrot.slane %v2627, 4
    %v2629 = vadd.f32 %v2627, %v2628
    %v2630 = vrot.slane %v2629, 2
    %v2631 = vadd.f32 %v2629, %v2630
    %v2632 = vrot.slane %v2631, 1
    %v2633 = vadd.f32 %v2631, %v2632
    %v2634 = vadd.f32 %v2633, 0.0
    %v2635 = vmul.f32 %v2625, %v2625
    %v2636 = vsel %vm2626, %v2635, 0.0
    %v2637 = vrot.slane %v2636, 4
    %v2638 = vadd.f32 %v2636, %v2637
    %v2639 = vrot.slane %v2638, 2
    %v2640 = vadd.f32 %v2638, %v2639
    %v2641 = vrot.slane %v2640, 1
    %v2642 = vadd.f32 %v2640, %v2641
    %v2643 = vadd.f32 %v2642, 0.0
    %v2644 = vsub.f32 %v1852, %v2062
    %v2645 = vmul.f32 %v2067, %v2644
    %v2646 = vmul.f32 %v2645, %v2072
    %v2647 = vadd.f32 %v2646, %v2077
    %v2648 = vsub.f32 0.0, %v2647
    %v2649 = vmul.f32 %v2648, 1.442695
    %v2650 = vpow.pop %v2649
    %v2651 = vadd.f32 %v2650, 1.0
    %v2652 = vrcp.pop %v2651
    %v2653 = vmul.f32 1.0, %v2652
    %v2654 = vsub.f32 %v1853, %v2062
    %v2655 = vmul.f32 %v2067, %v2654
    %v2656 = vmul.f32 %v2655, %v2072
    %v2657 = vadd.f32 %v2656, %v2077
    %v2658 = vsub.f32 0.0, %v2657
    %v2659 = vmul.f32 %v2658, 1.442695
    %v2660 = vpow.pop %v2659
    %v2661 = vadd.f32 %v2660, 1.0
    %v2662 = vrcp.pop %v2661
    %v2663 = vmul.f32 1.0, %v2662
    %v2665 = vsel %vm1899, %v2663, 0
    %2667 = vmatprep.subr.mxu0 0.0
    %2668 = vmatpush1.msra.mxu0 %v2106
    %2669 = vmatprep.subr.mxu0 0.0
    %2670 = vmatpush1.msra.mxu0 %v2107
    %2671 = vmatprep.subr.mxu0 0.0
    %2672 = vmatpush1.msra.mxu0 %v2108
    %2673 = vmatprep.subr.mxu0 0.0
    %2674 = vmatpush1.msra.mxu0 %v2109
    %2675 = vmatprep.subr.mxu0 0.0
    %2676 = vmatpush1.msra.mxu0 %v2110
    %2677 = vmatprep.subr.mxu0 0.0
    %2678 = vmatpush1.msra.mxu0 %v2111
    %2679 = vmatprep.subr.mxu0 0.0
    %2680 = vmatpush1.msra.mxu0 %v2112
    %2681 = vmatprep.subr.mxu0 0.0
    %2682 = vmatpush1.msra.mxu0 %v2113
    %2683 = vmatprep.subr.mxu0 0.0
    %2684 = vmatpush1.msra.mxu0 %v2114
    %2685 = vmatprep.subr.mxu0 0.0
    %2686 = vmatpush1.msra.mxu0 %v2115
    %2687 = vmatprep.subr.mxu0 0.0
    %2688 = vmatpush1.msra.mxu0 %v2121
    %2689 = vmatprep.subr.mxu0 0.0
    %2690 = vmatpush1.msra.mxu0 0.0
    %2691 = vmatprep.subr.mxu0 0.0
    %2692 = vmatpush1.msra.mxu0 0.0
    %2693 = vmatprep.subr.mxu0 0.0
    %2694 = vmatpush1.msra.mxu0 0.0
    %2695 = vmatprep.subr.mxu0 0.0
    %2696 = vmatpush1.msra.mxu0 0.0
    %2697 = vmatprep.subr.mxu0 0.0
    %2698 = vmatpush1.msra.mxu0 0.0
    %2699 = vmatprep.subr.mxu0 0.0
    %2700 = vmatpush1.msra.mxu0 0.0
    %2701 = vmatprep.subr.mxu0 0.0
    %2702 = vmatpush1.msra.mxu0 0.0
    %2703 = vmatprep.subr.mxu0 0.0
    %2704 = vmatpush1.msra.mxu0 0.0
    %2705 = vmatprep.subr.mxu0 0.0
    %2706 = vmatpush1.msra.mxu0 0.0
    %2707 = vmatprep.subr.mxu0 0.0
    %2708 = vmatpush1.msra.mxu0 0.0
    %2709 = vmatprep.subr.mxu0 0.0
    %2710 = vmatpush1.msra.mxu0 0.0
    %2711 = vmatprep.subr.mxu0 0.0
    %2712 = vmatpush1.msra.mxu0 0.0
    %2713 = vmatprep.subr.mxu0 0.0
    %2714 = vmatpush1.msra.mxu0 0.0
    %2715 = vmatprep.subr.mxu0 0.0
    %2716 = vmatpush1.msra.mxu0 0.0
    %2717 = vmatprep.subr.mxu0 0.0
    %2718 = vmatpush1.msra.mxu0 0.0
    %2719 = vmatprep.subr.mxu0 0.0
    %2720 = vmatpush1.msra.mxu0 0.0
    %2721 = vmatprep.subr.mxu0 0.0
    %2722 = vmatpush1.msra.mxu0 0.0
    %2723 = vmatprep.subr.mxu0 0.0
    %2724 = vmatpush1.msra.mxu0 0.0
    %2725 = vmatprep.subr.mxu0 0.0
    %2726 = vmatpush1.msra.mxu0 0.0
    %2727 = vmatprep.subr.mxu0 0.0
    %2728 = vmatpush1.msra.mxu0 0.0
    %2729 = vmatprep.subr.mxu0 0.0
    %2730 = vmatpush1.msra.mxu0 0.0
    %2731 = vmatprep.mubr.f32.mxu0 0.0
    %2732 = vmatmul.mubr.f32.gmra.mrb[0].mxu0 %v2665
    %v2733 = vpop.f32.mrb[0].mxu0
    %v2734 = vadd.f32 0.0, %v2733
    %v2735 = vpop.f32.mrb[0].mxu0
    %2736 = vdwg.mxu0
    %v2738 = vsel %vm1899, %v2653, 0
    %2740 = vmatprep.subr.mxu0 0.0
    %2741 = vmatpush1.msra.mxu0 %v2095
    %2742 = vmatprep.subr.mxu0 0.0
    %2743 = vmatpush1.msra.mxu0 %v2096
    %2744 = vmatprep.subr.mxu0 0.0
    %2745 = vmatpush1.msra.mxu0 %v2097
    %2746 = vmatprep.subr.mxu0 0.0
    %2747 = vmatpush1.msra.mxu0 %v2098
    %2748 = vmatprep.subr.mxu0 0.0
    %2749 = vmatpush1.msra.mxu0 %v2099
    %2750 = vmatprep.subr.mxu0 0.0
    %2751 = vmatpush1.msra.mxu0 %v2100
    %2752 = vmatprep.subr.mxu0 0.0
    %2753 = vmatpush1.msra.mxu0 %v2101
    %2754 = vmatprep.subr.mxu0 0.0
    %2755 = vmatpush1.msra.mxu0 %v2102
    %2756 = vmatprep.subr.mxu0 0.0
    %2757 = vmatpush1.msra.mxu0 %v2103
    %2758 = vmatprep.subr.mxu0 0.0
    %2759 = vmatpush1.msra.mxu0 %v2104
    %2760 = vmatprep.subr.mxu0 0.0
    %2761 = vmatpush1.msra.mxu0 %v2197
    %2762 = vmatprep.subr.mxu0 0.0
    %2763 = vmatpush1.msra.mxu0 0.0
    %2764 = vmatprep.subr.mxu0 0.0
    %2765 = vmatpush1.msra.mxu0 0.0
    %2766 = vmatprep.subr.mxu0 0.0
    %2767 = vmatpush1.msra.mxu0 0.0
    %2768 = vmatprep.subr.mxu0 0.0
    %2769 = vmatpush1.msra.mxu0 0.0
    %2770 = vmatprep.subr.mxu0 0.0
    %2771 = vmatpush1.msra.mxu0 0.0
    %2772 = vmatprep.subr.mxu0 0.0
    %2773 = vmatpush1.msra.mxu0 0.0
    %2774 = vmatprep.subr.mxu0 0.0
    %2775 = vmatpush1.msra.mxu0 0.0
    %2776 = vmatprep.subr.mxu0 0.0
    %2777 = vmatpush1.msra.mxu0 0.0
    %2778 = vmatprep.subr.mxu0 0.0
    %2779 = vmatpush1.msra.mxu0 0.0
    %2780 = vmatprep.subr.mxu0 0.0
    %2781 = vmatpush1.msra.mxu0 0.0
    %2782 = vmatprep.subr.mxu0 0.0
    %2783 = vmatpush1.msra.mxu0 0.0
    %2784 = vmatprep.subr.mxu0 0.0
    %2785 = vmatpush1.msra.mxu0 0.0
    %2786 = vmatprep.subr.mxu0 0.0
    %2787 = vmatpush1.msra.mxu0 0.0
    %2788 = vmatprep.subr.mxu0 0.0
    %2789 = vmatpush1.msra.mxu0 0.0
    %2790 = vmatprep.subr.mxu0 0.0
    %2791 = vmatpush1.msra.mxu0 0.0
    %2792 = vmatprep.subr.mxu0 0.0
    %2793 = vmatpush1.msra.mxu0 0.0
    %2794 = vmatprep.subr.mxu0 0.0
    %2795 = vmatpush1.msra.mxu0 0.0
    %2796 = vmatprep.subr.mxu0 0.0
    %2797 = vmatpush1.msra.mxu0 0.0
    %2798 = vmatprep.subr.mxu0 0.0
    %2799 = vmatpush1.msra.mxu0 0.0
    %2800 = vmatprep.subr.mxu0 0.0
    %2801 = vmatpush1.msra.mxu0 0.0
    %2802 = vmatprep.subr.mxu0 0.0
    %2803 = vmatpush1.msra.mxu0 0.0
    %2804 = vmatprep.mubr.f32.mxu0 0.0
    %2805 = vmatmul.mubr.f32.gmra.mrb[0].mxu0 %v2738
    %v2806 = vpop.f32.mrb[0].mxu0
    %v2807 = vadd.f32 %v2734, %v2806
    %v2808 = vpop.f32.mrb[0].mxu0
    %2809 = vdwg.mxu0
    %v2810 = vrot.slane %v2653, 1
    %v2811 = vsel %vm1899, %v2810, 0
    %2813 = vmatprep.subr.mxu0 0.0
    %2814 = vmatpush1.msra.mxu0 %v2269
    %2815 = vmatprep.subr.mxu0 0.0
    %2816 = vmatpush1.msra.mxu0 %v2270
    %2817 = vmatprep.subr.mxu0 0.0
    %2818 = vmatpush1.msra.mxu0 %v2271
    %2819 = vmatprep.subr.mxu0 0.0
    %2820 = vmatpush1.msra.mxu0 %v2272
    %2821 = vmatprep.subr.mxu0 0.0
    %2822 = vmatpush1.msra.mxu0 %v2273
    %2823 = vmatprep.subr.mxu0 0.0
    %2824 = vmatpush1.msra.mxu0 %v2274
    %2825 = vmatprep.subr.mxu0 0.0
    %2826 = vmatpush1.msra.mxu0 %v2275
    %2827 = vmatprep.subr.mxu0 0.0
    %2828 = vmatpush1.msra.mxu0 %v2276
    %2829 = vmatprep.subr.mxu0 0.0
    %2830 = vmatpush1.msra.mxu0 %v2277
    %2831 = vmatprep.subr.mxu0 0.0
    %2832 = vmatpush1.msra.mxu0 %v2278
    %2833 = vmatprep.subr.mxu0 0.0
    %2834 = vmatpush1.msra.mxu0 %v2284
    %2835 = vmatprep.subr.mxu0 0.0
    %2836 = vmatpush1.msra.mxu0 0.0
    %2837 = vmatprep.subr.mxu0 0.0
    %2838 = vmatpush1.msra.mxu0 0.0
    %2839 = vmatprep.subr.mxu0 0.0
    %2840 = vmatpush1.msra.mxu0 0.0
    %2841 = vmatprep.subr.mxu0 0.0
    %2842 = vmatpush1.msra.mxu0 0.0
    %2843 = vmatprep.subr.mxu0 0.0
    %2844 = vmatpush1.msra.mxu0 0.0
    %2845 = vmatprep.subr.mxu0 0.0
    %2846 = vmatpush1.msra.mxu0 0.0
    %2847 = vmatprep.subr.mxu0 0.0
    %2848 = vmatpush1.msra.mxu0 0.0
    %2849 = vmatprep.subr.mxu0 0.0
    %2850 = vmatpush1.msra.mxu0 0.0
    %2851 = vmatprep.subr.mxu0 0.0
    %2852 = vmatpush1.msra.mxu0 0.0
    %2853 = vmatprep.subr.mxu0 0.0
    %2854 = vmatpush1.msra.mxu0 0.0
    %2855 = vmatprep.subr.mxu0 0.0
    %2856 = vmatpush1.msra.mxu0 0.0
    %2857 = vmatprep.subr.mxu0 0.0
    %2858 = vmatpush1.msra.mxu0 0.0
    %2859 = vmatprep.subr.mxu0 0.0
    %2860 = vmatpush1.msra.mxu0 0.0
    %2861 = vmatprep.subr.mxu0 0.0
    %2862 = vmatpush1.msra.mxu0 0.0
    %2863 = vmatprep.subr.mxu0 0.0
    %2864 = vmatpush1.msra.mxu0 0.0
    %2865 = vmatprep.subr.mxu0 0.0
    %2866 = vmatpush1.msra.mxu0 0.0
    %2867 = vmatprep.subr.mxu0 0.0
    %2868 = vmatpush1.msra.mxu0 0.0
    %2869 = vmatprep.subr.mxu0 0.0
    %2870 = vmatpush1.msra.mxu0 0.0
    %2871 = vmatprep.subr.mxu0 0.0
    %2872 = vmatpush1.msra.mxu0 0.0
    %2873 = vmatprep.subr.mxu0 0.0
    %2874 = vmatpush1.msra.mxu0 0.0
    %2875 = vmatprep.subr.mxu0 0.0
    %2876 = vmatpush1.msra.mxu0 0.0
    %2877 = vmatprep.mubr.f32.mxu0 0.0
    %2878 = vmatmul.mubr.f32.gmra.mrb[0].mxu0 %v2811
    %v2879 = vpop.f32.mrb[0].mxu0
    %v2880 = vadd.f32 0.0, %v2879
    %v2881 = vpop.f32.mrb[0].mxu0
    %2882 = vdwg.mxu0
    %v2883 = vadd.f32 %v2807, %v2880
    %v2884 = vrot.slane %v2663, 1
    %v2885 = vsel %vm1899, %v2884, 0
    %2887 = vmatprep.subr.mxu0 0.0
    %2888 = vmatpush1.msra.mxu0 %v2357
    %2889 = vmatprep.subr.mxu0 0.0
    %2890 = vmatpush1.msra.mxu0 %v2358
    %2891 = vmatprep.subr.mxu0 0.0
    %2892 = vmatpush1.msra.mxu0 %v2359
    %2893 = vmatprep.subr.mxu0 0.0
    %2894 = vmatpush1.msra.mxu0 %v2360
    %2895 = vmatprep.subr.mxu0 0.0
    %2896 = vmatpush1.msra.mxu0 %v2361
    %2897 = vmatprep.subr.mxu0 0.0
    %2898 = vmatpush1.msra.mxu0 %v2362
    %2899 = vmatprep.subr.mxu0 0.0
    %2900 = vmatpush1.msra.mxu0 %v2363
    %2901 = vmatprep.subr.mxu0 0.0
    %2902 = vmatpush1.msra.mxu0 %v2364
    %2903 = vmatprep.subr.mxu0 0.0
    %2904 = vmatpush1.msra.mxu0 %v2365
    %2905 = vmatprep.subr.mxu0 0.0
    %2906 = vmatpush1.msra.mxu0 %v2366
    %2907 = vmatprep.subr.mxu0 0.0
    %2908 = vmatpush1.msra.mxu0 %v2372
    %2909 = vmatprep.subr.mxu0 0.0
    %2910 = vmatpush1.msra.mxu0 0.0
    %2911 = vmatprep.subr.mxu0 0.0
    %2912 = vmatpush1.msra.mxu0 0.0
    %2913 = vmatprep.subr.mxu0 0.0
    %2914 = vmatpush1.msra.mxu0 0.0
    %2915 = vmatprep.subr.mxu0 0.0
    %2916 = vmatpush1.msra.mxu0 0.0
    %2917 = vmatprep.subr.mxu0 0.0
    %2918 = vmatpush1.msra.mxu0 0.0
    %2919 = vmatprep.subr.mxu0 0.0
    %2920 = vmatpush1.msra.mxu0 0.0
    %2921 = vmatprep.subr.mxu0 0.0
    %2922 = vmatpush1.msra.mxu0 0.0
    %2923 = vmatprep.subr.mxu0 0.0
    %2924 = vmatpush1.msra.mxu0 0.0
    %2925 = vmatprep.subr.mxu0 0.0
    %2926 = vmatpush1.msra.mxu0 0.0
    %2927 = vmatprep.subr.mxu0 0.0
    %2928 = vmatpush1.msra.mxu0 0.0
    %2929 = vmatprep.subr.mxu0 0.0
    %2930 = vmatpush1.msra.mxu0 0.0
    %2931 = vmatprep.subr.mxu0 0.0
    %2932 = vmatpush1.msra.mxu0 0.0
    %2933 = vmatprep.subr.mxu0 0.0
    %2934 = vmatpush1.msra.mxu0 0.0
    %2935 = vmatprep.subr.mxu0 0.0
    %2936 = vmatpush1.msra.mxu0 0.0
    %2937 = vmatprep.subr.mxu0 0.0
    %2938 = vmatpush1.msra.mxu0 0.0
    %2939 = vmatprep.subr.mxu0 0.0
    %2940 = vmatpush1.msra.mxu0 0.0
    %2941 = vmatprep.subr.mxu0 0.0
    %2942 = vmatpush1.msra.mxu0 0.0
    %2943 = vmatprep.subr.mxu0 0.0
    %2944 = vmatpush1.msra.mxu0 0.0
    %2945 = vmatprep.subr.mxu0 0.0
    %2946 = vmatpush1.msra.mxu0 0.0
    %2947 = vmatprep.subr.mxu0 0.0
    %2948 = vmatpush1.msra.mxu0 0.0
    %2949 = vmatprep.subr.mxu0 0.0
    %2950 = vmatpush1.msra.mxu0 0.0
    %2951 = vmatprep.mubr.f32.mxu0 0.0
    %2952 = vmatmul.mubr.f32.gmra.mrb[0].mxu0 %v2885
    %v2953 = vpop.f32.mrb[0].mxu0
    %v2954 = vadd.f32 0.0, %v2953
    %v2955 = vpop.f32.mrb[0].mxu0
    %2956 = vdwg.mxu0
    %v2957 = vadd.f32 %v2883, %v2954
    %v2958 = vrot.slane %v2653, 2
    %v2959 = vsel %vm1899, %v2958, 0
    %2961 = vmatprep.subr.mxu0 0.0
    %2962 = vmatpush1.msra.mxu0 %v2445
    %2963 = vmatprep.subr.mxu0 0.0
    %2964 = vmatpush1.msra.mxu0 %v2446
    %2965 = vmatprep.subr.mxu0 0.0
    %2966 = vmatpush1.msra.mxu0 %v2447
    %2967 = vmatprep.subr.mxu0 0.0
    %2968 = vmatpush1.msra.mxu0 %v2448
    %2969 = vmatprep.subr.mxu0 0.0
    %2970 = vmatpush1.msra.mxu0 %v2449
    %2971 = vmatprep.subr.mxu0 0.0
    %2972 = vmatpush1.msra.mxu0 %v2450
    %2973 = vmatprep.subr.mxu0 0.0
    %2974 = vmatpush1.msra.mxu0 %v2451
    %2975 = vmatprep.subr.mxu0 0.0
    %2976 = vmatpush1.msra.mxu0 %v2452
    %2977 = vmatprep.subr.mxu0 0.0
    %2978 = vmatpush1.msra.mxu0 %v2453
    %2979 = vmatprep.subr.mxu0 0.0
    %2980 = vmatpush1.msra.mxu0 %v2454
    %2981 = vmatprep.subr.mxu0 0.0
    %2982 = vmatpush1.msra.mxu0 %v2460
    %2983 = vmatprep.subr.mxu0 0.0
    %2984 = vmatpush1.msra.mxu0 0.0
    %2985 = vmatprep.subr.mxu0 0.0
    %2986 = vmatpush1.msra.mxu0 0.0
    %2987 = vmatprep.subr.mxu0 0.0
    %2988 = vmatpush1.msra.mxu0 0.0
    %2989 = vmatprep.subr.mxu0 0.0
    %2990 = vmatpush1.msra.mxu0 0.0
    %2991 = vmatprep.subr.mxu0 0.0
    %2992 = vmatpush1.msra.mxu0 0.0
    %2993 = vmatprep.subr.mxu0 0.0
    %2994 = vmatpush1.msra.mxu0 0.0
    %2995 = vmatprep.subr.mxu0 0.0
    %2996 = vmatpush1.msra.mxu0 0.0
    %2997 = vmatprep.subr.mxu0 0.0
    %2998 = vmatpush1.msra.mxu0 0.0
    %2999 = vmatprep.subr.mxu0 0.0
    %3000 = vmatpush1.msra.mxu0 0.0
    %3001 = vmatprep.subr.mxu0 0.0
    %3002 = vmatpush1.msra.mxu0 0.0
    %3003 = vmatprep.subr.mxu0 0.0
    %3004 = vmatpush1.msra.mxu0 0.0
    %3005 = vmatprep.subr.mxu0 0.0
    %3006 = vmatpush1.msra.mxu0 0.0
    %3007 = vmatprep.subr.mxu0 0.0
    %3008 = vmatpush1.msra.mxu0 0.0
    %3009 = vmatprep.subr.mxu0 0.0
    %3010 = vmatpush1.msra.mxu0 0.0
    %3011 = vmatprep.subr.mxu0 0.0
    %3012 = vmatpush1.msra.mxu0 0.0
    %3013 = vmatprep.subr.mxu0 0.0
    %3014 = vmatpush1.msra.mxu0 0.0
    %3015 = vmatprep.subr.mxu0 0.0
    %3016 = vmatpush1.msra.mxu0 0.0
    %3017 = vmatprep.subr.mxu0 0.0
    %3018 = vmatpush1.msra.mxu0 0.0
    %3019 = vmatprep.subr.mxu0 0.0
    %3020 = vmatpush1.msra.mxu0 0.0
    %3021 = vmatprep.subr.mxu0 0.0
    %3022 = vmatpush1.msra.mxu0 0.0
    %3023 = vmatprep.subr.mxu0 0.0
    %3024 = vmatpush1.msra.mxu0 0.0
    %3025 = vmatprep.mubr.f32.mxu0 0.0
    %3026 = vmatmul.mubr.f32.gmra.mrb[0].mxu0 %v2959
    %v3027 = vpop.f32.mrb[0].mxu0
    %v3028 = vadd.f32 0.0, %v3027
    %v3029 = vpop.f32.mrb[0].mxu0
    %3030 = vdwg.mxu0
    %v3031 = vadd.f32 %v2957, %v3028
    %v3032 = vrot.slane %v2663, 2
    %v3033 = vsel %vm1899, %v3032, 0
    %3035 = vmatprep.subr.mxu0 0.0
    %3036 = vmatpush1.msra.mxu0 %v2533
    %3037 = vmatprep.subr.mxu0 0.0
    %3038 = vmatpush1.msra.mxu0 %v2534
    %3039 = vmatprep.subr.mxu0 0.0
    %3040 = vmatpush1.msra.mxu0 %v2535
    %3041 = vmatprep.subr.mxu0 0.0
    %3042 = vmatpush1.msra.mxu0 %v2536
    %3043 = vmatprep.subr.mxu0 0.0
    %3044 = vmatpush1.msra.mxu0 %v2537
    %3045 = vmatprep.subr.mxu0 0.0
    %3046 = vmatpush1.msra.mxu0 %v2538
    %3047 = vmatprep.subr.mxu0 0.0
    %3048 = vmatpush1.msra.mxu0 %v2539
    %3049 = vmatprep.subr.mxu0 0.0
    %3050 = vmatpush1.msra.mxu0 %v2540
    %3051 = vmatprep.subr.mxu0 0.0
    %3052 = vmatpush1.msra.mxu0 %v2541
    %3053 = vmatprep.subr.mxu0 0.0
    %3054 = vmatpush1.msra.mxu0 %v2542
    %3055 = vmatprep.subr.mxu0 0.0
    %3056 = vmatpush1.msra.mxu0 %v2548
    %3057 = vmatprep.subr.mxu0 0.0
    %3058 = vmatpush1.msra.mxu0 0.0
    %3059 = vmatprep.subr.mxu0 0.0
    %3060 = vmatpush1.msra.mxu0 0.0
    %3061 = vmatprep.subr.mxu0 0.0
    %3062 = vmatpush1.msra.mxu0 0.0
    %3063 = vmatprep.subr.mxu0 0.0
    %3064 = vmatpush1.msra.mxu0 0.0
    %3065 = vmatprep.subr.mxu0 0.0
    %3066 = vmatpush1.msra.mxu0 0.0
    %3067 = vmatprep.subr.mxu0 0.0
    %3068 = vmatpush1.msra.mxu0 0.0
    %3069 = vmatprep.subr.mxu0 0.0
    %3070 = vmatpush1.msra.mxu0 0.0
    %3071 = vmatprep.subr.mxu0 0.0
    %3072 = vmatpush1.msra.mxu0 0.0
    %3073 = vmatprep.subr.mxu0 0.0
    %3074 = vmatpush1.msra.mxu0 0.0
    %3075 = vmatprep.subr.mxu0 0.0
    %3076 = vmatpush1.msra.mxu0 0.0
    %3077 = vmatprep.subr.mxu0 0.0
    %3078 = vmatpush1.msra.mxu0 0.0
    %3079 = vmatprep.subr.mxu0 0.0
    %3080 = vmatpush1.msra.mxu0 0.0
    %3081 = vmatprep.subr.mxu0 0.0
    %3082 = vmatpush1.msra.mxu0 0.0
    %3083 = vmatprep.subr.mxu0 0.0
    %3084 = vmatpush1.msra.mxu0 0.0
    %3085 = vmatprep.subr.mxu0 0.0
    %3086 = vmatpush1.msra.mxu0 0.0
    %3087 = vmatprep.subr.mxu0 0.0
    %3088 = vmatpush1.msra.mxu0 0.0
    %3089 = vmatprep.subr.mxu0 0.0
    %3090 = vmatpush1.msra.mxu0 0.0
    %3091 = vmatprep.subr.mxu0 0.0
    %3092 = vmatpush1.msra.mxu0 0.0
    %3093 = vmatprep.subr.mxu0 0.0
    %3094 = vmatpush1.msra.mxu0 0.0
    %3095 = vmatprep.subr.mxu0 0.0
    %3096 = vmatpush1.msra.mxu0 0.0
    %3097 = vmatprep.subr.mxu0 0.0
    %3098 = vmatpush1.msra.mxu0 0.0
    %3099 = vmatprep.mubr.f32.mxu0 0.0
    %3100 = vmatmul.mubr.f32.gmra.mrb[0].mxu0 %v3033
    %v3101 = vpop.f32.mrb[0].mxu0
    %v3102 = vadd.f32 0.0, %v3101
    %v3103 = vpop.f32.mrb[0].mxu0
    %3104 = vdwg.mxu0
    %v3105 = vadd.f32 %v3031, %v3102
    %v3106 = vadd.f32 %v3105, %v2624
    %v3107 = vsel %vm2626, %v3106, 0.0
    %v3108 = vrot.slane %v3107, 4
    %v3109 = vadd.f32 %v3107, %v3108
    %v3110 = vrot.slane %v3109, 2
    %v3111 = vadd.f32 %v3109, %v3110
    %v3112 = vrot.slane %v3111, 1
    %v3113 = vadd.f32 %v3111, %v3112
    %v3114 = vadd.f32 %v2634, %v3113
    %v3115 = vmul.f32 %v3106, %v3106
    %v3116 = vsel %vm2626, %v3115, 0.0
    %v3117 = vrot.slane %v3116, 4
    %v3118 = vadd.f32 %v3116, %v3117
    %v3119 = vrot.slane %v3118, 2
    %v3120 = vadd.f32 %v3118, %v3119
    %v3121 = vrot.slane %v3120, 1
    %v3122 = vadd.f32 %v3120, %v3121
    %v3123 = vadd.f32 %v2643, %v3122
    %v3124 = vld [vmem:[%s2 + $0x210] sm:$0xff]
    %v3125 = vld [vmem:[%s2 + $0x218] sm:$0xff]
    %v3126 = vld [vmem:[%s2 + $0x220] sm:$0xff]
    %v3127 = vld [vmem:[%s2 + $0x228] sm:$0xff]
    %v3128 = vld [vmem:[%s2 + $0x230] sm:$0xff]
    %v3129 = vld [vmem:[%s2 + $0x238] sm:$0xff]
    %v3130 = vld [vmem:[%s2 + $0x240] sm:$0xff]
    %v3131 = vld [vmem:[%s2 + $0x248] sm:$0xff]
    %v3132 = vld [vmem:[%s2 + $0x250] sm:$0xff]
    %v3133 = vld [vmem:[%s2 + $0x258] sm:$0xff]
    %vm3134 = vcmask 654336
    %v3136 = vsel %vm3134, %v3114, 0
    %3138 = vmatprep.subr.mxu0 0.0
    %3139 = vmatpush1.msra.mxu0 %v3124
    %3140 = vmatprep.subr.mxu0 0.0
    %3141 = vmatpush1.msra.mxu0 %v3125
    %3142 = vmatprep.subr.mxu0 0.0
    %3143 = vmatpush1.msra.mxu0 %v3126
    %3144 = vmatprep.subr.mxu0 0.0
    %3145 = vmatpush1.msra.mxu0 %v3127
    %3146 = vmatprep.subr.mxu0 0.0
    %3147 = vmatpush1.msra.mxu0 %v3128
    %3148 = vmatprep.subr.mxu0 0.0
    %3149 = vmatpush1.msra.mxu0 %v3129
    %3150 = vmatprep.subr.mxu0 0.0
    %3151 = vmatpush1.msra.mxu0 %v3130
    %3152 = vmatprep.subr.mxu0 0.0
    %3153 = vmatpush1.msra.mxu0 %v3131
    %3154 = vmatprep.subr.mxu0 0.0
    %3155 = vmatpush1.msra.mxu0 %v3132
    %3156 = vmatprep.subr.mxu0 0.0
    %3157 = vmatpush1.msra.mxu0 %v3133
    %3158 = vmatprep.subr.mxu0 0.0
    %3159 = vmatpush1.msra.mxu0 0.0
    %3160 = vmatprep.subr.mxu0 0.0
    %3161 = vmatpush1.msra.mxu0 0.0
    %3162 = vmatprep.subr.mxu0 0.0
    %3163 = vmatpush1.msra.mxu0 0.0
    %3164 = vmatprep.subr.mxu0 0.0
    %3165 = vmatpush1.msra.mxu0 0.0
    %3166 = vmatprep.subr.mxu0 0.0
    %3167 = vmatpush1.msra.mxu0 0.0
    %3168 = vmatprep.subr.mxu0 0.0
    %3169 = vmatpush1.msra.mxu0 0.0
    %3170 = vmatprep.subr.mxu0 0.0
    %3171 = vmatpush1.msra.mxu0 0.0
    %3172 = vmatprep.subr.mxu0 0.0
    %3173 = vmatpush1.msra.mxu0 0.0
    %3174 = vmatprep.subr.mxu0 0.0
    %3175 = vmatpush1.msra.mxu0 0.0
    %3176 = vmatprep.subr.mxu0 0.0
    %3177 = vmatpush1.msra.mxu0 0.0
    %3178 = vmatprep.subr.mxu0 0.0
    %3179 = vmatpush1.msra.mxu0 0.0
    %3180 = vmatprep.subr.mxu0 0.0
    %3181 = vmatpush1.msra.mxu0 0.0
    %3182 = vmatprep.subr.mxu0 0.0
    %3183 = vmatpush1.msra.mxu0 0.0
    %3184 = vmatprep.subr.mxu0 0.0
    %3185 = vmatpush1.msra.mxu0 0.0
    %3186 = vmatprep.subr.mxu0 0.0
    %3187 = vmatpush1.msra.mxu0 0.0
    %3188 = vmatprep.subr.mxu0 0.0
    %3189 = vmatpush1.msra.mxu0 0.0
    %3190 = vmatprep.subr.mxu0 0.0
    %3191 = vmatpush1.msra.mxu0 0.0
    %3192 = vmatprep.subr.mxu0 0.0
    %3193 = vmatpush1.msra.mxu0 0.0
    %3194 = vmatprep.subr.mxu0 0.0
    %3195 = vmatpush1.msra.mxu0 0.0
    %3196 = vmatprep.subr.mxu0 0.0
    %3197 = vmatpush1.msra.mxu0 0.0
    %3198 = vmatprep.subr.mxu0 0.0
    %3199 = vmatpush1.msra.mxu0 0.0
    %3200 = vmatprep.subr.mxu0 0.0
    %3201 = vmatpush1.msra.mxu0 0.0
    %3202 = vmatprep.mubr.f32.mxu0 0.0
    %3203 = vmatmul.mubr.f32.gmra.mrb[0].mxu0 %v3136
    %v3204 = vpop.f32.mrb[0].mxu0
    %v3205 = vadd.f32 0.0, %v3204
    %v3206 = vpop.f32.mrb[0].mxu0
    %3207 = vdwg.mxu0
    %v3208 = vmul.f32 %v3205, 0.5
    %v3210 = vsel %vm3134, %v3123, 0
    %3212 = vmatprep.subr.mxu0 0.0
    %3213 = vmatpush1.msra.mxu0 %v3124
    %3214 = vmatprep.subr.mxu0 0.0
    %3215 = vmatpush1.msra.mxu0 %v3125
    %3216 = vmatprep.subr.mxu0 0.0
    %3217 = vmatpush1.msra.mxu0 %v3126
    %3218 = vmatprep.subr.mxu0 0.0
    %3219 = vmatpush1.msra.mxu0 %v3127
    %3220 = vmatprep.subr.mxu0 0.0
    %3221 = vmatpush1.msra.mxu0 %v3128
    %3222 = vmatprep.subr.mxu0 0.0
    %3223 = vmatpush1.msra.mxu0 %v3129
    %3224 = vmatprep.subr.mxu0 0.0
    %3225 = vmatpush1.msra.mxu0 %v3130
    %3226 = vmatprep.subr.mxu0 0.0
    %3227 = vmatpush1.msra.mxu0 %v3131
    %3228 = vmatprep.subr.mxu0 0.0
    %3229 = vmatpush1.msra.mxu0 %v3132
    %3230 = vmatprep.subr.mxu0 0.0
    %3231 = vmatpush1.msra.mxu0 %v3133
    %3232 = vmatprep.subr.mxu0 0.0
    %3233 = vmatpush1.msra.mxu0 0.0
    %3234 = vmatprep.subr.mxu0 0.0
    %3235 = vmatpush1.msra.mxu0 0.0
    %3236 = vmatprep.subr.mxu0 0.0
    %3237 = vmatpush1.msra.mxu0 0.0
    %3238 = vmatprep.subr.mxu0 0.0
    %3239 = vmatpush1.msra.mxu0 0.0
    %3240 = vmatprep.subr.mxu0 0.0
    %3241 = vmatpush1.msra.mxu0 0.0
    %3242 = vmatprep.subr.mxu0 0.0
    %3243 = vmatpush1.msra.mxu0 0.0
    %3244 = vmatprep.subr.mxu0 0.0
    %3245 = vmatpush1.msra.mxu0 0.0
    %3246 = vmatprep.subr.mxu0 0.0
    %3247 = vmatpush1.msra.mxu0 0.0
    %3248 = vmatprep.subr.mxu0 0.0
    %3249 = vmatpush1.msra.mxu0 0.0
    %3250 = vmatprep.subr.mxu0 0.0
    %3251 = vmatpush1.msra.mxu0 0.0
    %3252 = vmatprep.subr.mxu0 0.0
    %3253 = vmatpush1.msra.mxu0 0.0
    %3254 = vmatprep.subr.mxu0 0.0
    %3255 = vmatpush1.msra.mxu0 0.0
    %3256 = vmatprep.subr.mxu0 0.0
    %3257 = vmatpush1.msra.mxu0 0.0
    %3258 = vmatprep.subr.mxu0 0.0
    %3259 = vmatpush1.msra.mxu0 0.0
    %3260 = vmatprep.subr.mxu0 0.0
    %3261 = vmatpush1.msra.mxu0 0.0
    %3262 = vmatprep.subr.mxu0 0.0
    %3263 = vmatpush1.msra.mxu0 0.0
    %3264 = vmatprep.subr.mxu0 0.0
    %3265 = vmatpush1.msra.mxu0 0.0
    %3266 = vmatprep.subr.mxu0 0.0
    %3267 = vmatpush1.msra.mxu0 0.0
    %3268 = vmatprep.subr.mxu0 0.0
    %3269 = vmatpush1.msra.mxu0 0.0
    %3270 = vmatprep.subr.mxu0 0.0
    %3271 = vmatpush1.msra.mxu0 0.0
    %3272 = vmatprep.subr.mxu0 0.0
    %3273 = vmatpush1.msra.mxu0 0.0
    %3274 = vmatprep.subr.mxu0 0.0
    %3275 = vmatpush1.msra.mxu0 0.0
    %3276 = vmatprep.mubr.f32.mxu0 0.0
    %3277 = vmatmul.mubr.f32.gmra.mrb[0].mxu0 %v3210
    %v3278 = vpop.f32.mrb[0].mxu0
    %v3279 = vadd.f32 0.0, %v3278
    %v3280 = vpop.f32.mrb[0].mxu0
    %3281 = vdwg.mxu0
    %v3282 = vmul.f32 %v3279, 0.5
    %v3283 = vmul.f32 %v3208, %v3208
    %v3284 = vsub.f32 %v3282, %v3283
    %v3285 = vadd.f32 %v3284, 1e-05
    %v3286 = vrsqrt.pop %v3285
    %v3287 = vld [vmem:[%s2 + $0x261] sm:$0x1]
    %v3288 = vld [vmem:[%s2 + $0x262] sm:$0x1]
    %v3289 = vld [vmem:[%s3 + $0x290] sm:$0x1]
    %v3290 = vlaneseq
    %v3291 = vshrl.u32 %v3290, 7
    %v3292 = vsub.s32 0, %v3291
    %v3293 = vrot.slane %v3208, %v3292
    %v3294 = vsub.f32 %v2625, %v3293
    %v3295 = vlaneseq
    %v3296 = vshrl.u32 %v3295, 7
    %v3297 = vsub.s32 0, %v3296
    %v3298 = vrot.slane %v3287, %v3297
    %v3299 = vmul.f32 %v3298, %v3294
    %v3300 = vlaneseq
    %v3301 = vshrl.u32 %v3300, 7
    %v3302 = vsub.s32 0, %v3301
    %v3303 = vrot.slane %v3286, %v3302
    %v3304 = vmul.f32 %v3299, %v3303
    %v3305 = vlaneseq
    %v3306 = vshrl.u32 %v3305, 7
    %v3307 = vsub.s32 0, %v3306
    %v3308 = vrot.slane %v3288, %v3307
    %v3309 = vadd.f32 %v3304, %v3308
    %v3310 = vsub.f32 0.0, %v3309
    %v3311 = vmul.f32 %v3310, 1.442695
    %v3312 = vpow.pop %v3311
    %v3313 = vadd.f32 %v3312, 1.0
    %v3314 = vrcp.pop %v3313
    %v3315 = vmul.f32 1.0, %v3314
    %v3316 = vld [vmem:[%s3] sm:$0xff]
    %v3317 = vld [vmem:[%s3 + $0x8] sm:$0xff]
    %v3318 = vld [vmem:[%s3 + $0x10] sm:$0xff]
    %v3319 = vld [vmem:[%s3 + $0x18] sm:$0xff]
    %v3320 = vld [vmem:[%s3 + $0x20] sm:$0xff]
    %v3321 = vld [vmem:[%s3 + $0x28] sm:$0xff]
    %v3322 = vld [vmem:[%s3 + $0x30] sm:$0xff]
    %v3323 = vld [vmem:[%s3 + $0x38] sm:$0xff]
    %v3324 = vld [vmem:[%s3 + $0x40] sm:$0xff]
    %v3325 = vld [vmem:[%s3 + $0x48] sm:$0xff]
    %v3327 = vsel %vm3134, %v3315, 0
    %3329 = vmatprep.subr.mxu0 0.0
    %3330 = vmatpush1.msra.mxu0 %v3316
    %3331 = vmatprep.subr.mxu0 0.0
    %3332 = vmatpush1.msra.mxu0 %v3317
    %3333 = vmatprep.subr.mxu0 0.0
    %3334 = vmatpush1.msra.mxu0 %v3318
    %3335 = vmatprep.subr.mxu0 0.0
    %3336 = vmatpush1.msra.mxu0 %v3319
    %3337 = vmatprep.subr.mxu0 0.0
    %3338 = vmatpush1.msra.mxu0 %v3320
    %3339 = vmatprep.subr.mxu0 0.0
    %3340 = vmatpush1.msra.mxu0 %v3321
    %3341 = vmatprep.subr.mxu0 0.0
    %3342 = vmatpush1.msra.mxu0 %v3322
    %3343 = vmatprep.subr.mxu0 0.0
    %3344 = vmatpush1.msra.mxu0 %v3323
    %3345 = vmatprep.subr.mxu0 0.0
    %3346 = vmatpush1.msra.mxu0 %v3324
    %3347 = vmatprep.subr.mxu0 0.0
    %3348 = vmatpush1.msra.mxu0 %v3325
    %3349 = vmatprep.subr.mxu0 0.0
    %3350 = vmatpush1.msra.mxu0 0.0
    %3351 = vmatprep.subr.mxu0 0.0
    %3352 = vmatpush1.msra.mxu0 0.0
    %3353 = vmatprep.subr.mxu0 0.0
    %3354 = vmatpush1.msra.mxu0 0.0
    %3355 = vmatprep.subr.mxu0 0.0
    %3356 = vmatpush1.msra.mxu0 0.0
    %3357 = vmatprep.subr.mxu0 0.0
    %3358 = vmatpush1.msra.mxu0 0.0
    %3359 = vmatprep.subr.mxu0 0.0
    %3360 = vmatpush1.msra.mxu0 0.0
    %3361 = vmatprep.subr.mxu0 0.0
    %3362 = vmatpush1.msra.mxu0 0.0
    %3363 = vmatprep.subr.mxu0 0.0
    %3364 = vmatpush1.msra.mxu0 0.0
    %3365 = vmatprep.subr.mxu0 0.0
    %3366 = vmatpush1.msra.mxu0 0.0
    %3367 = vmatprep.subr.mxu0 0.0
    %3368 = vmatpush1.msra.mxu0 0.0
    %3369 = vmatprep.subr.mxu0 0.0
    %3370 = vmatpush1.msra.mxu0 0.0
    %3371 = vmatprep.subr.mxu0 0.0
    %3372 = vmatpush1.msra.mxu0 0.0
    %3373 = vmatprep.subr.mxu0 0.0
    %3374 = vmatpush1.msra.mxu0 0.0
    %3375 = vmatprep.subr.mxu0 0.0
    %3376 = vmatpush1.msra.mxu0 0.0
    %3377 = vmatprep.subr.mxu0 0.0
    %3378 = vmatpush1.msra.mxu0 0.0
    %3379 = vmatprep.subr.mxu0 0.0
    %3380 = vmatpush1.msra.mxu0 0.0
    %3381 = vmatprep.subr.mxu0 0.0
    %3382 = vmatpush1.msra.mxu0 0.0
    %3383 = vmatprep.subr.mxu0 0.0
    %3384 = vmatpush1.msra.mxu0 0.0
    %3385 = vmatprep.subr.mxu0 0.0
    %3386 = vmatpush1.msra.mxu0 0.0
    %3387 = vmatprep.subr.mxu0 0.0
    %3388 = vmatpush1.msra.mxu0 0.0
    %3389 = vmatprep.subr.mxu0 0.0
    %3390 = vmatpush1.msra.mxu0 0.0
    %3391 = vmatprep.subr.mxu0 0.0
    %3392 = vmatpush1.msra.mxu0 0.0
    %3393 = vmatprep.mubr.f32.mxu0 0.0
    %3394 = vmatmul.mubr.f32.gmra.mrb[0].mxu0 %v3327
    %v3395 = vpop.f32.mrb[0].mxu0
    %v3396 = vadd.f32 0.0, %v3395
    %v3397 = vpop.f32.mrb[0].mxu0
    %3398 = vdwg.mxu0
    %v3399 = vadd.f32 %v3289, %v3396
    %v3400 = vld [vmem:[%s3 + $0x50] sm:$0xff]
    %v3401 = vld [vmem:[%s3 + $0x58] sm:$0xff]
    %v3402 = vld [vmem:[%s3 + $0x60] sm:$0xff]
    %v3403 = vld [vmem:[%s3 + $0x68] sm:$0xff]
    %v3404 = vld [vmem:[%s3 + $0x70] sm:$0xff]
    %v3405 = vld [vmem:[%s3 + $0x78] sm:$0xff]
    %v3406 = vld [vmem:[%s3 + $0x80] sm:$0xff]
    %v3407 = vld [vmem:[%s3 + $0x88] sm:$0xff]
    %v3408 = vld [vmem:[%s3 + $0x90] sm:$0xff]
    %v3409 = vld [vmem:[%s3 + $0x98] sm:$0xff]
    %v3410 = vrot.slane %v3315, 1
    %v3411 = vsel %vm3134, %v3410, 0
    %3413 = vmatprep.subr.mxu0 0.0
    %3414 = vmatpush1.msra.mxu0 %v3400
    %3415 = vmatprep.subr.mxu0 0.0
    %3416 = vmatpush1.msra.mxu0 %v3401
    %3417 = vmatprep.subr.mxu0 0.0
    %3418 = vmatpush1.msra.mxu0 %v3402
    %3419 = vmatprep.subr.mxu0 0.0
    %3420 = vmatpush1.msra.mxu0 %v3403
    %3421 = vmatprep.subr.mxu0 0.0
    %3422 = vmatpush1.msra.mxu0 %v3404
    %3423 = vmatprep.subr.mxu0 0.0
    %3424 = vmatpush1.msra.mxu0 %v3405
    %3425 = vmatprep.subr.mxu0 0.0
    %3426 = vmatpush1.msra.mxu0 %v3406
    %3427 = vmatprep.subr.mxu0 0.0
    %3428 = vmatpush1.msra.mxu0 %v3407
    %3429 = vmatprep.subr.mxu0 0.0
    %3430 = vmatpush1.msra.mxu0 %v3408
    %3431 = vmatprep.subr.mxu0 0.0
    %3432 = vmatpush1.msra.mxu0 %v3409
    %3433 = vmatprep.subr.mxu0 0.0
    %3434 = vmatpush1.msra.mxu0 0.0
    %3435 = vmatprep.subr.mxu0 0.0
    %3436 = vmatpush1.msra.mxu0 0.0
    %3437 = vmatprep.subr.mxu0 0.0
    %3438 = vmatpush1.msra.mxu0 0.0
    %3439 = vmatprep.subr.mxu0 0.0
    %3440 = vmatpush1.msra.mxu0 0.0
    %3441 = vmatprep.subr.mxu0 0.0
    %3442 = vmatpush1.msra.mxu0 0.0
    %3443 = vmatprep.subr.mxu0 0.0
    %3444 = vmatpush1.msra.mxu0 0.0
    %3445 = vmatprep.subr.mxu0 0.0
    %3446 = vmatpush1.msra.mxu0 0.0
    %3447 = vmatprep.subr.mxu0 0.0
    %3448 = vmatpush1.msra.mxu0 0.0
    %3449 = vmatprep.subr.mxu0 0.0
    %3450 = vmatpush1.msra.mxu0 0.0
    %3451 = vmatprep.subr.mxu0 0.0
    %3452 = vmatpush1.msra.mxu0 0.0
    %3453 = vmatprep.subr.mxu0 0.0
    %3454 = vmatpush1.msra.mxu0 0.0
    %3455 = vmatprep.subr.mxu0 0.0
    %3456 = vmatpush1.msra.mxu0 0.0
    %3457 = vmatprep.subr.mxu0 0.0
    %3458 = vmatpush1.msra.mxu0 0.0
    %3459 = vmatprep.subr.mxu0 0.0
    %3460 = vmatpush1.msra.mxu0 0.0
    %3461 = vmatprep.subr.mxu0 0.0
    %3462 = vmatpush1.msra.mxu0 0.0
    %3463 = vmatprep.subr.mxu0 0.0
    %3464 = vmatpush1.msra.mxu0 0.0
    %3465 = vmatprep.subr.mxu0 0.0
    %3466 = vmatpush1.msra.mxu0 0.0
    %3467 = vmatprep.subr.mxu0 0.0
    %3468 = vmatpush1.msra.mxu0 0.0
    %3469 = vmatprep.subr.mxu0 0.0
    %3470 = vmatpush1.msra.mxu0 0.0
    %3471 = vmatprep.subr.mxu0 0.0
    %3472 = vmatpush1.msra.mxu0 0.0
    %3473 = vmatprep.subr.mxu0 0.0
    %3474 = vmatpush1.msra.mxu0 0.0
    %3475 = vmatprep.subr.mxu0 0.0
    %3476 = vmatpush1.msra.mxu0 0.0
    %3477 = vmatprep.mubr.f32.mxu0 0.0
    %3478 = vmatmul.mubr.f32.gmra.mrb[0].mxu0 %v3411
    %v3479 = vpop.f32.mrb[0].mxu0
    %v3480 = vadd.f32 0.0, %v3479
    %v3481 = vpop.f32.mrb[0].mxu0
    %3482 = vdwg.mxu0
    %v3483 = vadd.f32 %v3399, %v3480
    %v3484 = vld [vmem:[%s3 + $0xa0] sm:$0xff]
    %v3485 = vld [vmem:[%s3 + $0xa8] sm:$0xff]
    %v3486 = vld [vmem:[%s3 + $0xb0] sm:$0xff]
    %v3487 = vld [vmem:[%s3 + $0xb8] sm:$0xff]
    %v3488 = vld [vmem:[%s3 + $0xc0] sm:$0xff]
    %v3489 = vld [vmem:[%s3 + $0xc8] sm:$0xff]
    %v3490 = vld [vmem:[%s3 + $0xd0] sm:$0xff]
    %v3491 = vld [vmem:[%s3 + $0xd8] sm:$0xff]
    %v3492 = vld [vmem:[%s3 + $0xe0] sm:$0xff]
    %v3493 = vld [vmem:[%s3 + $0xe8] sm:$0xff]
    %v3494 = vrot.slane %v3315, 2
    %v3495 = vsel %vm3134, %v3494, 0
    %3497 = vmatprep.subr.mxu0 0.0
    %3498 = vmatpush1.msra.mxu0 %v3484
    %3499 = vmatprep.subr.mxu0 0.0
    %3500 = vmatpush1.msra.mxu0 %v3485
    %3501 = vmatprep.subr.mxu0 0.0
    %3502 = vmatpush1.msra.mxu0 %v3486
    %3503 = vmatprep.subr.mxu0 0.0
    %3504 = vmatpush1.msra.mxu0 %v3487
    %3505 = vmatprep.subr.mxu0 0.0
    %3506 = vmatpush1.msra.mxu0 %v3488
    %3507 = vmatprep.subr.mxu0 0.0
    %3508 = vmatpush1.msra.mxu0 %v3489
    %3509 = vmatprep.subr.mxu0 0.0
    %3510 = vmatpush1.msra.mxu0 %v3490
    %3511 = vmatprep.subr.mxu0 0.0
    %3512 = vmatpush1.msra.mxu0 %v3491
    %3513 = vmatprep.subr.mxu0 0.0
    %3514 = vmatpush1.msra.mxu0 %v3492
    %3515 = vmatprep.subr.mxu0 0.0
    %3516 = vmatpush1.msra.mxu0 %v3493
    %3517 = vmatprep.subr.mxu0 0.0
    %3518 = vmatpush1.msra.mxu0 0.0
    %3519 = vmatprep.subr.mxu0 0.0
    %3520 = vmatpush1.msra.mxu0 0.0
    %3521 = vmatprep.subr.mxu0 0.0
    %3522 = vmatpush1.msra.mxu0 0.0
    %3523 = vmatprep.subr.mxu0 0.0
    %3524 = vmatpush1.msra.mxu0 0.0
    %3525 = vmatprep.subr.mxu0 0.0
    %3526 = vmatpush1.msra.mxu0 0.0
    %3527 = vmatprep.subr.mxu0 0.0
    %3528 = vmatpush1.msra.mxu0 0.0
    %3529 = vmatprep.subr.mxu0 0.0
    %3530 = vmatpush1.msra.mxu0 0.0
    %3531 = vmatprep.subr.mxu0 0.0
    %3532 = vmatpush1.msra.mxu0 0.0
    %3533 = vmatprep.subr.mxu0 0.0
    %3534 = vmatpush1.msra.mxu0 0.0
    %3535 = vmatprep.subr.mxu0 0.0
    %3536 = vmatpush1.msra.mxu0 0.0
    %3537 = vmatprep.subr.mxu0 0.0
    %3538 = vmatpush1.msra.mxu0 0.0
    %3539 = vmatprep.subr.mxu0 0.0
    %3540 = vmatpush1.msra.mxu0 0.0
    %3541 = vmatprep.subr.mxu0 0.0
    %3542 = vmatpush1.msra.mxu0 0.0
    %3543 = vmatprep.subr.mxu0 0.0
    %3544 = vmatpush1.msra.mxu0 0.0
    %3545 = vmatprep.subr.mxu0 0.0
    %3546 = vmatpush1.msra.mxu0 0.0
    %3547 = vmatprep.subr.mxu0 0.0
    %3548 = vmatpush1.msra.mxu0 0.0
    %3549 = vmatprep.subr.mxu0 0.0
    %3550 = vmatpush1.msra.mxu0 0.0
    %3551 = vmatprep.subr.mxu0 0.0
    %3552 = vmatpush1.msra.mxu0 0.0
    %3553 = vmatprep.subr.mxu0 0.0
    %3554 = vmatpush1.msra.mxu0 0.0
    %3555 = vmatprep.subr.mxu0 0.0
    %3556 = vmatpush1.msra.mxu0 0.0
    %3557 = vmatprep.subr.mxu0 0.0
    %3558 = vmatpush1.msra.mxu0 0.0
    %3559 = vmatprep.subr.mxu0 0.0
    %3560 = vmatpush1.msra.mxu0 0.0
    %3561 = vmatprep.mubr.f32.mxu0 0.0
    %3562 = vmatmul.mubr.f32.gmra.mrb[0].mxu0 %v3495
    %v3563 = vpop.f32.mrb[0].mxu0
    %v3564 = vadd.f32 0.0, %v3563
    %v3565 = vpop.f32.mrb[0].mxu0
    %3566 = vdwg.mxu0
    %v3567 = vadd.f32 %v3483, %v3564
    %v3568 = vld [vmem:[%s3 + $0xf0] sm:$0xff]
    %v3569 = vld [vmem:[%s3 + $0xf8] sm:$0xff]
    %v3570 = vld [vmem:[%s3 + $0x100] sm:$0xff]
    %v3571 = vld [vmem:[%s3 + $0x108] sm:$0xff]
    %v3572 = vld [vmem:[%s3 + $0x110] sm:$0xff]
    %v3573 = vld [vmem:[%s3 + $0x118] sm:$0xff]
    %v3574 = vld [vmem:[%s3 + $0x120] sm:$0xff]
    %v3575 = vld [vmem:[%s3 + $0x128] sm:$0xff]
    %v3576 = vld [vmem:[%s3 + $0x130] sm:$0xff]
    %v3577 = vld [vmem:[%s3 + $0x138] sm:$0xff]
    %v3578 = vrot.slane %v3315, 3
    %v3579 = vsel %vm3134, %v3578, 0
    %3581 = vmatprep.subr.mxu0 0.0
    %3582 = vmatpush1.msra.mxu0 %v3568
    %3583 = vmatprep.subr.mxu0 0.0
    %3584 = vmatpush1.msra.mxu0 %v3569
    %3585 = vmatprep.subr.mxu0 0.0
    %3586 = vmatpush1.msra.mxu0 %v3570
    %3587 = vmatprep.subr.mxu0 0.0
    %3588 = vmatpush1.msra.mxu0 %v3571
    %3589 = vmatprep.subr.mxu0 0.0
    %3590 = vmatpush1.msra.mxu0 %v3572
    %3591 = vmatprep.subr.mxu0 0.0
    %3592 = vmatpush1.msra.mxu0 %v3573
    %3593 = vmatprep.subr.mxu0 0.0
    %3594 = vmatpush1.msra.mxu0 %v3574
    %3595 = vmatprep.subr.mxu0 0.0
    %3596 = vmatpush1.msra.mxu0 %v3575
    %3597 = vmatprep.subr.mxu0 0.0
    %3598 = vmatpush1.msra.mxu0 %v3576
    %3599 = vmatprep.subr.mxu0 0.0
    %3600 = vmatpush1.msra.mxu0 %v3577
    %3601 = vmatprep.subr.mxu0 0.0
    %3602 = vmatpush1.msra.mxu0 0.0
    %3603 = vmatprep.subr.mxu0 0.0
    %3604 = vmatpush1.msra.mxu0 0.0
    %3605 = vmatprep.subr.mxu0 0.0
    %3606 = vmatpush1.msra.mxu0 0.0
    %3607 = vmatprep.subr.mxu0 0.0
    %3608 = vmatpush1.msra.mxu0 0.0
    %3609 = vmatprep.subr.mxu0 0.0
    %3610 = vmatpush1.msra.mxu0 0.0
    %3611 = vmatprep.subr.mxu0 0.0
    %3612 = vmatpush1.msra.mxu0 0.0
    %3613 = vmatprep.subr.mxu0 0.0
    %3614 = vmatpush1.msra.mxu0 0.0
    %3615 = vmatprep.subr.mxu0 0.0
    %3616 = vmatpush1.msra.mxu0 0.0
    %3617 = vmatprep.subr.mxu0 0.0
    %3618 = vmatpush1.msra.mxu0 0.0
    %3619 = vmatprep.subr.mxu0 0.0
    %3620 = vmatpush1.msra.mxu0 0.0
    %3621 = vmatprep.subr.mxu0 0.0
    %3622 = vmatpush1.msra.mxu0 0.0
    %3623 = vmatprep.subr.mxu0 0.0
    %3624 = vmatpush1.msra.mxu0 0.0
    %3625 = vmatprep.subr.mxu0 0.0
    %3626 = vmatpush1.msra.mxu0 0.0
    %3627 = vmatprep.subr.mxu0 0.0
    %3628 = vmatpush1.msra.mxu0 0.0
    %3629 = vmatprep.subr.mxu0 0.0
    %3630 = vmatpush1.msra.mxu0 0.0
    %3631 = vmatprep.subr.mxu0 0.0
    %3632 = vmatpush1.msra.mxu0 0.0
    %3633 = vmatprep.subr.mxu0 0.0
    %3634 = vmatpush1.msra.mxu0 0.0
    %3635 = vmatprep.subr.mxu0 0.0
    %3636 = vmatpush1.msra.mxu0 0.0
    %3637 = vmatprep.subr.mxu0 0.0
    %3638 = vmatpush1.msra.mxu0 0.0
    %3639 = vmatprep.subr.mxu0 0.0
    %3640 = vmatpush1.msra.mxu0 0.0
    %3641 = vmatprep.subr.mxu0 0.0
    %3642 = vmatpush1.msra.mxu0 0.0
    %3643 = vmatprep.subr.mxu0 0.0
    %3644 = vmatpush1.msra.mxu0 0.0
    %3645 = vmatprep.mubr.f32.mxu0 0.0
    %3646 = vmatmul.mubr.f32.gmra.mrb[0].mxu0 %v3579
    %v3647 = vpop.f32.mrb[0].mxu0
    %v3648 = vadd.f32 0.0, %v3647
    %v3649 = vpop.f32.mrb[0].mxu0
    %3650 = vdwg.mxu0
    %v3651 = vadd.f32 %v3567, %v3648
    %v3652 = vld [vmem:[%s3 + $0x140] sm:$0xff]
    %v3653 = vld [vmem:[%s3 + $0x148] sm:$0xff]
    %v3654 = vld [vmem:[%s3 + $0x150] sm:$0xff]
    %v3655 = vld [vmem:[%s3 + $0x158] sm:$0xff]
    %v3656 = vld [vmem:[%s3 + $0x160] sm:$0xff]
    %v3657 = vld [vmem:[%s3 + $0x168] sm:$0xff]
    %v3658 = vld [vmem:[%s3 + $0x170] sm:$0xff]
    %v3659 = vld [vmem:[%s3 + $0x178] sm:$0xff]
    %v3660 = vld [vmem:[%s3 + $0x180] sm:$0xff]
    %v3661 = vld [vmem:[%s3 + $0x188] sm:$0xff]
    %v3662 = vrot.slane %v3315, 4
    %v3663 = vsel %vm3134, %v3662, 0
    %3665 = vmatprep.subr.mxu0 0.0
    %3666 = vmatpush1.msra.mxu0 %v3652
    %3667 = vmatprep.subr.mxu0 0.0
    %3668 = vmatpush1.msra.mxu0 %v3653
    %3669 = vmatprep.subr.mxu0 0.0
    %3670 = vmatpush1.msra.mxu0 %v3654
    %3671 = vmatprep.subr.mxu0 0.0
    %3672 = vmatpush1.msra.mxu0 %v3655
    %3673 = vmatprep.subr.mxu0 0.0
    %3674 = vmatpush1.msra.mxu0 %v3656
    %3675 = vmatprep.subr.mxu0 0.0
    %3676 = vmatpush1.msra.mxu0 %v3657
    %3677 = vmatprep.subr.mxu0 0.0
    %3678 = vmatpush1.msra.mxu0 %v3658
    %3679 = vmatprep.subr.mxu0 0.0
    %3680 = vmatpush1.msra.mxu0 %v3659
    %3681 = vmatprep.subr.mxu0 0.0
    %3682 = vmatpush1.msra.mxu0 %v3660
    %3683 = vmatprep.subr.mxu0 0.0
    %3684 = vmatpush1.msra.mxu0 %v3661
    %3685 = vmatprep.subr.mxu0 0.0
    %3686 = vmatpush1.msra.mxu0 0.0
    %3687 = vmatprep.subr.mxu0 0.0
    %3688 = vmatpush1.msra.mxu0 0.0
    %3689 = vmatprep.subr.mxu0 0.0
    %3690 = vmatpush1.msra.mxu0 0.0
    %3691 = vmatprep.subr.mxu0 0.0
    %3692 = vmatpush1.msra.mxu0 0.0
    %3693 = vmatprep.subr.mxu0 0.0
    %3694 = vmatpush1.msra.mxu0 0.0
    %3695 = vmatprep.subr.mxu0 0.0
    %3696 = vmatpush1.msra.mxu0 0.0
    %3697 = vmatprep.subr.mxu0 0.0
    %3698 = vmatpush1.msra.mxu0 0.0
    %3699 = vmatprep.subr.mxu0 0.0
    %3700 = vmatpush1.msra.mxu0 0.0
    %3701 = vmatprep.subr.mxu0 0.0
    %3702 = vmatpush1.msra.mxu0 0.0
    %3703 = vmatprep.subr.mxu0 0.0
    %3704 = vmatpush1.msra.mxu0 0.0
    %3705 = vmatprep.subr.mxu0 0.0
    %3706 = vmatpush1.msra.mxu0 0.0
    %3707 = vmatprep.subr.mxu0 0.0
    %3708 = vmatpush1.msra.mxu0 0.0
    %3709 = vmatprep.subr.mxu0 0.0
    %3710 = vmatpush1.msra.mxu0 0.0
    %3711 = vmatprep.subr.mxu0 0.0
    %3712 = vmatpush1.msra.mxu0 0.0
    %3713 = vmatprep.subr.mxu0 0.0
    %3714 = vmatpush1.msra.mxu0 0.0
    %3715 = vmatprep.subr.mxu0 0.0
    %3716 = vmatpush1.msra.mxu0 0.0
    %3717 = vmatprep.subr.mxu0 0.0
    %3718 = vmatpush1.msra.mxu0 0.0
    %3719 = vmatprep.subr.mxu0 0.0
    %3720 = vmatpush1.msra.mxu0 0.0
    %3721 = vmatprep.subr.mxu0 0.0
    %3722 = vmatpush1.msra.mxu0 0.0
    %3723 = vmatprep.subr.mxu0 0.0
    %3724 = vmatpush1.msra.mxu0 0.0
    %3725 = vmatprep.subr.mxu0 0.0
    %3726 = vmatpush1.msra.mxu0 0.0
    %3727 = vmatprep.subr.mxu0 0.0
    %3728 = vmatpush1.msra.mxu0 0.0
    %3729 = vmatprep.mubr.f32.mxu0 0.0
    %3730 = vmatmul.mubr.f32.gmra.mrb[0].mxu0 %v3663
    %v3731 = vpop.f32.mrb[0].mxu0
    %v3732 = vadd.f32 0.0, %v3731
    %v3733 = vpop.f32.mrb[0].mxu0
    %3734 = vdwg.mxu0
    %v3735 = vadd.f32 %v3651, %v3732
    %v3736 = vsub.f32 %v3106, %v3293
    %v3737 = vmul.f32 %v3298, %v3736
    %v3738 = vmul.f32 %v3737, %v3303
    %v3739 = vadd.f32 %v3738, %v3308
    %v3740 = vsub.f32 0.0, %v3739
    %v3741 = vmul.f32 %v3740, 1.442695
    %v3742 = vpow.pop %v3741
    %v3743 = vadd.f32 %v3742, 1.0
    %v3744 = vrcp.pop %v3743
    %v3745 = vmul.f32 1.0, %v3744
    %v3747 = vsel %vm3134, %v3745, 0
    %3749 = vmatprep.subr.mxu0 0.0
    %3750 = vmatpush1.msra.mxu0 %v3316
    %3751 = vmatprep.subr.mxu0 0.0
    %3752 = vmatpush1.msra.mxu0 %v3317
    %3753 = vmatprep.subr.mxu0 0.0
    %3754 = vmatpush1.msra.mxu0 %v3318
    %3755 = vmatprep.subr.mxu0 0.0
    %3756 = vmatpush1.msra.mxu0 %v3319
    %3757 = vmatprep.subr.mxu0 0.0
    %3758 = vmatpush1.msra.mxu0 %v3320
    %3759 = vmatprep.subr.mxu0 0.0
    %3760 = vmatpush1.msra.mxu0 %v3321
    %3761 = vmatprep.subr.mxu0 0.0
    %3762 = vmatpush1.msra.mxu0 %v3322
    %3763 = vmatprep.subr.mxu0 0.0
    %3764 = vmatpush1.msra.mxu0 %v3323
    %3765 = vmatprep.subr.mxu0 0.0
    %3766 = vmatpush1.msra.mxu0 %v3324
    %3767 = vmatprep.subr.mxu0 0.0
    %3768 = vmatpush1.msra.mxu0 %v3325
    %3769 = vmatprep.subr.mxu0 0.0
    %3770 = vmatpush1.msra.mxu0 0.0
    %3771 = vmatprep.subr.mxu0 0.0
    %3772 = vmatpush1.msra.mxu0 0.0
    %3773 = vmatprep.subr.mxu0 0.0
    %3774 = vmatpush1.msra.mxu0 0.0
    %3775 = vmatprep.subr.mxu0 0.0
    %3776 = vmatpush1.msra.mxu0 0.0
    %3777 = vmatprep.subr.mxu0 0.0
    %3778 = vmatpush1.msra.mxu0 0.0
    %3779 = vmatprep.subr.mxu0 0.0
    %3780 = vmatpush1.msra.mxu0 0.0
    %3781 = vmatprep.subr.mxu0 0.0
    %3782 = vmatpush1.msra.mxu0 0.0
    %3783 = vmatprep.subr.mxu0 0.0
    %3784 = vmatpush1.msra.mxu0 0.0
    %3785 = vmatprep.subr.mxu0 0.0
    %3786 = vmatpush1.msra.mxu0 0.0
    %3787 = vmatprep.subr.mxu0 0.0
    %3788 = vmatpush1.msra.mxu0 0.0
    %3789 = vmatprep.subr.mxu0 0.0
    %3790 = vmatpush1.msra.mxu0 0.0
    %3791 = vmatprep.subr.mxu0 0.0
    %3792 = vmatpush1.msra.mxu0 0.0
    %3793 = vmatprep.subr.mxu0 0.0
    %3794 = vmatpush1.msra.mxu0 0.0
    %3795 = vmatprep.subr.mxu0 0.0
    %3796 = vmatpush1.msra.mxu0 0.0
    %3797 = vmatprep.subr.mxu0 0.0
    %3798 = vmatpush1.msra.mxu0 0.0
    %3799 = vmatprep.subr.mxu0 0.0
    %3800 = vmatpush1.msra.mxu0 0.0
    %3801 = vmatprep.subr.mxu0 0.0
    %3802 = vmatpush1.msra.mxu0 0.0
    %3803 = vmatprep.subr.mxu0 0.0
    %3804 = vmatpush1.msra.mxu0 0.0
    %3805 = vmatprep.subr.mxu0 0.0
    %3806 = vmatpush1.msra.mxu0 0.0
    %3807 = vmatprep.subr.mxu0 0.0
    %3808 = vmatpush1.msra.mxu0 0.0
    %3809 = vmatprep.subr.mxu0 0.0
    %3810 = vmatpush1.msra.mxu0 0.0
    %3811 = vmatprep.subr.mxu0 0.0
    %3812 = vmatpush1.msra.mxu0 0.0
    %3813 = vmatprep.mubr.f32.mxu0 0.0
    %3814 = vmatmul.mubr.f32.gmra.mrb[0].mxu0 %v3747
    %v3815 = vpop.f32.mrb[0].mxu0
    %v3816 = vadd.f32 0.0, %v3815
    %v3817 = vpop.f32.mrb[0].mxu0
    %3818 = vdwg.mxu0
    %v3819 = vadd.f32 %v3289, %v3816
    %v3820 = vrot.slane %v3745, 1
    %v3821 = vsel %vm3134, %v3820, 0
    %3823 = vmatprep.subr.mxu0 0.0
    %3824 = vmatpush1.msra.mxu0 %v3400
    %3825 = vmatprep.subr.mxu0 0.0
    %3826 = vmatpush1.msra.mxu0 %v3401
    %3827 = vmatprep.subr.mxu0 0.0
    %3828 = vmatpush1.msra.mxu0 %v3402
    %3829 = vmatprep.subr.mxu0 0.0
    %3830 = vmatpush1.msra.mxu0 %v3403
    %3831 = vmatprep.subr.mxu0 0.0
    %3832 = vmatpush1.msra.mxu0 %v3404
    %3833 = vmatprep.subr.mxu0 0.0
    %3834 = vmatpush1.msra.mxu0 %v3405
    %3835 = vmatprep.subr.mxu0 0.0
    %3836 = vmatpush1.msra.mxu0 %v3406
    %3837 = vmatprep.subr.mxu0 0.0
    %3838 = vmatpush1.msra.mxu0 %v3407
    %3839 = vmatprep.subr.mxu0 0.0
    %3840 = vmatpush1.msra.mxu0 %v3408
    %3841 = vmatprep.subr.mxu0 0.0
    %3842 = vmatpush1.msra.mxu0 %v3409
    %3843 = vmatprep.subr.mxu0 0.0
    %3844 = vmatpush1.msra.mxu0 0.0
    %3845 = vmatprep.subr.mxu0 0.0
    %3846 = vmatpush1.msra.mxu0 0.0
    %3847 = vmatprep.subr.mxu0 0.0
    %3848 = vmatpush1.msra.mxu0 0.0
    %3849 = vmatprep.subr.mxu0 0.0
    %3850 = vmatpush1.msra.mxu0 0.0
    %3851 = vmatprep.subr.mxu0 0.0
    %3852 = vmatpush1.msra.mxu0 0.0
    %3853 = vmatprep.subr.mxu0 0.0
    %3854 = vmatpush1.msra.mxu0 0.0
    %3855 = vmatprep.subr.mxu0 0.0
    %3856 = vmatpush1.msra.mxu0 0.0
    %3857 = vmatprep.subr.mxu0 0.0
    %3858 = vmatpush1.msra.mxu0 0.0
    %3859 = vmatprep.subr.mxu0 0.0
    %3860 = vmatpush1.msra.mxu0 0.0
    %3861 = vmatprep.subr.mxu0 0.0
    %3862 = vmatpush1.msra.mxu0 0.0
    %3863 = vmatprep.subr.mxu0 0.0
    %3864 = vmatpush1.msra.mxu0 0.0
    %3865 = vmatprep.subr.mxu0 0.0
    %3866 = vmatpush1.msra.mxu0 0.0
    %3867 = vmatprep.subr.mxu0 0.0
    %3868 = vmatpush1.msra.mxu0 0.0
    %3869 = vmatprep.subr.mxu0 0.0
    %3870 = vmatpush1.msra.mxu0 0.0
    %3871 = vmatprep.subr.mxu0 0.0
    %3872 = vmatpush1.msra.mxu0 0.0
    %3873 = vmatprep.subr.mxu0 0.0
    %3874 = vmatpush1.msra.mxu0 0.0
    %3875 = vmatprep.subr.mxu0 0.0
    %3876 = vmatpush1.msra.mxu0 0.0
    %3877 = vmatprep.subr.mxu0 0.0
    %3878 = vmatpush1.msra.mxu0 0.0
    %3879 = vmatprep.subr.mxu0 0.0
    %3880 = vmatpush1.msra.mxu0 0.0
    %3881 = vmatprep.subr.mxu0 0.0
    %3882 = vmatpush1.msra.mxu0 0.0
    %3883 = vmatprep.subr.mxu0 0.0
    %3884 = vmatpush1.msra.mxu0 0.0
    %3885 = vmatprep.subr.mxu0 0.0
    %3886 = vmatpush1.msra.mxu0 0.0
    %3887 = vmatprep.mubr.f32.mxu0 0.0
    %3888 = vmatmul.mubr.f32.gmra.mrb[0].mxu0 %v3821
    %v3889 = vpop.f32.mrb[0].mxu0
    %v3890 = vadd.f32 0.0, %v3889
    %v3891 = vpop.f32.mrb[0].mxu0
    %3892 = vdwg.mxu0
    %v3893 = vadd.f32 %v3819, %v3890
    %v3894 = vrot.slane %v3745, 2
    %v3895 = vsel %vm3134, %v3894, 0
    %3897 = vmatprep.subr.mxu0 0.0
    %3898 = vmatpush1.msra.mxu0 %v3484
    %3899 = vmatprep.subr.mxu0 0.0
    %3900 = vmatpush1.msra.mxu0 %v3485
    %3901 = vmatprep.subr.mxu0 0.0
    %3902 = vmatpush1.msra.mxu0 %v3486
    %3903 = vmatprep.subr.mxu0 0.0
    %3904 = vmatpush1.msra.mxu0 %v3487
    %3905 = vmatprep.subr.mxu0 0.0
    %3906 = vmatpush1.msra.mxu0 %v3488
    %3907 = vmatprep.subr.mxu0 0.0
    %3908 = vmatpush1.msra.mxu0 %v3489
    %3909 = vmatprep.subr.mxu0 0.0
    %3910 = vmatpush1.msra.mxu0 %v3490
    %3911 = vmatprep.subr.mxu0 0.0
    %3912 = vmatpush1.msra.mxu0 %v3491
    %3913 = vmatprep.subr.mxu0 0.0
    %3914 = vmatpush1.msra.mxu0 %v3492
    %3915 = vmatprep.subr.mxu0 0.0
    %3916 = vmatpush1.msra.mxu0 %v3493
    %3917 = vmatprep.subr.mxu0 0.0
    %3918 = vmatpush1.msra.mxu0 0.0
    %3919 = vmatprep.subr.mxu0 0.0
    %3920 = vmatpush1.msra.mxu0 0.0
    %3921 = vmatprep.subr.mxu0 0.0
    %3922 = vmatpush1.msra.mxu0 0.0
    %3923 = vmatprep.subr.mxu0 0.0
    %3924 = vmatpush1.msra.mxu0 0.0
    %3925 = vmatprep.subr.mxu0 0.0
    %3926 = vmatpush1.msra.mxu0 0.0
    %3927 = vmatprep.subr.mxu0 0.0
    %3928 = vmatpush1.msra.mxu0 0.0
    %3929 = vmatprep.subr.mxu0 0.0
    %3930 = vmatpush1.msra.mxu0 0.0
    %3931 = vmatprep.subr.mxu0 0.0
    %3932 = vmatpush1.msra.mxu0 0.0
    %3933 = vmatprep.subr.mxu0 0.0
    %3934 = vmatpush1.msra.mxu0 0.0
    %3935 = vmatprep.subr.mxu0 0.0
    %3936 = vmatpush1.msra.mxu0 0.0
    %3937 = vmatprep.subr.mxu0 0.0
    %3938 = vmatpush1.msra.mxu0 0.0
    %3939 = vmatprep.subr.mxu0 0.0
    %3940 = vmatpush1.msra.mxu0 0.0
    %3941 = vmatprep.subr.mxu0 0.0
    %3942 = vmatpush1.msra.mxu0 0.0
    %3943 = vmatprep.subr.mxu0 0.0
    %3944 = vmatpush1.msra.mxu0 0.0
    %3945 = vmatprep.subr.mxu0 0.0
    %3946 = vmatpush1.msra.mxu0 0.0
    %3947 = vmatprep.subr.mxu0 0.0
    %3948 = vmatpush1.msra.mxu0 0.0
    %3949 = vmatprep.subr.mxu0 0.0
    %3950 = vmatpush1.msra.mxu0 0.0
    %3951 = vmatprep.subr.mxu0 0.0
    %3952 = vmatpush1.msra.mxu0 0.0
    %3953 = vmatprep.subr.mxu0 0.0
    %3954 = vmatpush1.msra.mxu0 0.0
    %3955 = vmatprep.subr.mxu0 0.0
    %3956 = vmatpush1.msra.mxu0 0.0
    %3957 = vmatprep.subr.mxu0 0.0
    %3958 = vmatpush1.msra.mxu0 0.0
    %3959 = vmatprep.subr.mxu0 0.0
    %3960 = vmatpush1.msra.mxu0 0.0
    %3961 = vmatprep.mubr.f32.mxu0 0.0
    %3962 = vmatmul.mubr.f32.gmra.mrb[0].mxu0 %v3895
    %v3963 = vpop.f32.mrb[0].mxu0
    %v3964 = vadd.f32 0.0, %v3963
    %v3965 = vpop.f32.mrb[0].mxu0
    %3966 = vdwg.mxu0
    %v3967 = vadd.f32 %v3893, %v3964
    %v3968 = vrot.slane %v3745, 3
    %v3969 = vsel %vm3134, %v3968, 0
    %3971 = vmatprep.subr.mxu0 0.0
    %3972 = vmatpush1.msra.mxu0 %v3568
    %3973 = vmatprep.subr.mxu0 0.0
    %3974 = vmatpush1.msra.mxu0 %v3569
    %3975 = vmatprep.subr.mxu0 0.0
    %3976 = vmatpush1.msra.mxu0 %v3570
    %3977 = vmatprep.subr.mxu0 0.0
    %3978 = vmatpush1.msra.mxu0 %v3571
    %3979 = vmatprep.subr.mxu0 0.0
    %3980 = vmatpush1.msra.mxu0 %v3572
    %3981 = vmatprep.subr.mxu0 0.0
    %3982 = vmatpush1.msra.mxu0 %v3573
    %3983 = vmatprep.subr.mxu0 0.0
    %3984 = vmatpush1.msra.mxu0 %v3574
    %3985 = vmatprep.subr.mxu0 0.0
    %3986 = vmatpush1.msra.mxu0 %v3575
    %3987 = vmatprep.subr.mxu0 0.0
    %3988 = vmatpush1.msra.mxu0 %v3576
    %3989 = vmatprep.subr.mxu0 0.0
    %3990 = vmatpush1.msra.mxu0 %v3577
    %3991 = vmatprep.subr.mxu0 0.0
    %3992 = vmatpush1.msra.mxu0 0.0
    %3993 = vmatprep.subr.mxu0 0.0
    %3994 = vmatpush1.msra.mxu0 0.0
    %3995 = vmatprep.subr.mxu0 0.0
    %3996 = vmatpush1.msra.mxu0 0.0
    %3997 = vmatprep.subr.mxu0 0.0
    %3998 = vmatpush1.msra.mxu0 0.0
    %3999 = vmatprep.subr.mxu0 0.0
    %4000 = vmatpush1.msra.mxu0 0.0
    %4001 = vmatprep.subr.mxu0 0.0
    %4002 = vmatpush1.msra.mxu0 0.0
    %4003 = vmatprep.subr.mxu0 0.0
    %4004 = vmatpush1.msra.mxu0 0.0
    %4005 = vmatprep.subr.mxu0 0.0
    %4006 = vmatpush1.msra.mxu0 0.0
    %4007 = vmatprep.subr.mxu0 0.0
    %4008 = vmatpush1.msra.mxu0 0.0
    %4009 = vmatprep.subr.mxu0 0.0
    %4010 = vmatpush1.msra.mxu0 0.0
    %4011 = vmatprep.subr.mxu0 0.0
    %4012 = vmatpush1.msra.mxu0 0.0
    %4013 = vmatprep.subr.mxu0 0.0
    %4014 = vmatpush1.msra.mxu0 0.0
    %4015 = vmatprep.subr.mxu0 0.0
    %4016 = vmatpush1.msra.mxu0 0.0
    %4017 = vmatprep.subr.mxu0 0.0
    %4018 = vmatpush1.msra.mxu0 0.0
    %4019 = vmatprep.subr.mxu0 0.0
    %4020 = vmatpush1.msra.mxu0 0.0
    %4021 = vmatprep.subr.mxu0 0.0
    %4022 = vmatpush1.msra.mxu0 0.0
    %4023 = vmatprep.subr.mxu0 0.0
    %4024 = vmatpush1.msra.mxu0 0.0
    %4025 = vmatprep.subr.mxu0 0.0
    %4026 = vmatpush1.msra.mxu0 0.0
    %4027 = vmatprep.subr.mxu0 0.0
    %4028 = vmatpush1.msra.mxu0 0.0
    %4029 = vmatprep.subr.mxu0 0.0
    %4030 = vmatpush1.msra.mxu0 0.0
    %4031 = vmatprep.subr.mxu0 0.0
    %4032 = vmatpush1.msra.mxu0 0.0
    %4033 = vmatprep.subr.mxu0 0.0
    %4034 = vmatpush1.msra.mxu0 0.0
    %4035 = vmatprep.mubr.f32.mxu0 0.0
    %4036 = vmatmul.mubr.f32.gmra.mrb[0].mxu0 %v3969
    %v4037 = vpop.f32.mrb[0].mxu0
    %v4038 = vadd.f32 0.0, %v4037
    %v4039 = vpop.f32.mrb[0].mxu0
    %4040 = vdwg.mxu0
    %v4041 = vadd.f32 %v3967, %v4038
    %v4042 = vrot.slane %v3745, 4
    %v4043 = vsel %vm3134, %v4042, 0
    %4045 = vmatprep.subr.mxu0 0.0
    %4046 = vmatpush1.msra.mxu0 %v3652
    %4047 = vmatprep.subr.mxu0 0.0
    %4048 = vmatpush1.msra.mxu0 %v3653
    %4049 = vmatprep.subr.mxu0 0.0
    %4050 = vmatpush1.msra.mxu0 %v3654
    %4051 = vmatprep.subr.mxu0 0.0
    %4052 = vmatpush1.msra.mxu0 %v3655
    %4053 = vmatprep.subr.mxu0 0.0
    %4054 = vmatpush1.msra.mxu0 %v3656
    %4055 = vmatprep.subr.mxu0 0.0
    %4056 = vmatpush1.msra.mxu0 %v3657
    %4057 = vmatprep.subr.mxu0 0.0
    %4058 = vmatpush1.msra.mxu0 %v3658
    %4059 = vmatprep.subr.mxu0 0.0
    %4060 = vmatpush1.msra.mxu0 %v3659
    %4061 = vmatprep.subr.mxu0 0.0
    %4062 = vmatpush1.msra.mxu0 %v3660
    %4063 = vmatprep.subr.mxu0 0.0
    %4064 = vmatpush1.msra.mxu0 %v3661
    %4065 = vmatprep.subr.mxu0 0.0
    %4066 = vmatpush1.msra.mxu0 0.0
    %4067 = vmatprep.subr.mxu0 0.0
    %4068 = vmatpush1.msra.mxu0 0.0
    %4069 = vmatprep.subr.mxu0 0.0
    %4070 = vmatpush1.msra.mxu0 0.0
    %4071 = vmatprep.subr.mxu0 0.0
    %4072 = vmatpush1.msra.mxu0 0.0
    %4073 = vmatprep.subr.mxu0 0.0
    %4074 = vmatpush1.msra.mxu0 0.0
    %4075 = vmatprep.subr.mxu0 0.0
    %4076 = vmatpush1.msra.mxu0 0.0
    %4077 = vmatprep.subr.mxu0 0.0
    %4078 = vmatpush1.msra.mxu0 0.0
    %4079 = vmatprep.subr.mxu0 0.0
    %4080 = vmatpush1.msra.mxu0 0.0
    %4081 = vmatprep.subr.mxu0 0.0
    %4082 = vmatpush1.msra.mxu0 0.0
    %4083 = vmatprep.subr.mxu0 0.0
    %4084 = vmatpush1.msra.mxu0 0.0
    %4085 = vmatprep.subr.mxu0 0.0
    %4086 = vmatpush1.msra.mxu0 0.0
    %4087 = vmatprep.subr.mxu0 0.0
    %4088 = vmatpush1.msra.mxu0 0.0
    %4089 = vmatprep.subr.mxu0 0.0
    %4090 = vmatpush1.msra.mxu0 0.0
    %4091 = vmatprep.subr.mxu0 0.0
    %4092 = vmatpush1.msra.mxu0 0.0
    %4093 = vmatprep.subr.mxu0 0.0
    %4094 = vmatpush1.msra.mxu0 0.0
    %4095 = vmatprep.subr.mxu0 0.0
    %4096 = vmatpush1.msra.mxu0 0.0
    %4097 = vmatprep.subr.mxu0 0.0
    %4098 = vmatpush1.msra.mxu0 0.0
    %4099 = vmatprep.subr.mxu0 0.0
    %4100 = vmatpush1.msra.mxu0 0.0
    %4101 = vmatprep.subr.mxu0 0.0
    %4102 = vmatpush1.msra.mxu0 0.0
    %4103 = vmatprep.subr.mxu0 0.0
    %4104 = vmatpush1.msra.mxu0 0.0
    %4105 = vmatprep.subr.mxu0 0.0
    %4106 = vmatpush1.msra.mxu0 0.0
    %4107 = vmatprep.subr.mxu0 0.0
    %4108 = vmatpush1.msra.mxu0 0.0
    %4109 = vmatprep.mubr.f32.mxu0 0.0
    %4110 = vmatmul.mubr.f32.gmra.mrb[0].mxu0 %v4043
    %v4111 = vpop.f32.mrb[0].mxu0
    %v4112 = vadd.f32 0.0, %v4111
    %v4113 = vpop.f32.mrb[0].mxu0
    %4114 = vdwg.mxu0
    %v4115 = vadd.f32 %v4041, %v4112
    %v4117 = vrot.slane %v4115, 7
    %vm4119 = vcmask 1040384
    %v4120 = vsel %vm4119, %v3735, %v4117
    %v4121 = vld [vmem:[%s3 + $0x291] sm:$0x1]
    %v4122 = vld [vmem:[%s3 + $0x292] sm:$0x1]
    %vm4123 = vcmask 1041408
    %v4124 = vsel %vm4123, %v4120, 0.0
    %v4125 = vrot.slane %v4124, 4
    %v4126 = vadd.f32 %v4124, %v4125
    %v4127 = vrot.slane %v4126, 2
    %v4128 = vadd.f32 %v4126, %v4127
    %v4129 = vrot.slane %v4128, 1
    %v4130 = vadd.f32 %v4128, %v4129
    %v4131 = vrcp.pop 2.0
    %v4132 = vmul.f32 %v4130, %v4131
    %v4133 = vsub.f32 %v4120, %v4132
    %v4134 = vmul.f32 %v4133, %v4133
    %v4135 = vsel %vm4123, %v4134, 0.0
    %v4136 = vrot.slane %v4135, 4
    %v4137 = vadd.f32 %v4135, %v4136
    %v4138 = vrot.slane %v4137, 2
    %v4139 = vadd.f32 %v4137, %v4138
    %v4140 = vrot.slane %v4139, 1
    %v4141 = vadd.f32 %v4139, %v4140
    %v4142 = vmul.f32 %v4141, %v4131
    %v4143 = vlaneseq
    %v4144 = vshrl.u32 %v4143, 7
    %v4145 = vsub.s32 0, %v4144
    %v4146 = vrot.slane %v4121, %v4145
    %v4147 = vmul.f32 %v4146, %v4133
    %v4148 = vadd.f32 %v4142, 1e-05
    %v4149 = vrsqrt.pop %v4148
    %v4150 = vmul.f32 %v4147, %v4149
    %v4151 = vlaneseq
    %v4152 = vshrl.u32 %v4151, 7
    %v4153 = vsub.s32 0, %v4152
    %v4154 = vrot.slane %v4122, %v4153
    %v4155 = vadd.f32 %v4150, %v4154
    %v4156 = vsub.f32 0.0, %v4155
    %v4157 = vmul.f32 %v4156, 1.442695
    %v4158 = vpow.pop %v4157
    %v4159 = vadd.f32 %v4158, 1.0
    %v4160 = vrcp.pop %v4159
    %v4161 = vmul.f32 1.0, %v4160
    %v4162 = vld [vmem:[%s3 + $0x190] sm:$0xff]
    %v4163 = vld [vmem:[%s3 + $0x198] sm:$0xff]
    %v4164 = vld [vmem:[%s3 + $0x1a0] sm:$0xff]
    %v4165 = vld [vmem:[%s3 + $0x1a8] sm:$0xff]
    %v4166 = vld [vmem:[%s3 + $0x1b0] sm:$0xff]
    %v4167 = vld [vmem:[%s3 + $0x1b8] sm:$0xff]
    %v4168 = vld [vmem:[%s3 + $0x1c0] sm:$0xff]
    %v4169 = vld [vmem:[%s3 + $0x1c8] sm:$0xff]
    %v4170 = vld [vmem:[%s3 + $0x1d0] sm:$0xff]
    %v4171 = vld [vmem:[%s3 + $0x1d8] sm:$0xff]
    %v4172 = vld [vmem:[%s3 + $0x1e0] sm:$0xff]
    %v4173 = vld [vmem:[%s3 + $0x1e8] sm:$0xff]
    %v4174 = vld [vmem:[%s3 + $0x1f0] sm:$0xff]
    %v4175 = vld [vmem:[%s3 + $0x1f8] sm:$0xff]
    %v4176 = vld [vmem:[%s3 + $0x200] sm:$0xff]
    %v4177 = vld [vmem:[%s3 + $0x208] sm:$0xff]
    %v4178 = vld [vmem:[%s3 + $0x293] sm:$0x1]
    %v4179 = vlaneseq
    %v4180 = vshrl.u32 %v4179, 7
    %v4181 = vsub.s32 0, %v4180
    %v4182 = vrot.slane %v4178, %v4181
    %4183 = vmatprep.subr.mxu0 0.0
    %4184 = vmatpush1.msra.mxu0 %v4162
    %4185 = vmatprep.subr.mxu0 0.0
    %4186 = vmatpush1.msra.mxu0 %v4163
    %4187 = vmatprep.subr.mxu0 0.0
    %4188 = vmatpush1.msra.mxu0 %v4164
    %4189 = vmatprep.subr.mxu0 0.0
    %4190 = vmatpush1.msra.mxu0 %v4165
    %4191 = vmatprep.subr.mxu0 0.0
    %4192 = vmatpush1.msra.mxu0 %v4166
    %4193 = vmatprep.subr.mxu0 0.0
    %4194 = vmatpush1.msra.mxu0 %v4167
    %4195 = vmatprep.subr.mxu0 0.0
    %4196 = vmatpush1.msra.mxu0 %v4168
    %4197 = vmatprep.subr.mxu0 0.0
    %4198 = vmatpush1.msra.mxu0 %v4169
    %4199 = vmatprep.subr.mxu0 0.0
    %4200 = vmatpush1.msra.mxu0 %v4170
    %4201 = vmatprep.subr.mxu0 0.0
    %4202 = vmatpush1.msra.mxu0 %v4171
    %4203 = vmatprep.subr.mxu0 0.0
    %4204 = vmatpush1.msra.mxu0 %v4172
    %4205 = vmatprep.subr.mxu0 0.0
    %4206 = vmatpush1.msra.mxu0 %v4173
    %4207 = vmatprep.subr.mxu0 0.0
    %4208 = vmatpush1.msra.mxu0 %v4174
    %4209 = vmatprep.subr.mxu0 0.0
    %4210 = vmatpush1.msra.mxu0 %v4175
    %4211 = vmatprep.subr.mxu0 0.0
    %4212 = vmatpush1.msra.mxu0 %v4176
    %4213 = vmatprep.subr.mxu0 0.0
    %4214 = vmatpush1.msra.mxu0 %v4177
    %4215 = vmatprep.subr.mxu0 0.0
    %4216 = vmatpush1.msra.mxu0 0.0
    %4217 = vmatprep.subr.mxu0 0.0
    %4218 = vmatpush1.msra.mxu0 0.0
    %4219 = vmatprep.subr.mxu0 0.0
    %4220 = vmatpush1.msra.mxu0 0.0
    %4221 = vmatprep.subr.mxu0 0.0
    %4222 = vmatpush1.msra.mxu0 0.0
    %4223 = vmatprep.subr.mxu0 0.0
    %4224 = vmatpush1.msra.mxu0 0.0
    %4225 = vmatprep.subr.mxu0 0.0
    %4226 = vmatpush1.msra.mxu0 0.0
    %4227 = vmatprep.subr.mxu0 0.0
    %4228 = vmatpush1.msra.mxu0 0.0
    %4229 = vmatprep.subr.mxu0 0.0
    %4230 = vmatpush1.msra.mxu0 0.0
    %4231 = vmatprep.subr.mxu0 0.0
    %4232 = vmatpush1.msra.mxu0 0.0
    %4233 = vmatprep.subr.mxu0 0.0
    %4234 = vmatpush1.msra.mxu0 0.0
    %4235 = vmatprep.subr.mxu0 0.0
    %4236 = vmatpush1.msra.mxu0 0.0
    %4237 = vmatprep.subr.mxu0 0.0
    %4238 = vmatpush1.msra.mxu0 0.0
    %4239 = vmatprep.subr.mxu0 0.0
    %4240 = vmatpush1.msra.mxu0 0.0
    %4241 = vmatprep.subr.mxu0 0.0
    %4242 = vmatpush1.msra.mxu0 0.0
    %4243 = vmatprep.subr.mxu0 0.0
    %4244 = vmatpush1.msra.mxu0 0.0
    %4245 = vmatprep.subr.mxu0 0.0
    %4246 = vmatpush1.msra.mxu0 0.0
    %4247 = vmatprep.mubr.f32.mxu0 0.0
    %4248 = vmatmul.mubr.f32.gmra.mrb[0].mxu0 %v4161
    %v4249 = vpop.f32.mrb[0].mxu0
    %v4250 = vadd.f32 %v4182, %v4249
    %v4251 = vpop.f32.mrb[0].mxu0
    %4252 = vdwg.mxu0
    %v4253 = vld [vmem:[%s3 + $0x294] sm:$0x1]
    %v4254 = vld [vmem:[%s3 + $0x295] sm:$0x1]
    %v4255 = vsel %vm4123, %v4250, 0.0
    %v4256 = vrot.slane %v4255, 4
    %v4257 = vadd.f32 %v4255, %v4256
    %v4258 = vrot.slane %v4257, 2
    %v4259 = vadd.f32 %v4257, %v4258
    %v4260 = vrot.slane %v4259, 1
    %v4261 = vadd.f32 %v4259, %v4260
    %v4262 = vmul.f32 %v4261, %v4131
    %v4263 = vsub.f32 %v4250, %v4262
    %v4264 = vmul.f32 %v4263, %v4263
    %v4265 = vsel %vm4123, %v4264, 0.0
    %v4266 = vrot.slane %v4265, 4
    %v4267 = vadd.f32 %v4265, %v4266
    %v4268 = vrot.slane %v4267, 2
    %v4269 = vadd.f32 %v4267, %v4268
    %v4270 = vrot.slane %v4269, 1
    %v4271 = vadd.f32 %v4269, %v4270
    %v4272 = vmul.f32 %v4271, %v4131
    %v4273 = vlaneseq
    %v4274 = vshrl.u32 %v4273, 7
    %v4275 = vsub.s32 0, %v4274
    %v4276 = vrot.slane %v4253, %v4275
    %v4277 = vmul.f32 %v4276, %v4263
    %v4278 = vadd.f32 %v4272, 1e-05
    %v4279 = vrsqrt.pop %v4278
    %v4280 = vmul.f32 %v4277, %v4279
    %v4281 = vlaneseq
    %v4282 = vshrl.u32 %v4281, 7
    %v4283 = vsub.s32 0, %v4282
    %v4284 = vrot.slane %v4254, %v4283
    %v4285 = vadd.f32 %v4280, %v4284
    %v4286 = vsub.f32 0.0, %v4285
    %v4287 = vmul.f32 %v4286, 1.442695
    %v4288 = vpow.pop %v4287
    %v4289 = vadd.f32 %v4288, 1.0
    %v4290 = vrcp.pop %v4289
    %v4291 = vmul.f32 1.0, %v4290
    %v4292 = vld [vmem:[%s3 + $0x210] sm:$0xff]
    %v4293 = vld [vmem:[%s3 + $0x218] sm:$0xff]
    %v4294 = vld [vmem:[%s3 + $0x220] sm:$0xff]
    %v4295 = vld [vmem:[%s3 + $0x228] sm:$0xff]
    %v4296 = vld [vmem:[%s3 + $0x230] sm:$0xff]
    %v4297 = vld [vmem:[%s3 + $0x238] sm:$0xff]
    %v4298 = vld [vmem:[%s3 + $0x240] sm:$0xff]
    %v4299 = vld [vmem:[%s3 + $0x248] sm:$0xff]
    %v4300 = vld [vmem:[%s3 + $0x250] sm:$0xff]
    %v4301 = vld [vmem:[%s3 + $0x258] sm:$0xff]
    %v4302 = vld [vmem:[%s3 + $0x260] sm:$0xff]
    %v4303 = vld [vmem:[%s3 + $0x268] sm:$0xff]
    %v4304 = vld [vmem:[%s3 + $0x270] sm:$0xff]
    %v4305 = vld [vmem:[%s3 + $0x278] sm:$0xff]
    %v4306 = vld [vmem:[%s3 + $0x280] sm:$0xff]
    %v4307 = vld [vmem:[%s3 + $0x288] sm:$0xff]
    %v4308 = vld [vmem:[%s3 + $0x296] sm:$0x1]
    %v4309 = vlaneseq
    %v4310 = vshrl.u32 %v4309, 7
    %v4311 = vsub.s32 0, %v4310
    %v4312 = vrot.slane %v4308, %v4311
    %4313 = vmatprep.subr.mxu0 0.0
    %4314 = vmatpush1.msra.mxu0 %v4292
    %4315 = vmatprep.subr.mxu0 0.0
    %4316 = vmatpush1.msra.mxu0 %v4293
    %4317 = vmatprep.subr.mxu0 0.0
    %4318 = vmatpush1.msra.mxu0 %v4294
    %4319 = vmatprep.subr.mxu0 0.0
    %4320 = vmatpush1.msra.mxu0 %v4295
    %4321 = vmatprep.subr.mxu0 0.0
    %4322 = vmatpush1.msra.mxu0 %v4296
    %4323 = vmatprep.subr.mxu0 0.0
    %4324 = vmatpush1.msra.mxu0 %v4297
    %4325 = vmatprep.subr.mxu0 0.0
    %4326 = vmatpush1.msra.mxu0 %v4298
    %4327 = vmatprep.subr.mxu0 0.0
    %4328 = vmatpush1.msra.mxu0 %v4299
    %4329 = vmatprep.subr.mxu0 0.0
    %4330 = vmatpush1.msra.mxu0 %v4300
    %4331 = vmatprep.subr.mxu0 0.0
    %4332 = vmatpush1.msra.mxu0 %v4301
    %4333 = vmatprep.subr.mxu0 0.0
    %4334 = vmatpush1.msra.mxu0 %v4302
    %4335 = vmatprep.subr.mxu0 0.0
    %4336 = vmatpush1.msra.mxu0 %v4303
    %4337 = vmatprep.subr.mxu0 0.0
    %4338 = vmatpush1.msra.mxu0 %v4304
    %4339 = vmatprep.subr.mxu0 0.0
    %4340 = vmatpush1.msra.mxu0 %v4305
    %4341 = vmatprep.subr.mxu0 0.0
    %4342 = vmatpush1.msra.mxu0 %v4306
    %4343 = vmatprep.subr.mxu0 0.0
    %4344 = vmatpush1.msra.mxu0 %v4307
    %4345 = vmatprep.subr.mxu0 0.0
    %4346 = vmatpush1.msra.mxu0 0.0
    %4347 = vmatprep.subr.mxu0 0.0
    %4348 = vmatpush1.msra.mxu0 0.0
    %4349 = vmatprep.subr.mxu0 0.0
    %4350 = vmatpush1.msra.mxu0 0.0
    %4351 = vmatprep.subr.mxu0 0.0
    %4352 = vmatpush1.msra.mxu0 0.0
    %4353 = vmatprep.subr.mxu0 0.0
    %4354 = vmatpush1.msra.mxu0 0.0
    %4355 = vmatprep.subr.mxu0 0.0
    %4356 = vmatpush1.msra.mxu0 0.0
    %4357 = vmatprep.subr.mxu0 0.0
    %4358 = vmatpush1.msra.mxu0 0.0
    %4359 = vmatprep.subr.mxu0 0.0
    %4360 = vmatpush1.msra.mxu0 0.0
    %4361 = vmatprep.subr.mxu0 0.0
    %4362 = vmatpush1.msra.mxu0 0.0
    %4363 = vmatprep.subr.mxu0 0.0
    %4364 = vmatpush1.msra.mxu0 0.0
    %4365 = vmatprep.subr.mxu0 0.0
    %4366 = vmatpush1.msra.mxu0 0.0
    %4367 = vmatprep.subr.mxu0 0.0
    %4368 = vmatpush1.msra.mxu0 0.0
    %4369 = vmatprep.subr.mxu0 0.0
    %4370 = vmatpush1.msra.mxu0 0.0
    %4371 = vmatprep.subr.mxu0 0.0
    %4372 = vmatpush1.msra.mxu0 0.0
    %4373 = vmatprep.subr.mxu0 0.0
    %4374 = vmatpush1.msra.mxu0 0.0
    %4375 = vmatprep.subr.mxu0 0.0
    %4376 = vmatpush1.msra.mxu0 0.0
    %4377 = vmatprep.mubr.f32.mxu0 0.0
    %4378 = vmatmul.mubr.f32.gmra.mrb[0].mxu0 %v4291
    %v4379 = vpop.f32.mrb[0].mxu0
    %v4380 = vadd.f32 %v4312, %v4379
    %v4381 = vpop.f32.mrb[0].mxu0
    %4382 = vdwg.mxu0
    %vm4383 = vcmask 74752
    %v4384 = vsel %vm4383, %v4380, -inf
    %4385 = vmax.xlane.f32.xlu0 %v4384
    %v4386 = vpop.xlane.xlu0 %4385
    %v4387 = vsub.f32 %v4380, %v4386
    %v4388 = vmul.f32 %v4387, 1.442695
    %v4389 = vpow.pop %v4388
    %v4390 = vsel %vm4383, %v4389, 0.0
    %4391 = vadd.xlane.f32.xlu0 %v4390
    %v4392 = vpop.xlane.xlu0 %4391
    %v4393 = vrcp.pop %v4392
    %v4394 = vmul.f32 %v4389, %v4393
    %4395 = vst.msk [vmem:[#allocation2] sm:$0x3] %vm4383, %v4394
    // Predicated region
    $region18: #{lenet_bn_forward.1} parent=1 // pred_check
      _
    $region19: #{lenet_bn_forward.1} parent=1 // pred_check_branch
      %4397 = sbr.rel (0) target = $region21
    $region20: #{lenet_bn_forward.1} parent=1 // pred_region
      %s4399 = ssub.s32 32, 32
      %4400 = vsyncadd [#allocation3], %s4399
      %s4402 = sshll.u32 [#allocation2], 4
      %s4403 = int_to_ptr.vmem [resolvable:$true] %s4402
      %4405 = dma.vmem_to_hbm [thread:$0]  %s4403, 32, %s4, [#allocation3]
    $region21: #{lenet_bn_forward.1} parent=1 // pred_fallthru
      _
    // Predicated region
    $region22: #{lenet_bn_forward.1} parent=1 // pred_check
      _
    $region23: #{lenet_bn_forward.1} parent=1 // pred_check_branch
      %4407 = sbr.rel (0) target = $region25
    $region24: #{lenet_bn_forward.1} parent=1 // pred_region
      %4408 = dma.done [#allocation3], 32
    $region25: #{lenet_bn_forward.1} parent=1 // pred_fallthru
      _
    %4409 = vsyncpa [#allocation3], 1

</llo_original>
